<compile_context>
chip_gen: v6e
topology: v6e:2x2x1
jax: 0.10.0
libtpu: 0.0.40
codegen_flags: <defaults>
</compile_context>

<pallas_src>
import numpy as np
import jax
import jax.numpy as jnp
from jax.experimental import pallas as pl
from jax.experimental.pallas import tpu as pltpu

# ---- ZLmConfig (small, synthetic) -------------------------------------------
HIDDEN = 32                      # hidden_size
MLP = 64                         # mlp_size
HEAD = 16                        # attention_head_size
N_HEADS = 4                      # num_attention_heads
QKV = HEAD * N_HEADS             # 64
UP = 3 * QKV + 2 * MLP           # 320
N_REG = 2                        # num_registers
N_LAYERS = 2                     # num_layers
Z_SIZE = 16                      # z_size
LAYER_Z = Z_SIZE // N_LAYERS     # 8
ROPE_FRACTION = 2
ROPE_DIM = HEAD // ROPE_FRACTION # 8
ROPE_BASE = 10000.0
Z_SCALE = float(np.sqrt(1.0 / Z_SIZE))
SOFTPLUS_SHIFT = float(np.log(np.e - 1.0))
ATTN_SCALE = float(1.0 / np.sqrt(HEAD))

BATCH = 2
SEQ = 8

# fused up-projection output column layout (built host-side):
#   [ q*s | qrot*s | k | krot | v | gate | val | zp ]   (s = ATTN_SCALE folded)
COL_Q = 0
COL_QROT = QKV
COL_K = 2 * QKV
COL_KROT = 3 * QKV
COL_V = 4 * QKV
COL_GATE = 5 * QKV
COL_VAL = 5 * QKV + MLP
COL_ZP = 5 * QKV + 2 * MLP
UPF = COL_ZP + 2 * LAYER_Z       # 464


# ---- shared math helpers ------------------------------------------------------
def _softplus(x):
    # matches F.softplus(x, beta=1, threshold=20)
    return jnp.where(x > 20.0, x, jnp.log(1.0 + jnp.exp(jnp.minimum(x, 20.0))))


def _silu(x):
    return x * (1.0 / (1.0 + jnp.exp(-x)))


# ---- host-side constant builders ---------------------------------------------
def _rope_emb(S):
    half = ROPE_DIM // 2
    inv_freq = 1.0 / (ROPE_BASE ** (np.arange(half, dtype=np.float64) / half))
    freqs = np.outer(np.arange(S, dtype=np.float64), inv_freq)       # (S, half)
    return np.concatenate([freqs, freqs], axis=-1)                   # (S, ROPE_DIM)


def _rope_full_tables(S, B):
    """Full-width (B*S, QKV) cos/sin tables: cos tiled per head with 1.0 in
    pass-through lanes, sin with 0.0. (ATTN_SCALE lives in the weights now.)"""
    emb = _rope_emb(S)
    cos_h = np.concatenate([np.cos(emb), np.ones((S, HEAD - ROPE_DIM))], -1)   # (S, HEAD)
    sin_h = np.concatenate([np.sin(emb), np.zeros((S, HEAD - ROPE_DIM))], -1)
    cos_full = np.tile(np.tile(cos_h, (1, N_HEADS)), (B, 1))                    # (B*S, QKV)
    sin_full = np.tile(np.tile(sin_h, (1, N_HEADS)), (B, 1))
    return cos_full.astype(np.float32), sin_full.astype(np.float32)


def _rot_half_matrix():
    """Signed per-head rotate-half permutation R so that (t @ R) equals
    concat([-t[half:ROPE_DIM], t[:half], 0...]) within every head block."""
    half = ROPE_DIM // 2
    R = np.zeros((QKV, QKV), np.float32)
    for h in range(N_HEADS):
        o = h * HEAD
        for j in range(half):
            R[o + j + half, o + j] = -1.0       # out[j] = -t[j + half]
        for j in range(half, ROPE_DIM):
            R[o + j - half, o + j] = 1.0        # out[j] =  t[j - half]
    return R


def _causal_mask(S):
    return np.triu(np.full((S, S), -1e9, np.float32), k=1)


def _pack_up_weights(wz, wup):
    """Build the fused x-side / z-side up-projection weights.

    Folds: rotate-half permutation (extra qrot/krot columns), ATTN_SCALE (into
    q / qrot columns), Z_SCALE and wz (into the x-side zp columns)."""
    R = _rot_half_matrix()
    wup_np = np.asarray(wup, np.float32)
    wz_np = np.asarray(wz, np.float32)

    def build(w_in, zp_cols):
        q = w_in[:, 0:QKV]
        k = w_in[:, QKV:2 * QKV]
        v = w_in[:, 2 * QKV:3 * QKV]
        gate = w_in[:, 3 * QKV:3 * QKV + MLP]
        val = w_in[:, 3 * QKV + MLP:]
        return np.concatenate(
            [ATTN_SCALE * q, ATTN_SCALE * (q @ R), k, k @ R, v, gate, val, zp_cols],
            axis=1).astype(np.float32)

    w_x_all = build(wup_np[:HIDDEN], Z_SCALE * wz_np)                    # (HIDDEN, UPF)
    w_z_all = build(wup_np[HIDDEN:],
                    np.zeros((LAYER_Z, 2 * LAYER_Z), np.float32))        # (LAYER_Z, UPF)
    assert w_x_all.shape[1] == UPF and w_z_all.shape[1] == UPF
    return jnp.asarray(w_x_all), jnp.asarray(w_z_all)


# ---- Pallas kernel ------------------------------------------------------------
def make_zlm_kernel(nb, S):
    """Kernel processing all nb*S rows in a single grid step."""

    def kernel(x_ref, noise_ref, cos_ref, sin_ref,
               wxall_ref, wzall_ref, wdz_ref, wda_ref, wdm_ref,
               kregT_ref, vreg_ref, mask_ref, out_ref):
        x = x_ref[...]            # (rows, HIDDEN)
        noise = noise_ref[...]    # (rows, LAYER_Z)
        cos = cos_ref[...]        # (rows, QKV)
        sin = sin_ref[...]

        # --- fused x-side matmul: up(x) + rot columns + z_proj ----------------
        ux = jnp.dot(x, wxall_ref[...], preferred_element_type=jnp.float32)

        # z_proj + reparameterization (Z_SCALE already folded into the weight)
        zp = ux[:, COL_ZP:COL_ZP + 2 * LAYER_Z]
        mu = zp[:, :LAYER_Z]
        log_sigma = zp[:, LAYER_Z:]
        sigma = _softplus(log_sigma + SOFTPLUS_SHIFT)
        z = mu + sigma * noise

        # --- z-side matmul (zp columns are zero there) and fused `up` ---------
        full = ux + jnp.dot(z, wzall_ref[...], preferred_element_type=jnp.float32)

        # --- RoPE: rotation columns came out of the matmul, ATTN_SCALE folded --
        q_r = full[:, COL_Q:COL_Q + QKV] * cos + full[:, COL_QROT:COL_QROT + QKV] * sin
        k_r = full[:, COL_K:COL_K + QKV] * cos + full[:, COL_KROT:COL_KROT + QKV] * sin
        v = full[:, COL_V:COL_V + QKV]

        # --- GLU ---------------------------------------------------------------
        mlp_out = _silu(full[:, COL_GATE:COL_GATE + MLP]) * full[:, COL_VAL:COL_VAL + MLP]

        # --- attention: one K transpose total, per-batch/per-head static loops --
        kT = k_r.T                 # (QKV, rows): single XLU transpose
        kregT = kregT_ref[...]     # (N_HEADS, HEAD, N_REG)  (pre-transposed host-side)
        vreg = vreg_ref[...]       # (N_HEADS, N_REG, HEAD)
        mask = mask_ref[...]       # (S, S) causal

        o_parts = []
        for b in range(nb):
            r0 = b * S
            q_b = q_r[r0:r0 + S]
            v_b = v[r0:r0 + S]
            o_heads = []
            for h in range(N_HEADS):
                lo = h * HEAD
                q_h = q_b[:, lo:lo + HEAD]            # (S, HEAD)
                kT_h = kT[lo:lo + HEAD, r0:r0 + S]    # (HEAD, S)
                v_h = v_b[:, lo:lo + HEAD]
                # registers: never RoPE'd, never masked; two-part softmax.
                s_seq = jnp.dot(q_h, kT_h, preferred_element_type=jnp.float32) + mask
                s_reg = jnp.dot(q_h, kregT[h], preferred_element_type=jnp.float32)
                m = jnp.maximum(jnp.max(s_seq, axis=-1, keepdims=True),
                                jnp.max(s_reg, axis=-1, keepdims=True))
                p_seq = jnp.exp(s_seq - m)
                p_reg = jnp.exp(s_reg - m)
                denom = (jnp.sum(p_seq, axis=-1, keepdims=True)
                         + jnp.sum(p_reg, axis=-1, keepdims=True))
                inv = pl.reciprocal(denom, approx=True)
                o_h = (jnp.dot(p_seq, v_h, preferred_element_type=jnp.float32)
                       + jnp.dot(p_reg, vreg[h],
                                 preferred_element_type=jnp.float32)) * inv
                o_heads.append(o_h)
            o_parts.append(jnp.concatenate(o_heads, axis=-1))       # (S, QKV)
        attn = o_parts[0] if nb == 1 else jnp.concatenate(o_parts, axis=0)

        # --- FusedLinear down: three split matmuls, attn part done ONCE ---------
        y = (jnp.dot(z, wdz_ref[...], preferred_element_type=jnp.float32)
             + jnp.dot(attn, wda_ref[...], preferred_element_type=jnp.float32)
             + jnp.dot(mlp_out, wdm_ref[...], preferred_element_type=jnp.float32))

        # --- single packed lane-contiguous store: [y | z | mu | sigma] ----------
        out_ref[...] = jnp.concatenate([y, z, mu, sigma], axis=-1).astype(out_ref.dtype)

    return kernel


# ---- wrapper ------------------------------------------------------------------
def zlm_layer_forward(x, noise, wz, wup, wdown, kreg, vreg):
    B, S, H = x.shape
    rows = B * S

    # host-side constants / fused weights (numpy -> device once)
    cos_full, sin_full = _rope_full_tables(S, B)
    cos = jnp.asarray(cos_full)
    sin = jnp.asarray(sin_full)
    mask = jnp.asarray(_causal_mask(S))
    w_x_all, w_z_all = _pack_up_weights(wz, wup)

    # pre-split `down` weight (kills the unaligned 136-wide concat)
    wd_z = wdown[:LAYER_Z]
    wd_a = wdown[LAYER_Z:LAYER_Z + QKV]
    wd_m = wdown[LAYER_Z + QKV:]

    # pre-transpose registers so the reg-score matmul has a plain RHS
    kregT = jnp.transpose(kreg, (0, 2, 1))          # (N_HEADS, HEAD, N_REG)

    x2 = x.reshape(rows, H)
    noise2 = noise.reshape(rows, LAYER_Z)

    def full_spec(a):
        nd = a.ndim
        return pl.BlockSpec(a.shape, lambda i, _nd=nd: (0,) * _nd)

    inputs = (x2, noise2, cos, sin, w_x_all, w_z_all,
              wd_z, wd_a, wd_m, kregT, vreg, mask)

    out_width = HIDDEN + 3 * LAYER_Z
    out_shape = jax.ShapeDtypeStruct((rows, out_width), jnp.float32)

    packed = pl.pallas_call(
        make_zlm_kernel(B, S),
        out_shape=out_shape,
        grid=(1,),
        in_specs=[full_spec(a) for a in inputs],
        out_specs=pl.BlockSpec((rows, out_width), lambda i: (0, 0)),
        compiler_params=pltpu.CompilerParams(
            dimension_semantics=("arbitrary",)),
    )(*inputs)

    y = packed[:, :HIDDEN].reshape(B, S, HIDDEN)
    z = packed[:, HIDDEN:HIDDEN + LAYER_Z].reshape(B, S, LAYER_Z)
    mu = packed[:, HIDDEN + LAYER_Z:HIDDEN + 2 * LAYER_Z].reshape(B, S, LAYER_Z)
    sigma = packed[:, HIDDEN + 2 * LAYER_Z:].reshape(B, S, LAYER_Z)
    return y, z, mu, sigma


# ---- pure-JAX reference (same math, for correctness check) --------------------
def ref_forward(x, noise, wz, wup, wdown, kreg, vreg, cos, sin, mask):
    B, S, _ = x.shape
    zp = Z_SCALE * jnp.einsum('bsh,hz->bsz', x, wz)
    mu, log_sigma = zp[..., :LAYER_Z], zp[..., LAYER_Z:]
    sigma = _softplus(log_sigma + SOFTPLUS_SHIFT)
    z = mu + sigma * noise
    up = jnp.einsum('bsi,io->bso', jnp.concatenate([x, z], -1), wup)
    q, k, v = up[..., :QKV], up[..., QKV:2 * QKV], up[..., 2 * QKV:3 * QKV]
    gate, val = up[..., 3 * QKV:3 * QKV + MLP], up[..., 3 * QKV + MLP:]

    def rope4(t):  # (B, S, nh, hd)
        tr, tp = t[..., :ROPE_DIM], t[..., ROPE_DIM:]
        half = ROPE_DIM // 2
        rot = jnp.concatenate([-tr[..., half:], tr[..., :half]], -1)
        c, s = cos[None, :, None, :], sin[None, :, None, :]
        return jnp.concatenate([tr * c + rot * s, tp], -1)

    qh = rope4(q.reshape(B, S, N_HEADS, HEAD))
    kh = rope4(k.reshape(B, S, N_HEADS, HEAD))
    vh = v.reshape(B, S, N_HEADS, HEAD)
    kr = jnp.broadcast_to(jnp.transpose(kreg, (1, 0, 2))[None],
                          (B, N_REG, N_HEADS, HEAD))
    vr = jnp.broadcast_to(jnp.transpose(vreg, (1, 0, 2))[None],
                          (B, N_REG, N_HEADS, HEAD))
    k_all = jnp.concatenate([kr, kh], axis=1)
    v_all = jnp.concatenate([vr, vh], axis=1)
    scores = jnp.einsum('bsnd,bmnd->bnsm', qh, k_all) * ATTN_SCALE
    scores = scores + mask[None, None]
    p = jax.nn.softmax(scores, axis=-1)
    attn = jnp.einsum('bnsm,bmnd->bsnd', p, v_all).reshape(B, S, QKV)
    mlp_out = _silu(gate) * val
    y = jnp.einsum('bsi,ih->bsh',
                   jnp.concatenate([z, attn, mlp_out], -1), wdown)
    return y, z, mu, sigma


def rope_tables(S):
    emb = _rope_emb(S)
    return (jnp.asarray(np.cos(emb), jnp.float32),
            jnp.asarray(np.sin(emb), jnp.float32))


def build_mask(S, R):
    causal = np.triu(np.full((S, S), -1e9, np.float32), k=1)
    reg = np.zeros((S, R), np.float32)          # registers always visible
    return jnp.asarray(np.concatenate([reg, causal], axis=-1))


if __name__ == "__main__":
    key = jax.random.PRNGKey(0)
    ks = jax.random.split(key, 7)
    wz = jax.random.normal(ks[0], (HIDDEN, 2 * LAYER_Z), jnp.float32) / np.sqrt(HIDDEN)
    wup = jax.random.normal(ks[1], (HIDDEN + LAYER_Z, UP),
                            jnp.float32) / np.sqrt(HIDDEN + LAYER_Z)
    wdown = jax.random.normal(ks[2], (LAYER_Z + QKV + MLP, HIDDEN),
                              jnp.float32) / np.sqrt(LAYER_Z + QKV + MLP)
    kreg = 0.02 * jax.random.normal(ks[3], (N_HEADS, N_REG, HEAD), jnp.float32)
    vreg = 0.02 * jax.random.normal(ks[4], (N_HEADS, N_REG, HEAD), jnp.float32)
    x = jax.random.normal(ks[5], (BATCH, SEQ, HIDDEN), jnp.float32)
    noise = jax.random.normal(ks[6], (BATCH, SEQ, LAYER_Z), jnp.float32)

    outs = zlm_layer_forward(x, noise, wz, wup, wdown, kreg, vreg)
    outs = jax.block_until_ready(outs)

    cos, sin = rope_tables(SEQ)
    mask_ref = build_mask(SEQ, N_REG)
    refs = ref_forward(x, noise, wz, wup, wdown, kreg, vreg, cos, sin, mask_ref)
    # y uses the approximate EUP reciprocal in the softmax -> slightly looser tol.
    tols = [(5e-3, 5e-3), (1e-3, 1e-3), (1e-3, 1e-3), (1e-3, 1e-3)]
    for got, want, (rt, at) in zip(outs, refs, tols):
        np.testing.assert_allclose(np.asarray(got), np.asarray(want),
                                   rtol=rt, atol=at)
    print("KERNEL_OK")
</pallas_src>

<mosaic_0001>
module attributes {stable_mosaic.version = 11 : i64} {
  func.func @kernel(%arg0: i32, %arg1: memref<16x32xf32, #tpu.memory_space<vmem>>, %arg2: memref<16x8xf32, #tpu.memory_space<vmem>>, %arg3: memref<16x64xf32, #tpu.memory_space<vmem>>, %arg4: memref<16x64xf32, #tpu.memory_space<vmem>>, %arg5: memref<32x464xf32, #tpu.memory_space<vmem>>, %arg6: memref<8x464xf32, #tpu.memory_space<vmem>>, %arg7: memref<8x32xf32, #tpu.memory_space<vmem>>, %arg8: memref<64x32xf32, #tpu.memory_space<vmem>>, %arg9: memref<64x32xf32, #tpu.memory_space<vmem>>, %arg10: memref<4x16x2xf32, #tpu.memory_space<vmem>>, %arg11: memref<4x2x16xf32, #tpu.memory_space<vmem>>, %arg12: memref<8x8xf32, #tpu.memory_space<vmem>>, %arg13: memref<16x56xf32, #tpu.memory_space<vmem>>) attributes {dimension_semantics = [#tpu.dimension_semantics<arbitrary>], iteration_bounds = array<i64: 1>, scalar_prefetch = 0 : i64, scratch_operands = 0 : i64, tpu.core_type = #tpu.core_type<tc>, window_params = [{pipeline_mode = #tpu.pipeline_mode<synchronous>, transform_indices = @transform_0, window_bounds = array<i64: 16, 32>}, {pipeline_mode = #tpu.pipeline_mode<synchronous>, transform_indices = @transform_1, window_bounds = array<i64: 16, 8>}, {pipeline_mode = #tpu.pipeline_mode<synchronous>, transform_indices = @transform_2, window_bounds = array<i64: 16, 64>}, {pipeline_mode = #tpu.pipeline_mode<synchronous>, transform_indices = @transform_3, window_bounds = array<i64: 16, 64>}, {pipeline_mode = #tpu.pipeline_mode<synchronous>, transform_indices = @transform_4, window_bounds = array<i64: 32, 464>}, {pipeline_mode = #tpu.pipeline_mode<synchronous>, transform_indices = @transform_5, window_bounds = array<i64: 8, 464>}, {pipeline_mode = #tpu.pipeline_mode<synchronous>, transform_indices = @transform_6, window_bounds = array<i64: 8, 32>}, {pipeline_mode = #tpu.pipeline_mode<synchronous>, transform_indices = @transform_7, window_bounds = array<i64: 64, 32>}, {pipeline_mode = #tpu.pipeline_mode<synchronous>, transform_indices = @transform_8, window_bounds = array<i64: 64, 32>}, {pipeline_mode = #tpu.pipeline_mode<synchronous>, transform_indices = @transform_9, window_bounds = array<i64: 4, 16, 2>}, {pipeline_mode = #tpu.pipeline_mode<synchronous>, transform_indices = @transform_10, window_bounds = array<i64: 4, 2, 16>}, {pipeline_mode = #tpu.pipeline_mode<synchronous>, transform_indices = @transform_11, window_bounds = array<i64: 8, 8>}, {pipeline_mode = #tpu.pipeline_mode<synchronous>, transform_indices = @transform_12, window_bounds = array<i64: 16, 56>}]} {
    %c0 = arith.constant 0 : index
    %c0_0 = arith.constant 0 : index
    %0 = vector.load %arg1[%c0, %c0_0] : memref<16x32xf32, #tpu.memory_space<vmem>>, vector<16x32xf32>
    %c0_1 = arith.constant 0 : index
    %c0_2 = arith.constant 0 : index
    %1 = vector.load %arg2[%c0_1, %c0_2] : memref<16x8xf32, #tpu.memory_space<vmem>>, vector<16x8xf32>
    %c0_3 = arith.constant 0 : index
    %c0_4 = arith.constant 0 : index
    %2 = vector.load %arg3[%c0_3, %c0_4] : memref<16x64xf32, #tpu.memory_space<vmem>>, vector<16x64xf32>
    %c0_5 = arith.constant 0 : index
    %c0_6 = arith.constant 0 : index
    %3 = vector.load %arg4[%c0_5, %c0_6] : memref<16x64xf32, #tpu.memory_space<vmem>>, vector<16x64xf32>
    %c0_7 = arith.constant 0 : index
    %c0_8 = arith.constant 0 : index
    %4 = vector.load %arg5[%c0_7, %c0_8] : memref<32x464xf32, #tpu.memory_space<vmem>>, vector<32x464xf32>
    %cst = arith.constant dense<0.000000e+00> : vector<16x464xf32>
    %5 = tpu.matmul %0, %4, %cst {dimension_numbers = #tpu.dot_dimension_numbers<[1], [0], [0], [1], [0, 0, 1, 1], [], []>} : vector<16x32xf32>, vector<32x464xf32>, vector<16x464xf32> -> vector<16x464xf32>
    %6 = vector.extract_strided_slice %5 {offsets = [0, 448], sizes = [16, 16], strides = [1, 1]} : vector<16x464xf32> to vector<16x16xf32>
    %7 = vector.extract_strided_slice %6 {offsets = [0, 0], sizes = [16, 8], strides = [1, 1]} : vector<16x16xf32> to vector<16x8xf32>
    %8 = vector.extract_strided_slice %6 {offsets = [0, 8], sizes = [16, 8], strides = [1, 1]} : vector<16x16xf32> to vector<16x8xf32>
    %cst_9 = arith.constant 0.541324854 : f32
    %9 = vector.broadcast %cst_9 : f32 to vector<16x8xf32>
    %10 = arith.addf %8, %9 : vector<16x8xf32>
    %cst_10 = arith.constant 2.000000e+01 : f32
    %11 = vector.broadcast %cst_10 : f32 to vector<16x8xf32>
    %12 = arith.cmpf ogt, %10, %11 : vector<16x8xf32>
    %cst_11 = arith.constant 2.000000e+01 : f32
    %13 = vector.broadcast %cst_11 : f32 to vector<16x8xf32>
    %14 = arith.minimumf %10, %13 : vector<16x8xf32>
    %15 = math.exp %14 : vector<16x8xf32>
    %cst_12 = arith.constant 1.000000e+00 : f32
    %16 = vector.broadcast %cst_12 : f32 to vector<16x8xf32>
    %17 = arith.addf %16, %15 : vector<16x8xf32>
    %18 = math.log %17 : vector<16x8xf32>
    %19 = arith.select %12, %10, %18 : vector<16x8xi1>, vector<16x8xf32>
    %20 = arith.mulf %19, %1 : vector<16x8xf32>
    %21 = arith.addf %7, %20 : vector<16x8xf32>
    %c0_13 = arith.constant 0 : index
    %c0_14 = arith.constant 0 : index
    %22 = vector.load %arg6[%c0_13, %c0_14] : memref<8x464xf32, #tpu.memory_space<vmem>>, vector<8x464xf32>
    %cst_15 = arith.constant dense<0.000000e+00> : vector<16x464xf32>
    %23 = tpu.matmul %21, %22, %cst_15 {dimension_numbers = #tpu.dot_dimension_numbers<[1], [0], [0], [1], [0, 0, 1, 1], [], []>} : vector<16x8xf32>, vector<8x464xf32>, vector<16x464xf32> -> vector<16x464xf32>
    %24 = arith.addf %5, %23 : vector<16x464xf32>
    %25 = vector.extract_strided_slice %24 {offsets = [0, 0], sizes = [16, 64], strides = [1, 1]} : vector<16x464xf32> to vector<16x64xf32>
    %26 = arith.mulf %25, %2 : vector<16x64xf32>
    %27 = vector.extract_strided_slice %24 {offsets = [0, 64], sizes = [16, 64], strides = [1, 1]} : vector<16x464xf32> to vector<16x64xf32>
    %28 = arith.mulf %27, %3 : vector<16x64xf32>
    %29 = arith.addf %26, %28 : vector<16x64xf32>
    %30 = vector.extract_strided_slice %24 {offsets = [0, 128], sizes = [16, 64], strides = [1, 1]} : vector<16x464xf32> to vector<16x64xf32>
    %31 = arith.mulf %30, %2 : vector<16x64xf32>
    %32 = vector.extract_strided_slice %24 {offsets = [0, 192], sizes = [16, 64], strides = [1, 1]} : vector<16x464xf32> to vector<16x64xf32>
    %33 = arith.mulf %32, %3 : vector<16x64xf32>
    %34 = arith.addf %31, %33 : vector<16x64xf32>
    %35 = vector.extract_strided_slice %24 {offsets = [0, 256], sizes = [16, 64], strides = [1, 1]} : vector<16x464xf32> to vector<16x64xf32>
    %36 = vector.extract_strided_slice %24 {offsets = [0, 320], sizes = [16, 64], strides = [1, 1]} : vector<16x464xf32> to vector<16x64xf32>
    %cst_16 = arith.constant 0.000000e+00 : f32
    %37 = vector.broadcast %cst_16 : f32 to vector<16x64xf32>
    %38 = arith.subf %37, %36 : vector<16x64xf32>
    %39 = math.exp %38 : vector<16x64xf32>
    %cst_17 = arith.constant 1.000000e+00 : f32
    %40 = vector.broadcast %cst_17 : f32 to vector<16x64xf32>
    %41 = arith.addf %40, %39 : vector<16x64xf32>
    %cst_18 = arith.constant 1.000000e+00 : f32
    %42 = vector.broadcast %cst_18 : f32 to vector<16x64xf32>
    %43 = arith.divf %42, %41 : vector<16x64xf32>
    %44 = arith.mulf %36, %43 : vector<16x64xf32>
    %45 = vector.extract_strided_slice %24 {offsets = [0, 384], sizes = [16, 64], strides = [1, 1]} : vector<16x464xf32> to vector<16x64xf32>
    %46 = arith.mulf %44, %45 : vector<16x64xf32>
    %47 = tpu.transpose %34, [1, 0] : vector<16x64xf32> -> vector<64x16xf32>
    %c0_19 = arith.constant 0 : index
    %c0_20 = arith.constant 0 : index
    %c0_21 = arith.constant 0 : index
    %48 = vector.load %arg10[%c0_19, %c0_20, %c0_21] : memref<4x16x2xf32, #tpu.memory_space<vmem>>, vector<4x16x2xf32>
    %c0_22 = arith.constant 0 : index
    %c0_23 = arith.constant 0 : index
    %c0_24 = arith.constant 0 : index
    %49 = vector.load %arg11[%c0_22, %c0_23, %c0_24] : memref<4x2x16xf32, #tpu.memory_space<vmem>>, vector<4x2x16xf32>
    %c0_25 = arith.constant 0 : index
    %c0_26 = arith.constant 0 : index
    %50 = vector.load %arg12[%c0_25, %c0_26] : memref<8x8xf32, #tpu.memory_space<vmem>>, vector<8x8xf32>
    %51 = vector.extract_strided_slice %29 {offsets = [0, 0], sizes = [8, 64], strides = [1, 1]} : vector<16x64xf32> to vector<8x64xf32>
    %52 = vector.extract_strided_slice %35 {offsets = [0, 0], sizes = [8, 64], strides = [1, 1]} : vector<16x64xf32> to vector<8x64xf32>
    %53 = vector.extract_strided_slice %51 {offsets = [0, 0], sizes = [8, 16], strides = [1, 1]} : vector<8x64xf32> to vector<8x16xf32>
    %54 = vector.extract_strided_slice %47 {offsets = [0, 0], sizes = [16, 8], strides = [1, 1]} : vector<64x16xf32> to vector<16x8xf32>
    %55 = vector.extract_strided_slice %52 {offsets = [0, 0], sizes = [8, 16], strides = [1, 1]} : vector<8x64xf32> to vector<8x16xf32>
    %cst_27 = arith.constant dense<0.000000e+00> : vector<8x8xf32>
    %56 = tpu.matmul %53, %54, %cst_27 {dimension_numbers = #tpu.dot_dimension_numbers<[1], [0], [0], [1], [0, 0, 1, 1], [], []>} : vector<8x16xf32>, vector<16x8xf32>, vector<8x8xf32> -> vector<8x8xf32>
    %57 = arith.addf %56, %50 : vector<8x8xf32>
    %58 = vector.extract_strided_slice %48 {offsets = [0, 0, 0], sizes = [1, 16, 2], strides = [1, 1, 1]} : vector<4x16x2xf32> to vector<1x16x2xf32>
    %59 = vector.shape_cast %58 : vector<1x16x2xf32> to vector<16x2xf32>
    %cst_28 = arith.constant dense<0.000000e+00> : vector<8x2xf32>
    %60 = tpu.matmul %53, %59, %cst_28 {dimension_numbers = #tpu.dot_dimension_numbers<[1], [0], [0], [1], [0, 0, 1, 1], [], []>} : vector<8x16xf32>, vector<16x2xf32>, vector<8x2xf32> -> vector<8x2xf32>
    %cst_29 = arith.constant dense<0xFF800000> : vector<8xf32>
    %61 = vector.multi_reduction <maximumf>, %57, %cst_29 [1] : vector<8x8xf32> to vector<8xf32>
    %62 = vector.shape_cast %61 : vector<8xf32> to vector<8x1xf32>
    %cst_30 = arith.constant dense<0xFF800000> : vector<8xf32>
    %63 = vector.multi_reduction <maximumf>, %60, %cst_30 [1] : vector<8x2xf32> to vector<8xf32>
    %64 = vector.shape_cast %63 : vector<8xf32> to vector<8x1xf32>
    %65 = arith.maximumf %62, %64 : vector<8x1xf32>
    %66 = vector.broadcast %65 : vector<8x1xf32> to vector<8x8xf32>
    %67 = arith.subf %57, %66 : vector<8x8xf32>
    %68 = math.exp %67 : vector<8x8xf32>
    %69 = vector.broadcast %65 : vector<8x1xf32> to vector<8x2xf32>
    %70 = arith.subf %60, %69 : vector<8x2xf32>
    %71 = math.exp %70 : vector<8x2xf32>
    %cst_31 = arith.constant dense<0.000000e+00> : vector<8xf32>
    %72 = vector.multi_reduction <add>, %68, %cst_31 [1] : vector<8x8xf32> to vector<8xf32>
    %73 = vector.shape_cast %72 : vector<8xf32> to vector<8x1xf32>
    %cst_32 = arith.constant dense<0.000000e+00> : vector<8xf32>
    %74 = vector.multi_reduction <add>, %71, %cst_32 [1] : vector<8x2xf32> to vector<8xf32>
    %75 = vector.shape_cast %74 : vector<8xf32> to vector<8x1xf32>
    %76 = arith.addf %73, %75 : vector<8x1xf32>
    %77 = tpu.reciprocal %76 {approx = true} : vector<8x1xf32> -> vector<8x1xf32>
    %cst_33 = arith.constant dense<0.000000e+00> : vector<8x16xf32>
    %78 = tpu.matmul %68, %55, %cst_33 {dimension_numbers = #tpu.dot_dimension_numbers<[1], [0], [0], [1], [0, 0, 1, 1], [], []>} : vector<8x8xf32>, vector<8x16xf32>, vector<8x16xf32> -> vector<8x16xf32>
    %79 = vector.extract_strided_slice %49 {offsets = [0, 0, 0], sizes = [1, 2, 16], strides = [1, 1, 1]} : vector<4x2x16xf32> to vector<1x2x16xf32>
    %80 = vector.shape_cast %79 : vector<1x2x16xf32> to vector<2x16xf32>
    %cst_34 = arith.constant dense<0.000000e+00> : vector<8x16xf32>
    %81 = tpu.matmul %71, %80, %cst_34 {dimension_numbers = #tpu.dot_dimension_numbers<[1], [0], [0], [1], [0, 0, 1, 1], [], []>} : vector<8x2xf32>, vector<2x16xf32>, vector<8x16xf32> -> vector<8x16xf32>
    %82 = arith.addf %78, %81 : vector<8x16xf32>
    %83 = vector.broadcast %77 : vector<8x1xf32> to vector<8x16xf32>
    %84 = arith.mulf %82, %83 : vector<8x16xf32>
    %85 = vector.extract_strided_slice %51 {offsets = [0, 16], sizes = [8, 16], strides = [1, 1]} : vector<8x64xf32> to vector<8x16xf32>
    %86 = vector.extract_strided_slice %47 {offsets = [16, 0], sizes = [16, 8], strides = [1, 1]} : vector<64x16xf32> to vector<16x8xf32>
    %87 = vector.extract_strided_slice %52 {offsets = [0, 16], sizes = [8, 16], strides = [1, 1]} : vector<8x64xf32> to vector<8x16xf32>
    %cst_35 = arith.constant dense<0.000000e+00> : vector<8x8xf32>
    %88 = tpu.matmul %85, %86, %cst_35 {dimension_numbers = #tpu.dot_dimension_numbers<[1], [0], [0], [1], [0, 0, 1, 1], [], []>} : vector<8x16xf32>, vector<16x8xf32>, vector<8x8xf32> -> vector<8x8xf32>
    %89 = arith.addf %88, %50 : vector<8x8xf32>
    %90 = vector.extract_strided_slice %48 {offsets = [1, 0, 0], sizes = [1, 16, 2], strides = [1, 1, 1]} : vector<4x16x2xf32> to vector<1x16x2xf32>
    %91 = vector.shape_cast %90 : vector<1x16x2xf32> to vector<16x2xf32>
    %cst_36 = arith.constant dense<0.000000e+00> : vector<8x2xf32>
    %92 = tpu.matmul %85, %91, %cst_36 {dimension_numbers = #tpu.dot_dimension_numbers<[1], [0], [0], [1], [0, 0, 1, 1], [], []>} : vector<8x16xf32>, vector<16x2xf32>, vector<8x2xf32> -> vector<8x2xf32>
    %cst_37 = arith.constant dense<0xFF800000> : vector<8xf32>
    %93 = vector.multi_reduction <maximumf>, %89, %cst_37 [1] : vector<8x8xf32> to vector<8xf32>
    %94 = vector.shape_cast %93 : vector<8xf32> to vector<8x1xf32>
    %cst_38 = arith.constant dense<0xFF800000> : vector<8xf32>
    %95 = vector.multi_reduction <maximumf>, %92, %cst_38 [1] : vector<8x2xf32> to vector<8xf32>
    %96 = vector.shape_cast %95 : vector<8xf32> to vector<8x1xf32>
    %97 = arith.maximumf %94, %96 : vector<8x1xf32>
    %98 = vector.broadcast %97 : vector<8x1xf32> to vector<8x8xf32>
    %99 = arith.subf %89, %98 : vector<8x8xf32>
    %100 = math.exp %99 : vector<8x8xf32>
    %101 = vector.broadcast %97 : vector<8x1xf32> to vector<8x2xf32>
    %102 = arith.subf %92, %101 : vector<8x2xf32>
    %103 = math.exp %102 : vector<8x2xf32>
    %cst_39 = arith.constant dense<0.000000e+00> : vector<8xf32>
    %104 = vector.multi_reduction <add>, %100, %cst_39 [1] : vector<8x8xf32> to vector<8xf32>
    %105 = vector.shape_cast %104 : vector<8xf32> to vector<8x1xf32>
    %cst_40 = arith.constant dense<0.000000e+00> : vector<8xf32>
    %106 = vector.multi_reduction <add>, %103, %cst_40 [1] : vector<8x2xf32> to vector<8xf32>
    %107 = vector.shape_cast %106 : vector<8xf32> to vector<8x1xf32>
    %108 = arith.addf %105, %107 : vector<8x1xf32>
    %109 = tpu.reciprocal %108 {approx = true} : vector<8x1xf32> -> vector<8x1xf32>
    %cst_41 = arith.constant dense<0.000000e+00> : vector<8x16xf32>
    %110 = tpu.matmul %100, %87, %cst_41 {dimension_numbers = #tpu.dot_dimension_numbers<[1], [0], [0], [1], [0, 0, 1, 1], [], []>} : vector<8x8xf32>, vector<8x16xf32>, vector<8x16xf32> -> vector<8x16xf32>
    %111 = vector.extract_strided_slice %49 {offsets = [1, 0, 0], sizes = [1, 2, 16], strides = [1, 1, 1]} : vector<4x2x16xf32> to vector<1x2x16xf32>
    %112 = vector.shape_cast %111 : vector<1x2x16xf32> to vector<2x16xf32>
    %cst_42 = arith.constant dense<0.000000e+00> : vector<8x16xf32>
    %113 = tpu.matmul %103, %112, %cst_42 {dimension_numbers = #tpu.dot_dimension_numbers<[1], [0], [0], [1], [0, 0, 1, 1], [], []>} : vector<8x2xf32>, vector<2x16xf32>, vector<8x16xf32> -> vector<8x16xf32>
    %114 = arith.addf %110, %113 : vector<8x16xf32>
    %115 = vector.broadcast %109 : vector<8x1xf32> to vector<8x16xf32>
    %116 = arith.mulf %114, %115 : vector<8x16xf32>
    %117 = vector.extract_strided_slice %51 {offsets = [0, 32], sizes = [8, 16], strides = [1, 1]} : vector<8x64xf32> to vector<8x16xf32>
    %118 = vector.extract_strided_slice %47 {offsets = [32, 0], sizes = [16, 8], strides = [1, 1]} : vector<64x16xf32> to vector<16x8xf32>
    %119 = vector.extract_strided_slice %52 {offsets = [0, 32], sizes = [8, 16], strides = [1, 1]} : vector<8x64xf32> to vector<8x16xf32>
    %cst_43 = arith.constant dense<0.000000e+00> : vector<8x8xf32>
    %120 = tpu.matmul %117, %118, %cst_43 {dimension_numbers = #tpu.dot_dimension_numbers<[1], [0], [0], [1], [0, 0, 1, 1], [], []>} : vector<8x16xf32>, vector<16x8xf32>, vector<8x8xf32> -> vector<8x8xf32>
    %121 = arith.addf %120, %50 : vector<8x8xf32>
    %122 = vector.extract_strided_slice %48 {offsets = [2, 0, 0], sizes = [1, 16, 2], strides = [1, 1, 1]} : vector<4x16x2xf32> to vector<1x16x2xf32>
    %123 = vector.shape_cast %122 : vector<1x16x2xf32> to vector<16x2xf32>
    %cst_44 = arith.constant dense<0.000000e+00> : vector<8x2xf32>
    %124 = tpu.matmul %117, %123, %cst_44 {dimension_numbers = #tpu.dot_dimension_numbers<[1], [0], [0], [1], [0, 0, 1, 1], [], []>} : vector<8x16xf32>, vector<16x2xf32>, vector<8x2xf32> -> vector<8x2xf32>
    %cst_45 = arith.constant dense<0xFF800000> : vector<8xf32>
    %125 = vector.multi_reduction <maximumf>, %121, %cst_45 [1] : vector<8x8xf32> to vector<8xf32>
    %126 = vector.shape_cast %125 : vector<8xf32> to vector<8x1xf32>
    %cst_46 = arith.constant dense<0xFF800000> : vector<8xf32>
    %127 = vector.multi_reduction <maximumf>, %124, %cst_46 [1] : vector<8x2xf32> to vector<8xf32>
    %128 = vector.shape_cast %127 : vector<8xf32> to vector<8x1xf32>
    %129 = arith.maximumf %126, %128 : vector<8x1xf32>
    %130 = vector.broadcast %129 : vector<8x1xf32> to vector<8x8xf32>
    %131 = arith.subf %121, %130 : vector<8x8xf32>
    %132 = math.exp %131 : vector<8x8xf32>
    %133 = vector.broadcast %129 : vector<8x1xf32> to vector<8x2xf32>
    %134 = arith.subf %124, %133 : vector<8x2xf32>
    %135 = math.exp %134 : vector<8x2xf32>
    %cst_47 = arith.constant dense<0.000000e+00> : vector<8xf32>
    %136 = vector.multi_reduction <add>, %132, %cst_47 [1] : vector<8x8xf32> to vector<8xf32>
    %137 = vector.shape_cast %136 : vector<8xf32> to vector<8x1xf32>
    %cst_48 = arith.constant dense<0.000000e+00> : vector<8xf32>
    %138 = vector.multi_reduction <add>, %135, %cst_48 [1] : vector<8x2xf32> to vector<8xf32>
    %139 = vector.shape_cast %138 : vector<8xf32> to vector<8x1xf32>
    %140 = arith.addf %137, %139 : vector<8x1xf32>
    %141 = tpu.reciprocal %140 {approx = true} : vector<8x1xf32> -> vector<8x1xf32>
    %cst_49 = arith.constant dense<0.000000e+00> : vector<8x16xf32>
    %142 = tpu.matmul %132, %119, %cst_49 {dimension_numbers = #tpu.dot_dimension_numbers<[1], [0], [0], [1], [0, 0, 1, 1], [], []>} : vector<8x8xf32>, vector<8x16xf32>, vector<8x16xf32> -> vector<8x16xf32>
    %143 = vector.extract_strided_slice %49 {offsets = [2, 0, 0], sizes = [1, 2, 16], strides = [1, 1, 1]} : vector<4x2x16xf32> to vector<1x2x16xf32>
    %144 = vector.shape_cast %143 : vector<1x2x16xf32> to vector<2x16xf32>
    %cst_50 = arith.constant dense<0.000000e+00> : vector<8x16xf32>
    %145 = tpu.matmul %135, %144, %cst_50 {dimension_numbers = #tpu.dot_dimension_numbers<[1], [0], [0], [1], [0, 0, 1, 1], [], []>} : vector<8x2xf32>, vector<2x16xf32>, vector<8x16xf32> -> vector<8x16xf32>
    %146 = arith.addf %142, %145 : vector<8x16xf32>
    %147 = vector.broadcast %141 : vector<8x1xf32> to vector<8x16xf32>
    %148 = arith.mulf %146, %147 : vector<8x16xf32>
    %149 = vector.extract_strided_slice %51 {offsets = [0, 48], sizes = [8, 16], strides = [1, 1]} : vector<8x64xf32> to vector<8x16xf32>
    %150 = vector.extract_strided_slice %47 {offsets = [48, 0], sizes = [16, 8], strides = [1, 1]} : vector<64x16xf32> to vector<16x8xf32>
    %151 = vector.extract_strided_slice %52 {offsets = [0, 48], sizes = [8, 16], strides = [1, 1]} : vector<8x64xf32> to vector<8x16xf32>
    %cst_51 = arith.constant dense<0.000000e+00> : vector<8x8xf32>
    %152 = tpu.matmul %149, %150, %cst_51 {dimension_numbers = #tpu.dot_dimension_numbers<[1], [0], [0], [1], [0, 0, 1, 1], [], []>} : vector<8x16xf32>, vector<16x8xf32>, vector<8x8xf32> -> vector<8x8xf32>
    %153 = arith.addf %152, %50 : vector<8x8xf32>
    %154 = vector.extract_strided_slice %48 {offsets = [3, 0, 0], sizes = [1, 16, 2], strides = [1, 1, 1]} : vector<4x16x2xf32> to vector<1x16x2xf32>
    %155 = vector.shape_cast %154 : vector<1x16x2xf32> to vector<16x2xf32>
    %cst_52 = arith.constant dense<0.000000e+00> : vector<8x2xf32>
    %156 = tpu.matmul %149, %155, %cst_52 {dimension_numbers = #tpu.dot_dimension_numbers<[1], [0], [0], [1], [0, 0, 1, 1], [], []>} : vector<8x16xf32>, vector<16x2xf32>, vector<8x2xf32> -> vector<8x2xf32>
    %cst_53 = arith.constant dense<0xFF800000> : vector<8xf32>
    %157 = vector.multi_reduction <maximumf>, %153, %cst_53 [1] : vector<8x8xf32> to vector<8xf32>
    %158 = vector.shape_cast %157 : vector<8xf32> to vector<8x1xf32>
    %cst_54 = arith.constant dense<0xFF800000> : vector<8xf32>
    %159 = vector.multi_reduction <maximumf>, %156, %cst_54 [1] : vector<8x2xf32> to vector<8xf32>
    %160 = vector.shape_cast %159 : vector<8xf32> to vector<8x1xf32>
    %161 = arith.maximumf %158, %160 : vector<8x1xf32>
    %162 = vector.broadcast %161 : vector<8x1xf32> to vector<8x8xf32>
    %163 = arith.subf %153, %162 : vector<8x8xf32>
    %164 = math.exp %163 : vector<8x8xf32>
    %165 = vector.broadcast %161 : vector<8x1xf32> to vector<8x2xf32>
    %166 = arith.subf %156, %165 : vector<8x2xf32>
    %167 = math.exp %166 : vector<8x2xf32>
    %cst_55 = arith.constant dense<0.000000e+00> : vector<8xf32>
    %168 = vector.multi_reduction <add>, %164, %cst_55 [1] : vector<8x8xf32> to vector<8xf32>
    %169 = vector.shape_cast %168 : vector<8xf32> to vector<8x1xf32>
    %cst_56 = arith.constant dense<0.000000e+00> : vector<8xf32>
    %170 = vector.multi_reduction <add>, %167, %cst_56 [1] : vector<8x2xf32> to vector<8xf32>
    %171 = vector.shape_cast %170 : vector<8xf32> to vector<8x1xf32>
    %172 = arith.addf %169, %171 : vector<8x1xf32>
    %173 = tpu.reciprocal %172 {approx = true} : vector<8x1xf32> -> vector<8x1xf32>
    %cst_57 = arith.constant dense<0.000000e+00> : vector<8x16xf32>
    %174 = tpu.matmul %164, %151, %cst_57 {dimension_numbers = #tpu.dot_dimension_numbers<[1], [0], [0], [1], [0, 0, 1, 1], [], []>} : vector<8x8xf32>, vector<8x16xf32>, vector<8x16xf32> -> vector<8x16xf32>
    %175 = vector.extract_strided_slice %49 {offsets = [3, 0, 0], sizes = [1, 2, 16], strides = [1, 1, 1]} : vector<4x2x16xf32> to vector<1x2x16xf32>
    %176 = vector.shape_cast %175 : vector<1x2x16xf32> to vector<2x16xf32>
    %cst_58 = arith.constant dense<0.000000e+00> : vector<8x16xf32>
    %177 = tpu.matmul %167, %176, %cst_58 {dimension_numbers = #tpu.dot_dimension_numbers<[1], [0], [0], [1], [0, 0, 1, 1], [], []>} : vector<8x2xf32>, vector<2x16xf32>, vector<8x16xf32> -> vector<8x16xf32>
    %178 = arith.addf %174, %177 : vector<8x16xf32>
    %179 = vector.broadcast %173 : vector<8x1xf32> to vector<8x16xf32>
    %180 = arith.mulf %178, %179 : vector<8x16xf32>
    %181 = tpu.concatenate %84, %116, %148, %180 in 1 : vector<8x16xf32>, vector<8x16xf32>, vector<8x16xf32>, vector<8x16xf32> -> vector<8x64xf32>
    %182 = vector.extract_strided_slice %29 {offsets = [8, 0], sizes = [8, 64], strides = [1, 1]} : vector<16x64xf32> to vector<8x64xf32>
    %183 = vector.extract_strided_slice %35 {offsets = [8, 0], sizes = [8, 64], strides = [1, 1]} : vector<16x64xf32> to vector<8x64xf32>
    %184 = vector.extract_strided_slice %182 {offsets = [0, 0], sizes = [8, 16], strides = [1, 1]} : vector<8x64xf32> to vector<8x16xf32>
    %185 = vector.extract_strided_slice %47 {offsets = [0, 8], sizes = [16, 8], strides = [1, 1]} : vector<64x16xf32> to vector<16x8xf32>
    %186 = vector.extract_strided_slice %183 {offsets = [0, 0], sizes = [8, 16], strides = [1, 1]} : vector<8x64xf32> to vector<8x16xf32>
    %cst_59 = arith.constant dense<0.000000e+00> : vector<8x8xf32>
    %187 = tpu.matmul %184, %185, %cst_59 {dimension_numbers = #tpu.dot_dimension_numbers<[1], [0], [0], [1], [0, 0, 1, 1], [], []>} : vector<8x16xf32>, vector<16x8xf32>, vector<8x8xf32> -> vector<8x8xf32>
    %188 = arith.addf %187, %50 : vector<8x8xf32>
    %189 = vector.extract_strided_slice %48 {offsets = [0, 0, 0], sizes = [1, 16, 2], strides = [1, 1, 1]} : vector<4x16x2xf32> to vector<1x16x2xf32>
    %190 = vector.shape_cast %189 : vector<1x16x2xf32> to vector<16x2xf32>
    %cst_60 = arith.constant dense<0.000000e+00> : vector<8x2xf32>
    %191 = tpu.matmul %184, %190, %cst_60 {dimension_numbers = #tpu.dot_dimension_numbers<[1], [0], [0], [1], [0, 0, 1, 1], [], []>} : vector<8x16xf32>, vector<16x2xf32>, vector<8x2xf32> -> vector<8x2xf32>
    %cst_61 = arith.constant dense<0xFF800000> : vector<8xf32>
    %192 = vector.multi_reduction <maximumf>, %188, %cst_61 [1] : vector<8x8xf32> to vector<8xf32>
    %193 = vector.shape_cast %192 : vector<8xf32> to vector<8x1xf32>
    %cst_62 = arith.constant dense<0xFF800000> : vector<8xf32>
    %194 = vector.multi_reduction <maximumf>, %191, %cst_62 [1] : vector<8x2xf32> to vector<8xf32>
    %195 = vector.shape_cast %194 : vector<8xf32> to vector<8x1xf32>
    %196 = arith.maximumf %193, %195 : vector<8x1xf32>
    %197 = vector.broadcast %196 : vector<8x1xf32> to vector<8x8xf32>
    %198 = arith.subf %188, %197 : vector<8x8xf32>
    %199 = math.exp %198 : vector<8x8xf32>
    %200 = vector.broadcast %196 : vector<8x1xf32> to vector<8x2xf32>
    %201 = arith.subf %191, %200 : vector<8x2xf32>
    %202 = math.exp %201 : vector<8x2xf32>
    %cst_63 = arith.constant dense<0.000000e+00> : vector<8xf32>
    %203 = vector.multi_reduction <add>, %199, %cst_63 [1] : vector<8x8xf32> to vector<8xf32>
    %204 = vector.shape_cast %203 : vector<8xf32> to vector<8x1xf32>
    %cst_64 = arith.constant dense<0.000000e+00> : vector<8xf32>
    %205 = vector.multi_reduction <add>, %202, %cst_64 [1] : vector<8x2xf32> to vector<8xf32>
    %206 = vector.shape_cast %205 : vector<8xf32> to vector<8x1xf32>
    %207 = arith.addf %204, %206 : vector<8x1xf32>
    %208 = tpu.reciprocal %207 {approx = true} : vector<8x1xf32> -> vector<8x1xf32>
    %cst_65 = arith.constant dense<0.000000e+00> : vector<8x16xf32>
    %209 = tpu.matmul %199, %186, %cst_65 {dimension_numbers = #tpu.dot_dimension_numbers<[1], [0], [0], [1], [0, 0, 1, 1], [], []>} : vector<8x8xf32>, vector<8x16xf32>, vector<8x16xf32> -> vector<8x16xf32>
    %210 = vector.extract_strided_slice %49 {offsets = [0, 0, 0], sizes = [1, 2, 16], strides = [1, 1, 1]} : vector<4x2x16xf32> to vector<1x2x16xf32>
    %211 = vector.shape_cast %210 : vector<1x2x16xf32> to vector<2x16xf32>
    %cst_66 = arith.constant dense<0.000000e+00> : vector<8x16xf32>
    %212 = tpu.matmul %202, %211, %cst_66 {dimension_numbers = #tpu.dot_dimension_numbers<[1], [0], [0], [1], [0, 0, 1, 1], [], []>} : vector<8x2xf32>, vector<2x16xf32>, vector<8x16xf32> -> vector<8x16xf32>
    %213 = arith.addf %209, %212 : vector<8x16xf32>
    %214 = vector.broadcast %208 : vector<8x1xf32> to vector<8x16xf32>
    %215 = arith.mulf %213, %214 : vector<8x16xf32>
    %216 = vector.extract_strided_slice %182 {offsets = [0, 16], sizes = [8, 16], strides = [1, 1]} : vector<8x64xf32> to vector<8x16xf32>
    %217 = vector.extract_strided_slice %47 {offsets = [16, 8], sizes = [16, 8], strides = [1, 1]} : vector<64x16xf32> to vector<16x8xf32>
    %218 = vector.extract_strided_slice %183 {offsets = [0, 16], sizes = [8, 16], strides = [1, 1]} : vector<8x64xf32> to vector<8x16xf32>
    %cst_67 = arith.constant dense<0.000000e+00> : vector<8x8xf32>
    %219 = tpu.matmul %216, %217, %cst_67 {dimension_numbers = #tpu.dot_dimension_numbers<[1], [0], [0], [1], [0, 0, 1, 1], [], []>} : vector<8x16xf32>, vector<16x8xf32>, vector<8x8xf32> -> vector<8x8xf32>
    %220 = arith.addf %219, %50 : vector<8x8xf32>
    %221 = vector.extract_strided_slice %48 {offsets = [1, 0, 0], sizes = [1, 16, 2], strides = [1, 1, 1]} : vector<4x16x2xf32> to vector<1x16x2xf32>
    %222 = vector.shape_cast %221 : vector<1x16x2xf32> to vector<16x2xf32>
    %cst_68 = arith.constant dense<0.000000e+00> : vector<8x2xf32>
    %223 = tpu.matmul %216, %222, %cst_68 {dimension_numbers = #tpu.dot_dimension_numbers<[1], [0], [0], [1], [0, 0, 1, 1], [], []>} : vector<8x16xf32>, vector<16x2xf32>, vector<8x2xf32> -> vector<8x2xf32>
    %cst_69 = arith.constant dense<0xFF800000> : vector<8xf32>
    %224 = vector.multi_reduction <maximumf>, %220, %cst_69 [1] : vector<8x8xf32> to vector<8xf32>
    %225 = vector.shape_cast %224 : vector<8xf32> to vector<8x1xf32>
    %cst_70 = arith.constant dense<0xFF800000> : vector<8xf32>
    %226 = vector.multi_reduction <maximumf>, %223, %cst_70 [1] : vector<8x2xf32> to vector<8xf32>
    %227 = vector.shape_cast %226 : vector<8xf32> to vector<8x1xf32>
    %228 = arith.maximumf %225, %227 : vector<8x1xf32>
    %229 = vector.broadcast %228 : vector<8x1xf32> to vector<8x8xf32>
    %230 = arith.subf %220, %229 : vector<8x8xf32>
    %231 = math.exp %230 : vector<8x8xf32>
    %232 = vector.broadcast %228 : vector<8x1xf32> to vector<8x2xf32>
    %233 = arith.subf %223, %232 : vector<8x2xf32>
    %234 = math.exp %233 : vector<8x2xf32>
    %cst_71 = arith.constant dense<0.000000e+00> : vector<8xf32>
    %235 = vector.multi_reduction <add>, %231, %cst_71 [1] : vector<8x8xf32> to vector<8xf32>
    %236 = vector.shape_cast %235 : vector<8xf32> to vector<8x1xf32>
    %cst_72 = arith.constant dense<0.000000e+00> : vector<8xf32>
    %237 = vector.multi_reduction <add>, %234, %cst_72 [1] : vector<8x2xf32> to vector<8xf32>
    %238 = vector.shape_cast %237 : vector<8xf32> to vector<8x1xf32>
    %239 = arith.addf %236, %238 : vector<8x1xf32>
    %240 = tpu.reciprocal %239 {approx = true} : vector<8x1xf32> -> vector<8x1xf32>
    %cst_73 = arith.constant dense<0.000000e+00> : vector<8x16xf32>
    %241 = tpu.matmul %231, %218, %cst_73 {dimension_numbers = #tpu.dot_dimension_numbers<[1], [0], [0], [1], [0, 0, 1, 1], [], []>} : vector<8x8xf32>, vector<8x16xf32>, vector<8x16xf32> -> vector<8x16xf32>
    %242 = vector.extract_strided_slice %49 {offsets = [1, 0, 0], sizes = [1, 2, 16], strides = [1, 1, 1]} : vector<4x2x16xf32> to vector<1x2x16xf32>
    %243 = vector.shape_cast %242 : vector<1x2x16xf32> to vector<2x16xf32>
    %cst_74 = arith.constant dense<0.000000e+00> : vector<8x16xf32>
    %244 = tpu.matmul %234, %243, %cst_74 {dimension_numbers = #tpu.dot_dimension_numbers<[1], [0], [0], [1], [0, 0, 1, 1], [], []>} : vector<8x2xf32>, vector<2x16xf32>, vector<8x16xf32> -> vector<8x16xf32>
    %245 = arith.addf %241, %244 : vector<8x16xf32>
    %246 = vector.broadcast %240 : vector<8x1xf32> to vector<8x16xf32>
    %247 = arith.mulf %245, %246 : vector<8x16xf32>
    %248 = vector.extract_strided_slice %182 {offsets = [0, 32], sizes = [8, 16], strides = [1, 1]} : vector<8x64xf32> to vector<8x16xf32>
    %249 = vector.extract_strided_slice %47 {offsets = [32, 8], sizes = [16, 8], strides = [1, 1]} : vector<64x16xf32> to vector<16x8xf32>
    %250 = vector.extract_strided_slice %183 {offsets = [0, 32], sizes = [8, 16], strides = [1, 1]} : vector<8x64xf32> to vector<8x16xf32>
    %cst_75 = arith.constant dense<0.000000e+00> : vector<8x8xf32>
    %251 = tpu.matmul %248, %249, %cst_75 {dimension_numbers = #tpu.dot_dimension_numbers<[1], [0], [0], [1], [0, 0, 1, 1], [], []>} : vector<8x16xf32>, vector<16x8xf32>, vector<8x8xf32> -> vector<8x8xf32>
    %252 = arith.addf %251, %50 : vector<8x8xf32>
    %253 = vector.extract_strided_slice %48 {offsets = [2, 0, 0], sizes = [1, 16, 2], strides = [1, 1, 1]} : vector<4x16x2xf32> to vector<1x16x2xf32>
    %254 = vector.shape_cast %253 : vector<1x16x2xf32> to vector<16x2xf32>
    %cst_76 = arith.constant dense<0.000000e+00> : vector<8x2xf32>
    %255 = tpu.matmul %248, %254, %cst_76 {dimension_numbers = #tpu.dot_dimension_numbers<[1], [0], [0], [1], [0, 0, 1, 1], [], []>} : vector<8x16xf32>, vector<16x2xf32>, vector<8x2xf32> -> vector<8x2xf32>
    %cst_77 = arith.constant dense<0xFF800000> : vector<8xf32>
    %256 = vector.multi_reduction <maximumf>, %252, %cst_77 [1] : vector<8x8xf32> to vector<8xf32>
    %257 = vector.shape_cast %256 : vector<8xf32> to vector<8x1xf32>
    %cst_78 = arith.constant dense<0xFF800000> : vector<8xf32>
    %258 = vector.multi_reduction <maximumf>, %255, %cst_78 [1] : vector<8x2xf32> to vector<8xf32>
    %259 = vector.shape_cast %258 : vector<8xf32> to vector<8x1xf32>
    %260 = arith.maximumf %257, %259 : vector<8x1xf32>
    %261 = vector.broadcast %260 : vector<8x1xf32> to vector<8x8xf32>
    %262 = arith.subf %252, %261 : vector<8x8xf32>
    %263 = math.exp %262 : vector<8x8xf32>
    %264 = vector.broadcast %260 : vector<8x1xf32> to vector<8x2xf32>
    %265 = arith.subf %255, %264 : vector<8x2xf32>
    %266 = math.exp %265 : vector<8x2xf32>
    %cst_79 = arith.constant dense<0.000000e+00> : vector<8xf32>
    %267 = vector.multi_reduction <add>, %263, %cst_79 [1] : vector<8x8xf32> to vector<8xf32>
    %268 = vector.shape_cast %267 : vector<8xf32> to vector<8x1xf32>
    %cst_80 = arith.constant dense<0.000000e+00> : vector<8xf32>
    %269 = vector.multi_reduction <add>, %266, %cst_80 [1] : vector<8x2xf32> to vector<8xf32>
    %270 = vector.shape_cast %269 : vector<8xf32> to vector<8x1xf32>
    %271 = arith.addf %268, %270 : vector<8x1xf32>
    %272 = tpu.reciprocal %271 {approx = true} : vector<8x1xf32> -> vector<8x1xf32>
    %cst_81 = arith.constant dense<0.000000e+00> : vector<8x16xf32>
    %273 = tpu.matmul %263, %250, %cst_81 {dimension_numbers = #tpu.dot_dimension_numbers<[1], [0], [0], [1], [0, 0, 1, 1], [], []>} : vector<8x8xf32>, vector<8x16xf32>, vector<8x16xf32> -> vector<8x16xf32>
    %274 = vector.extract_strided_slice %49 {offsets = [2, 0, 0], sizes = [1, 2, 16], strides = [1, 1, 1]} : vector<4x2x16xf32> to vector<1x2x16xf32>
    %275 = vector.shape_cast %274 : vector<1x2x16xf32> to vector<2x16xf32>
    %cst_82 = arith.constant dense<0.000000e+00> : vector<8x16xf32>
    %276 = tpu.matmul %266, %275, %cst_82 {dimension_numbers = #tpu.dot_dimension_numbers<[1], [0], [0], [1], [0, 0, 1, 1], [], []>} : vector<8x2xf32>, vector<2x16xf32>, vector<8x16xf32> -> vector<8x16xf32>
    %277 = arith.addf %273, %276 : vector<8x16xf32>
    %278 = vector.broadcast %272 : vector<8x1xf32> to vector<8x16xf32>
    %279 = arith.mulf %277, %278 : vector<8x16xf32>
    %280 = vector.extract_strided_slice %182 {offsets = [0, 48], sizes = [8, 16], strides = [1, 1]} : vector<8x64xf32> to vector<8x16xf32>
    %281 = vector.extract_strided_slice %47 {offsets = [48, 8], sizes = [16, 8], strides = [1, 1]} : vector<64x16xf32> to vector<16x8xf32>
    %282 = vector.extract_strided_slice %183 {offsets = [0, 48], sizes = [8, 16], strides = [1, 1]} : vector<8x64xf32> to vector<8x16xf32>
    %cst_83 = arith.constant dense<0.000000e+00> : vector<8x8xf32>
    %283 = tpu.matmul %280, %281, %cst_83 {dimension_numbers = #tpu.dot_dimension_numbers<[1], [0], [0], [1], [0, 0, 1, 1], [], []>} : vector<8x16xf32>, vector<16x8xf32>, vector<8x8xf32> -> vector<8x8xf32>
    %284 = arith.addf %283, %50 : vector<8x8xf32>
    %285 = vector.extract_strided_slice %48 {offsets = [3, 0, 0], sizes = [1, 16, 2], strides = [1, 1, 1]} : vector<4x16x2xf32> to vector<1x16x2xf32>
    %286 = vector.shape_cast %285 : vector<1x16x2xf32> to vector<16x2xf32>
    %cst_84 = arith.constant dense<0.000000e+00> : vector<8x2xf32>
    %287 = tpu.matmul %280, %286, %cst_84 {dimension_numbers = #tpu.dot_dimension_numbers<[1], [0], [0], [1], [0, 0, 1, 1], [], []>} : vector<8x16xf32>, vector<16x2xf32>, vector<8x2xf32> -> vector<8x2xf32>
    %cst_85 = arith.constant dense<0xFF800000> : vector<8xf32>
    %288 = vector.multi_reduction <maximumf>, %284, %cst_85 [1] : vector<8x8xf32> to vector<8xf32>
    %289 = vector.shape_cast %288 : vector<8xf32> to vector<8x1xf32>
    %cst_86 = arith.constant dense<0xFF800000> : vector<8xf32>
    %290 = vector.multi_reduction <maximumf>, %287, %cst_86 [1] : vector<8x2xf32> to vector<8xf32>
    %291 = vector.shape_cast %290 : vector<8xf32> to vector<8x1xf32>
    %292 = arith.maximumf %289, %291 : vector<8x1xf32>
    %293 = vector.broadcast %292 : vector<8x1xf32> to vector<8x8xf32>
    %294 = arith.subf %284, %293 : vector<8x8xf32>
    %295 = math.exp %294 : vector<8x8xf32>
    %296 = vector.broadcast %292 : vector<8x1xf32> to vector<8x2xf32>
    %297 = arith.subf %287, %296 : vector<8x2xf32>
    %298 = math.exp %297 : vector<8x2xf32>
    %cst_87 = arith.constant dense<0.000000e+00> : vector<8xf32>
    %299 = vector.multi_reduction <add>, %295, %cst_87 [1] : vector<8x8xf32> to vector<8xf32>
    %300 = vector.shape_cast %299 : vector<8xf32> to vector<8x1xf32>
    %cst_88 = arith.constant dense<0.000000e+00> : vector<8xf32>
    %301 = vector.multi_reduction <add>, %298, %cst_88 [1] : vector<8x2xf32> to vector<8xf32>
    %302 = vector.shape_cast %301 : vector<8xf32> to vector<8x1xf32>
    %303 = arith.addf %300, %302 : vector<8x1xf32>
    %304 = tpu.reciprocal %303 {approx = true} : vector<8x1xf32> -> vector<8x1xf32>
    %cst_89 = arith.constant dense<0.000000e+00> : vector<8x16xf32>
    %305 = tpu.matmul %295, %282, %cst_89 {dimension_numbers = #tpu.dot_dimension_numbers<[1], [0], [0], [1], [0, 0, 1, 1], [], []>} : vector<8x8xf32>, vector<8x16xf32>, vector<8x16xf32> -> vector<8x16xf32>
    %306 = vector.extract_strided_slice %49 {offsets = [3, 0, 0], sizes = [1, 2, 16], strides = [1, 1, 1]} : vector<4x2x16xf32> to vector<1x2x16xf32>
    %307 = vector.shape_cast %306 : vector<1x2x16xf32> to vector<2x16xf32>
    %cst_90 = arith.constant dense<0.000000e+00> : vector<8x16xf32>
    %308 = tpu.matmul %298, %307, %cst_90 {dimension_numbers = #tpu.dot_dimension_numbers<[1], [0], [0], [1], [0, 0, 1, 1], [], []>} : vector<8x2xf32>, vector<2x16xf32>, vector<8x16xf32> -> vector<8x16xf32>
    %309 = arith.addf %305, %308 : vector<8x16xf32>
    %310 = vector.broadcast %304 : vector<8x1xf32> to vector<8x16xf32>
    %311 = arith.mulf %309, %310 : vector<8x16xf32>
    %312 = tpu.concatenate %215, %247, %279, %311 in 1 : vector<8x16xf32>, vector<8x16xf32>, vector<8x16xf32>, vector<8x16xf32> -> vector<8x64xf32>
    %313 = tpu.concatenate %181, %312 in 0 : vector<8x64xf32>, vector<8x64xf32> -> vector<16x64xf32>
    %c0_91 = arith.constant 0 : index
    %c0_92 = arith.constant 0 : index
    %314 = vector.load %arg7[%c0_91, %c0_92] : memref<8x32xf32, #tpu.memory_space<vmem>>, vector<8x32xf32>
    %cst_93 = arith.constant dense<0.000000e+00> : vector<16x32xf32>
    %315 = tpu.matmul %21, %314, %cst_93 {dimension_numbers = #tpu.dot_dimension_numbers<[1], [0], [0], [1], [0, 0, 1, 1], [], []>} : vector<16x8xf32>, vector<8x32xf32>, vector<16x32xf32> -> vector<16x32xf32>
    %c0_94 = arith.constant 0 : index
    %c0_95 = arith.constant 0 : index
    %316 = vector.load %arg8[%c0_94, %c0_95] : memref<64x32xf32, #tpu.memory_space<vmem>>, vector<64x32xf32>
    %cst_96 = arith.constant dense<0.000000e+00> : vector<16x32xf32>
    %317 = tpu.matmul %313, %316, %cst_96 {dimension_numbers = #tpu.dot_dimension_numbers<[1], [0], [0], [1], [0, 0, 1, 1], [], []>} : vector<16x64xf32>, vector<64x32xf32>, vector<16x32xf32> -> vector<16x32xf32>
    %318 = arith.addf %315, %317 : vector<16x32xf32>
    %c0_97 = arith.constant 0 : index
    %c0_98 = arith.constant 0 : index
    %319 = vector.load %arg9[%c0_97, %c0_98] : memref<64x32xf32, #tpu.memory_space<vmem>>, vector<64x32xf32>
    %cst_99 = arith.constant dense<0.000000e+00> : vector<16x32xf32>
    %320 = tpu.matmul %46, %319, %cst_99 {dimension_numbers = #tpu.dot_dimension_numbers<[1], [0], [0], [1], [0, 0, 1, 1], [], []>} : vector<16x64xf32>, vector<64x32xf32>, vector<16x32xf32> -> vector<16x32xf32>
    %321 = arith.addf %318, %320 : vector<16x32xf32>
    %322 = tpu.concatenate %321, %21, %7, %19 in 1 : vector<16x32xf32>, vector<16x8xf32>, vector<16x8xf32>, vector<16x8xf32> -> vector<16x56xf32>
    %c0_100 = arith.constant 0 : index
    %c0_101 = arith.constant 0 : index
    %323 = vector.load %arg13[%c0_100, %c0_101] : memref<16x56xf32, #tpu.memory_space<vmem>>, vector<16x56xf32>
    tpu.vector_store %arg13[%c0_100, %c0_101], %322 {strides = array<i32>} : memref<16x56xf32, #tpu.memory_space<vmem>>, vector<16x56xf32>,
    return
  }
  func.func @transform_0(%arg0: i32) -> (i32, i32) {
    %c0_i32 = arith.constant 0 : i32
    %c0_i32_0 = arith.constant 0 : i32
    %c0_i32_1 = arith.constant 0 : i32
    return %c0_i32, %c0_i32_0 : i32, i32
  }
  func.func @transform_1(%arg0: i32) -> (i32, i32) {
    %c0_i32 = arith.constant 0 : i32
    %c0_i32_0 = arith.constant 0 : i32
    %c0_i32_1 = arith.constant 0 : i32
    return %c0_i32, %c0_i32_0 : i32, i32
  }
  func.func @transform_2(%arg0: i32) -> (i32, i32) {
    %c0_i32 = arith.constant 0 : i32
    %c0_i32_0 = arith.constant 0 : i32
    %c0_i32_1 = arith.constant 0 : i32
    return %c0_i32, %c0_i32_0 : i32, i32
  }
  func.func @transform_3(%arg0: i32) -> (i32, i32) {
    %c0_i32 = arith.constant 0 : i32
    %c0_i32_0 = arith.constant 0 : i32
    %c0_i32_1 = arith.constant 0 : i32
    return %c0_i32, %c0_i32_0 : i32, i32
  }
  func.func @transform_4(%arg0: i32) -> (i32, i32) {
    %c0_i32 = arith.constant 0 : i32
    %c0_i32_0 = arith.constant 0 : i32
    %c0_i32_1 = arith.constant 0 : i32
    return %c0_i32, %c0_i32_0 : i32, i32
  }
  func.func @transform_5(%arg0: i32) -> (i32, i32) {
    %c0_i32 = arith.constant 0 : i32
    %c0_i32_0 = arith.constant 0 : i32
    %c0_i32_1 = arith.constant 0 : i32
    return %c0_i32, %c0_i32_0 : i32, i32
  }
  func.func @transform_6(%arg0: i32) -> (i32, i32) {
    %c0_i32 = arith.constant 0 : i32
    %c0_i32_0 = arith.constant 0 : i32
    %c0_i32_1 = arith.constant 0 : i32
    return %c0_i32, %c0_i32_0 : i32, i32
  }
  func.func @transform_7(%arg0: i32) -> (i32, i32) {
    %c0_i32 = arith.constant 0 : i32
    %c0_i32_0 = arith.constant 0 : i32
    %c0_i32_1 = arith.constant 0 : i32
    return %c0_i32, %c0_i32_0 : i32, i32
  }
  func.func @transform_8(%arg0: i32) -> (i32, i32) {
    %c0_i32 = arith.constant 0 : i32
    %c0_i32_0 = arith.constant 0 : i32
    %c0_i32_1 = arith.constant 0 : i32
    return %c0_i32, %c0_i32_0 : i32, i32
  }
  func.func @transform_9(%arg0: i32) -> (i32, i32, i32) {
    %c0_i32 = arith.constant 0 : i32
    %c0_i32_0 = arith.constant 0 : i32
    %c0_i32_1 = arith.constant 0 : i32
    %c0_i32_2 = arith.constant 0 : i32
    return %c0_i32, %c0_i32_0, %c0_i32_1 : i32, i32, i32
  }
  func.func @transform_10(%arg0: i32) -> (i32, i32, i32) {
    %c0_i32 = arith.constant 0 : i32
    %c0_i32_0 = arith.constant 0 : i32
    %c0_i32_1 = arith.constant 0 : i32
    %c0_i32_2 = arith.constant 0 : i32
    return %c0_i32, %c0_i32_0, %c0_i32_1 : i32, i32, i32
  }
  func.func @transform_11(%arg0: i32) -> (i32, i32) {
    %c0_i32 = arith.constant 0 : i32
    %c0_i32_0 = arith.constant 0 : i32
    %c0_i32_1 = arith.constant 0 : i32
    return %c0_i32, %c0_i32_0 : i32, i32
  }
  func.func @transform_12(%arg0: i32) -> (i32, i32) {
    %c0_i32 = arith.constant 0 : i32
    %c0_i32_0 = arith.constant 0 : i32
    %c0_i32_1 = arith.constant 0 : i32
    return %c0_i32, %c0_i32_0 : i32, i32
  }
}

</mosaic_0001>

<llo_original>
// kernel: tpu_custom_call.1
$region0: #{tpu_custom_call.1}
  #allocation0 [shape = 'u32[]', space=smem, size = 0x4, offset = 0x4, fixed_abs, tag = 'smem constant byte address 0x4 - core index']
  #allocation1 [shape = 'u32[144,128]{1,0:T(1,128)}', space=vmem, size = 0x12000, scoped, tag = 'internal scratch']
  %s0 = inlined_call_operand.vmem [shape: f32[16,32], index: 0, kind: input, shape index: {}]
  %s1 = inlined_call_operand.vmem [shape: f32[16,8], index: 1, kind: input, shape index: {}]
  %s2 = inlined_call_operand.vmem [shape: f32[16,64], index: 2, kind: input, shape index: {}]
  %s3 = inlined_call_operand.vmem [shape: f32[16,64], index: 3, kind: input, shape index: {}]
  %s4 = inlined_call_operand.vmem [shape: f32[32,464], index: 4, kind: input, shape index: {}]
  %s5 = inlined_call_operand.vmem [shape: f32[8,464], index: 5, kind: input, shape index: {}]
  %s6 = inlined_call_operand.vmem [shape: f32[8,32], index: 6, kind: input, shape index: {}]
  %s7 = inlined_call_operand.vmem [shape: f32[64,32], index: 7, kind: input, shape index: {}]
  %s8 = inlined_call_operand.vmem [shape: f32[64,32], index: 8, kind: input, shape index: {}]
  %s9 = inlined_call_operand.vmem [shape: f32[4,16,2], index: 9, kind: input, shape index: {}]
  %s10 = inlined_call_operand.vmem [shape: f32[4,2,16], index: 10, kind: input, shape index: {}]
  %s11 = inlined_call_operand.vmem [shape: f32[8,8], index: 11, kind: input, shape index: {}]
  %s12 = inlined_call_operand.hbm [shape: f32[16,56], index: 12, kind: output, shape index: {}]
  %s13 = sld [smem:[#allocation0]]
  $region58: #{tpu_custom_call.1} parent=0
    _
  %s15 = ssub.s32 1, %s13
  %s16 = scalar_select 0, %s15, %s13
  $region1: #{tpu_custom_call.1} parent=0
    #allocation2 [shape = 'u8[8192]{0}', space=vmem, size = 0x2000, scoped, tag = 'output window, operand 0, single buffered']
    #allocation3 [shape = 's32[1]{0}', space=sflag, size = 0x4, scoped, tag = 'scoped memory for tpu_custom_call.1']
    %17 = vsyncpa [#allocation3], 0
    // Predicated region
    $region2: #{tpu_custom_call.1} parent=1 // pred_check
      _
    $region3: #{tpu_custom_call.1} parent=1 // pred_check_branch
      %19 = sbr.rel (0) target = $region5
    $region4: #{tpu_custom_call.1} parent=1 // pred_region
      _
    $region5: #{tpu_custom_call.1} parent=1 // pred_fallthru
      _
    // Predicated region
    $region6: #{tpu_custom_call.1} parent=1 // pred_check
      _
    $region7: #{tpu_custom_call.1} parent=1 // pred_check_branch
      %21 = sbr.rel (0) target = $region9
    $region8: #{tpu_custom_call.1} parent=1 // pred_region
      _
    $region9: #{tpu_custom_call.1} parent=1 // pred_fallthru
      _
    // Predicated region
    $region10: #{tpu_custom_call.1} parent=1 // pred_check
      _
    $region11: #{tpu_custom_call.1} parent=1 // pred_check_branch
      %23 = sbr.rel (0) target = $region13
    $region12: #{tpu_custom_call.1} parent=1 // pred_region
      _
    $region13: #{tpu_custom_call.1} parent=1 // pred_fallthru
      _
    // Predicated region
    $region14: #{tpu_custom_call.1} parent=1 // pred_check
      _
    $region15: #{tpu_custom_call.1} parent=1 // pred_check_branch
      %25 = sbr.rel (0) target = $region17
    $region16: #{tpu_custom_call.1} parent=1 // pred_region
      _
    $region17: #{tpu_custom_call.1} parent=1 // pred_fallthru
      _
    // Predicated region
    $region18: #{tpu_custom_call.1} parent=1 // pred_check
      _
    $region19: #{tpu_custom_call.1} parent=1 // pred_check_branch
      %27 = sbr.rel (0) target = $region21
    $region20: #{tpu_custom_call.1} parent=1 // pred_region
      _
    $region21: #{tpu_custom_call.1} parent=1 // pred_fallthru
      _
    // Predicated region
    $region22: #{tpu_custom_call.1} parent=1 // pred_check
      _
    $region23: #{tpu_custom_call.1} parent=1 // pred_check_branch
      %29 = sbr.rel (0) target = $region25
    $region24: #{tpu_custom_call.1} parent=1 // pred_region
      _
    $region25: #{tpu_custom_call.1} parent=1 // pred_fallthru
      _
    // Predicated region
    $region26: #{tpu_custom_call.1} parent=1 // pred_check
      _
    $region27: #{tpu_custom_call.1} parent=1 // pred_check_branch
      %31 = sbr.rel (0) target = $region29
    $region28: #{tpu_custom_call.1} parent=1 // pred_region
      _
    $region29: #{tpu_custom_call.1} parent=1 // pred_fallthru
      _
    // Predicated region
    $region30: #{tpu_custom_call.1} parent=1 // pred_check
      _
    $region31: #{tpu_custom_call.1} parent=1 // pred_check_branch
      %33 = sbr.rel (0) target = $region33
    $region32: #{tpu_custom_call.1} parent=1 // pred_region
      _
    $region33: #{tpu_custom_call.1} parent=1 // pred_fallthru
      _
    // Predicated region
    $region34: #{tpu_custom_call.1} parent=1 // pred_check
      _
    $region35: #{tpu_custom_call.1} parent=1 // pred_check_branch
      %35 = sbr.rel (0) target = $region37
    $region36: #{tpu_custom_call.1} parent=1 // pred_region
      _
    $region37: #{tpu_custom_call.1} parent=1 // pred_fallthru
      _
    // Predicated region
    $region38: #{tpu_custom_call.1} parent=1 // pred_check
      _
    $region39: #{tpu_custom_call.1} parent=1 // pred_check_branch
      %37 = sbr.rel (0) target = $region41
    $region40: #{tpu_custom_call.1} parent=1 // pred_region
      _
    $region41: #{tpu_custom_call.1} parent=1 // pred_fallthru
      _
    // Predicated region
    $region42: #{tpu_custom_call.1} parent=1 // pred_check
      _
    $region43: #{tpu_custom_call.1} parent=1 // pred_check_branch
      %39 = sbr.rel (0) target = $region45
    $region44: #{tpu_custom_call.1} parent=1 // pred_region
      _
    $region45: #{tpu_custom_call.1} parent=1 // pred_fallthru
      _
    // Predicated region
    $region46: #{tpu_custom_call.1} parent=1 // pred_check
      _
    $region47: #{tpu_custom_call.1} parent=1 // pred_check_branch
      %41 = sbr.rel (0) target = $region49
    $region48: #{tpu_custom_call.1} parent=1 // pred_region
      _
    $region49: #{tpu_custom_call.1} parent=1 // pred_fallthru
      _
    %v42 = vld [vmem:[%s0] sm:$0xff]
    %v43 = vld [vmem:[%s0 + $0x8] sm:$0xff]
    %v44 = vld [vmem:[%s1] sm:$0xff]
    %v45 = vld [vmem:[%s1 + $0x8] sm:$0xff]
    %v46 = vld [vmem:[%s2] sm:$0xff]
    %v47 = vld [vmem:[%s2 + $0x8] sm:$0xff]
    %v48 = vld [vmem:[%s3] sm:$0xff]
    %v49 = vld [vmem:[%s3 + $0x8] sm:$0xff]
    %v50 = vld [vmem:[%s4] sm:$0xff]
    %v51 = vld [vmem:[%s4 + $0x8] sm:$0xff]
    %v52 = vld [vmem:[%s4 + $0x10] sm:$0xff]
    %v53 = vld [vmem:[%s4 + $0x18] sm:$0xff]
    %v54 = vld [vmem:[%s4 + $0x20] sm:$0xff]
    %v55 = vld [vmem:[%s4 + $0x28] sm:$0xff]
    %v56 = vld [vmem:[%s4 + $0x30] sm:$0xff]
    %v57 = vld [vmem:[%s4 + $0x38] sm:$0xff]
    %v58 = vld [vmem:[%s4 + $0x40] sm:$0xff]
    %v59 = vld [vmem:[%s4 + $0x48] sm:$0xff]
    %v60 = vld [vmem:[%s4 + $0x50] sm:$0xff]
    %v61 = vld [vmem:[%s4 + $0x58] sm:$0xff]
    %v62 = vld [vmem:[%s4 + $0x60] sm:$0xff]
    %v63 = vld [vmem:[%s4 + $0x68] sm:$0xff]
    %v64 = vld [vmem:[%s4 + $0x70] sm:$0xff]
    %v65 = vld [vmem:[%s4 + $0x78] sm:$0xff]
    %vm66 = vcmask 261120
    %v68 = vsel %vm66, %v42, 0
    %v71 = vsel %vm66, %v43, 0
    %73 = vmatprep.subr.mxu0 0.0
    %74 = vmatpush1.msra.mxu0 0.0
    %75 = vmatprep.subr.mxu0 0.0
    %76 = vmatpush1.msra.mxu0 0.0
    %77 = vmatprep.subr.mxu0 0.0
    %78 = vmatpush1.msra.mxu0 0.0
    %79 = vmatprep.subr.mxu0 0.0
    %80 = vmatpush1.msra.mxu0 0.0
    %81 = vmatprep.subr.mxu0 0.0
    %82 = vmatpush1.msra.mxu0 0.0
    %83 = vmatprep.subr.mxu0 0.0
    %84 = vmatpush1.msra.mxu0 0.0
    %85 = vmatprep.subr.mxu0 0.0
    %86 = vmatpush1.msra.mxu0 0.0
    %87 = vmatprep.subr.mxu0 0.0
    %88 = vmatpush1.msra.mxu0 0.0
    %89 = vmatprep.subr.mxu0 0.0
    %90 = vmatpush1.msra.mxu0 0.0
    %91 = vmatprep.subr.mxu0 0.0
    %92 = vmatpush1.msra.mxu0 0.0
    %93 = vmatprep.subr.mxu0 0.0
    %94 = vmatpush1.msra.mxu0 0.0
    %95 = vmatprep.subr.mxu0 0.0
    %96 = vmatpush1.msra.mxu0 0.0
    %97 = vmatprep.subr.mxu0 %v63
    %98 = vmatpush1.msra.mxu0 %v62
    %99 = vmatprep.subr.mxu0 %v59
    %100 = vmatpush1.msra.mxu0 %v58
    %101 = vmatprep.subr.mxu0 %v55
    %102 = vmatpush1.msra.mxu0 %v54
    %103 = vmatprep.subr.mxu0 %v51
    %104 = vmatpush1.msra.mxu0 %v50
    %105 = vmatprep.subr.mxu0 0.0
    %106 = vmatpush2.msra.mxu0 0.0
    %107 = vmatprep.subr.mxu0 0.0
    %108 = vmatpush2.msra.mxu0 0.0
    %109 = vmatprep.subr.mxu0 0.0
    %110 = vmatpush2.msra.mxu0 0.0
    %111 = vmatprep.subr.mxu0 0.0
    %112 = vmatpush2.msra.mxu0 0.0
    %113 = vmatprep.subr.mxu0 0.0
    %114 = vmatpush2.msra.mxu0 0.0
    %115 = vmatprep.subr.mxu0 0.0
    %116 = vmatpush2.msra.mxu0 0.0
    %117 = vmatprep.subr.mxu0 0.0
    %118 = vmatpush2.msra.mxu0 0.0
    %119 = vmatprep.subr.mxu0 0.0
    %120 = vmatpush2.msra.mxu0 0.0
    %121 = vmatprep.subr.mxu0 0.0
    %122 = vmatpush2.msra.mxu0 0.0
    %123 = vmatprep.subr.mxu0 0.0
    %124 = vmatpush2.msra.mxu0 0.0
    %125 = vmatprep.subr.mxu0 0.0
    %126 = vmatpush2.msra.mxu0 0.0
    %127 = vmatprep.subr.mxu0 0.0
    %128 = vmatpush2.msra.mxu0 0.0
    %129 = vmatprep.subr.mxu0 0.0
    %130 = vmatpush2.msra.mxu0 0.0
    %131 = vmatprep.subr.mxu0 0.0
    %132 = vmatpush2.msra.mxu0 0.0
    %133 = vmatprep.subr.mxu0 0.0
    %134 = vmatpush2.msra.mxu0 0.0
    %135 = vmatprep.subr.mxu0 0.0
    %136 = vmatpush2.msra.mxu0 0.0
    %137 = vmatprep.mubr.f32.mxu0 0.0
    %138 = vmatmul.mubr.f32.gmra.mxu0 %v68
    %v139 = vpop.f32.mrf.mxu0
    %v140 = vadd.f32 0.0, %v139
    %v141 = vpop.f32.mrf.mxu0
    %v142 = vadd.f32 0.0, %v141
    %143 = vmatprep.mubr.f32.mxu0 0.0
    %144 = vmatmul.mubr.f32.gmra.mxu0 %v71
    %v145 = vpop.f32.mrf.mxu0
    %v146 = vadd.f32 0.0, %v145
    %v147 = vpop.f32.mrf.mxu0
    %v148 = vadd.f32 0.0, %v147
    %149 = vdwg.mxu0
    %150 = vmatprep.subr.mxu0 0.0
    %151 = vmatpush1.msra.mxu0 0.0
    %152 = vmatprep.subr.mxu0 0.0
    %153 = vmatpush1.msra.mxu0 0.0
    %154 = vmatprep.subr.mxu0 0.0
    %155 = vmatpush1.msra.mxu0 0.0
    %156 = vmatprep.subr.mxu0 0.0
    %157 = vmatpush1.msra.mxu0 0.0
    %158 = vmatprep.subr.mxu0 0.0
    %159 = vmatpush1.msra.mxu0 0.0
    %160 = vmatprep.subr.mxu0 0.0
    %161 = vmatpush1.msra.mxu0 0.0
    %162 = vmatprep.subr.mxu0 0.0
    %163 = vmatpush1.msra.mxu0 0.0
    %164 = vmatprep.subr.mxu0 0.0
    %165 = vmatpush1.msra.mxu0 0.0
    %166 = vmatprep.subr.mxu0 0.0
    %167 = vmatpush1.msra.mxu0 0.0
    %168 = vmatprep.subr.mxu0 0.0
    %169 = vmatpush1.msra.mxu0 0.0
    %170 = vmatprep.subr.mxu0 0.0
    %171 = vmatpush1.msra.mxu0 0.0
    %172 = vmatprep.subr.mxu0 0.0
    %173 = vmatpush1.msra.mxu0 0.0
    %174 = vmatprep.subr.mxu0 %v65
    %175 = vmatpush1.msra.mxu0 %v64
    %176 = vmatprep.subr.mxu0 %v61
    %177 = vmatpush1.msra.mxu0 %v60
    %178 = vmatprep.subr.mxu0 %v57
    %179 = vmatpush1.msra.mxu0 %v56
    %180 = vmatprep.subr.mxu0 %v53
    %181 = vmatpush1.msra.mxu0 %v52
    %182 = vmatprep.subr.mxu0 0.0
    %183 = vmatpush2.msra.mxu0 0.0
    %184 = vmatprep.subr.mxu0 0.0
    %185 = vmatpush2.msra.mxu0 0.0
    %186 = vmatprep.subr.mxu0 0.0
    %187 = vmatpush2.msra.mxu0 0.0
    %188 = vmatprep.subr.mxu0 0.0
    %189 = vmatpush2.msra.mxu0 0.0
    %190 = vmatprep.subr.mxu0 0.0
    %191 = vmatpush2.msra.mxu0 0.0
    %192 = vmatprep.subr.mxu0 0.0
    %193 = vmatpush2.msra.mxu0 0.0
    %194 = vmatprep.subr.mxu0 0.0
    %195 = vmatpush2.msra.mxu0 0.0
    %196 = vmatprep.subr.mxu0 0.0
    %197 = vmatpush2.msra.mxu0 0.0
    %198 = vmatprep.subr.mxu0 0.0
    %199 = vmatpush2.msra.mxu0 0.0
    %200 = vmatprep.subr.mxu0 0.0
    %201 = vmatpush2.msra.mxu0 0.0
    %202 = vmatprep.subr.mxu0 0.0
    %203 = vmatpush2.msra.mxu0 0.0
    %204 = vmatprep.subr.mxu0 0.0
    %205 = vmatpush2.msra.mxu0 0.0
    %206 = vmatprep.subr.mxu0 0.0
    %207 = vmatpush2.msra.mxu0 0.0
    %208 = vmatprep.subr.mxu0 0.0
    %209 = vmatpush2.msra.mxu0 0.0
    %210 = vmatprep.subr.mxu0 0.0
    %211 = vmatpush2.msra.mxu0 0.0
    %212 = vmatprep.subr.mxu0 0.0
    %213 = vmatpush2.msra.mxu0 0.0
    %214 = vmatprep.mubr.f32.mxu0 0.0
    %215 = vmatmul.mubr.f32.gmra.mxu0 %v68
    %v216 = vpop.f32.mrf.mxu0
    %v217 = vadd.f32 0.0, %v216
    %v218 = vpop.f32.mrf.mxu0
    %v219 = vadd.f32 0.0, %v218
    %220 = vmatprep.mubr.f32.mxu0 0.0
    %221 = vmatmul.mubr.f32.gmra.mxu0 %v71
    %v222 = vpop.f32.mrf.mxu0
    %v223 = vadd.f32 0.0, %v222
    %v224 = vpop.f32.mrf.mxu0
    %v225 = vadd.f32 0.0, %v224
    %226 = vdwg.mxu0
    %v227 = vadd.f32 %v219, 0.54132485
    %v228 = vadd.f32 %v225, 0.54132485
    %vm229 = vcmp.gt.f32.partialorder %v227, 20.0
    %vm230 = vcmp.gt.f32.partialorder %v228, 20.0
    %v231 = vmin.f32 %v227, 20.0
    %v232 = vmin.f32 %v228, 20.0
    %v233 = vmul.f32 %v231, 1.442695
    %v234 = vpow.pop %v233
    %v235 = vmul.f32 %v232, 1.442695
    %v236 = vpow.pop %v235
    %v237 = vadd.f32 %v234, 1.0
    %v238 = vadd.f32 %v236, 1.0
    %v239 = vlog2.pop %v237
    %v240 = vmul.f32 %v239, 0.6931472
    %v241 = vlog2.pop %v238
    %v242 = vmul.f32 %v241, 0.6931472
    %v243 = vsel %vm229, %v227, %v240
    %v244 = vsel %vm230, %v228, %v242
    %247 = vrot.lane.b32.xlu0 %v44, 72
    %v248 = vpop.permute.xlu0 %247
    %249 = vrot.lane.b32.xlu0 %v45, 72
    %v250 = vpop.permute.xlu0 %249
    %v253 = vmul.f32 %v243, %v248
    %v254 = vmul.f32 %v244, %v250
    %257 = vrot.lane.b32.xlu0 %v253, 120
    %v258 = vpop.permute.xlu0 %257
    %259 = vrot.lane.b32.xlu0 %v254, 120
    %v260 = vpop.permute.xlu0 %259
    %v263 = vadd.f32 %v219, %v258
    %v264 = vadd.f32 %v225, %v260
    %v265 = vld [vmem:[%s5] sm:$0xff]
    %v266 = vld [vmem:[%s5 + $0x8] sm:$0xff]
    %v267 = vld [vmem:[%s5 + $0x10] sm:$0xff]
    %v268 = vld [vmem:[%s5 + $0x18] sm:$0xff]
    %271 = vrot.lane.b32.xlu0 %v263, 64
    %v272 = vpop.permute.xlu0 %271
    %273 = vrot.lane.b32.xlu0 %v264, 64
    %v274 = vpop.permute.xlu0 %273
    %vm275 = vcmask 64512
    %v276 = vsel %vm275, %v272, 0
    %v278 = vsel %vm275, %v274, 0
    %280 = vmatprep.subr.mxu0 0.0
    %281 = vmatpush1.msra.mxu0 0.0
    %282 = vmatprep.subr.mxu0 0.0
    %283 = vmatpush1.msra.mxu0 0.0
    %284 = vmatprep.subr.mxu0 0.0
    %285 = vmatpush1.msra.mxu0 0.0
    %286 = vmatprep.subr.mxu0 0.0
    %287 = vmatpush1.msra.mxu0 0.0
    %288 = vmatprep.subr.mxu0 0.0
    %289 = vmatpush1.msra.mxu0 0.0
    %290 = vmatprep.subr.mxu0 0.0
    %291 = vmatpush1.msra.mxu0 0.0
    %292 = vmatprep.subr.mxu0 0.0
    %293 = vmatpush1.msra.mxu0 0.0
    %294 = vmatprep.subr.mxu0 0.0
    %295 = vmatpush1.msra.mxu0 0.0
    %296 = vmatprep.subr.mxu0 0.0
    %297 = vmatpush1.msra.mxu0 0.0
    %298 = vmatprep.subr.mxu0 0.0
    %299 = vmatpush1.msra.mxu0 0.0
    %300 = vmatprep.subr.mxu0 0.0
    %301 = vmatpush1.msra.mxu0 0.0
    %302 = vmatprep.subr.mxu0 0.0
    %303 = vmatpush1.msra.mxu0 0.0
    %304 = vmatprep.subr.mxu0 0.0
    %305 = vmatpush1.msra.mxu0 0.0
    %306 = vmatprep.subr.mxu0 0.0
    %307 = vmatpush1.msra.mxu0 0.0
    %308 = vmatprep.subr.mxu0 0.0
    %309 = vmatpush1.msra.mxu0 0.0
    %310 = vmatprep.subr.mxu0 %v266
    %311 = vmatpush1.msra.mxu0 %v265
    %312 = vmatprep.subr.mxu0 0.0
    %313 = vmatpush2.msra.mxu0 0.0
    %314 = vmatprep.subr.mxu0 0.0
    %315 = vmatpush2.msra.mxu0 0.0
    %316 = vmatprep.subr.mxu0 0.0
    %317 = vmatpush2.msra.mxu0 0.0
    %318 = vmatprep.subr.mxu0 0.0
    %319 = vmatpush2.msra.mxu0 0.0
    %320 = vmatprep.subr.mxu0 0.0
    %321 = vmatpush2.msra.mxu0 0.0
    %322 = vmatprep.subr.mxu0 0.0
    %323 = vmatpush2.msra.mxu0 0.0
    %324 = vmatprep.subr.mxu0 0.0
    %325 = vmatpush2.msra.mxu0 0.0
    %326 = vmatprep.subr.mxu0 0.0
    %327 = vmatpush2.msra.mxu0 0.0
    %328 = vmatprep.subr.mxu0 0.0
    %329 = vmatpush2.msra.mxu0 0.0
    %330 = vmatprep.subr.mxu0 0.0
    %331 = vmatpush2.msra.mxu0 0.0
    %332 = vmatprep.subr.mxu0 0.0
    %333 = vmatpush2.msra.mxu0 0.0
    %334 = vmatprep.subr.mxu0 0.0
    %335 = vmatpush2.msra.mxu0 0.0
    %336 = vmatprep.subr.mxu0 0.0
    %337 = vmatpush2.msra.mxu0 0.0
    %338 = vmatprep.subr.mxu0 0.0
    %339 = vmatpush2.msra.mxu0 0.0
    %340 = vmatprep.subr.mxu0 0.0
    %341 = vmatpush2.msra.mxu0 0.0
    %342 = vmatprep.subr.mxu0 0.0
    %343 = vmatpush2.msra.mxu0 0.0
    %344 = vmatprep.mubr.f32.mxu0 0.0
    %345 = vmatmul.mubr.f32.gmra.mxu0 %v276
    %v346 = vpop.f32.mrf.mxu0
    %v347 = vadd.f32 0.0, %v346
    %v348 = vpop.f32.mrf.mxu0
    %v349 = vadd.f32 0.0, %v348
    %350 = vmatprep.mubr.f32.mxu0 0.0
    %351 = vmatmul.mubr.f32.gmra.mxu0 %v278
    %v352 = vpop.f32.mrf.mxu0
    %v353 = vadd.f32 0.0, %v352
    %v354 = vpop.f32.mrf.mxu0
    %v355 = vadd.f32 0.0, %v354
    %356 = vdwg.mxu0
    %357 = vmatprep.subr.mxu0 0.0
    %358 = vmatpush1.msra.mxu0 0.0
    %359 = vmatprep.subr.mxu0 0.0
    %360 = vmatpush1.msra.mxu0 0.0
    %361 = vmatprep.subr.mxu0 0.0
    %362 = vmatpush1.msra.mxu0 0.0
    %363 = vmatprep.subr.mxu0 0.0
    %364 = vmatpush1.msra.mxu0 0.0
    %365 = vmatprep.subr.mxu0 0.0
    %366 = vmatpush1.msra.mxu0 0.0
    %367 = vmatprep.subr.mxu0 0.0
    %368 = vmatpush1.msra.mxu0 0.0
    %369 = vmatprep.subr.mxu0 0.0
    %370 = vmatpush1.msra.mxu0 0.0
    %371 = vmatprep.subr.mxu0 0.0
    %372 = vmatpush1.msra.mxu0 0.0
    %373 = vmatprep.subr.mxu0 0.0
    %374 = vmatpush1.msra.mxu0 0.0
    %375 = vmatprep.subr.mxu0 0.0
    %376 = vmatpush1.msra.mxu0 0.0
    %377 = vmatprep.subr.mxu0 0.0
    %378 = vmatpush1.msra.mxu0 0.0
    %379 = vmatprep.subr.mxu0 0.0
    %380 = vmatpush1.msra.mxu0 0.0
    %381 = vmatprep.subr.mxu0 0.0
    %382 = vmatpush1.msra.mxu0 0.0
    %383 = vmatprep.subr.mxu0 0.0
    %384 = vmatpush1.msra.mxu0 0.0
    %385 = vmatprep.subr.mxu0 0.0
    %386 = vmatpush1.msra.mxu0 0.0
    %387 = vmatprep.subr.mxu0 %v268
    %388 = vmatpush1.msra.mxu0 %v267
    %389 = vmatprep.subr.mxu0 0.0
    %390 = vmatpush2.msra.mxu0 0.0
    %391 = vmatprep.subr.mxu0 0.0
    %392 = vmatpush2.msra.mxu0 0.0
    %393 = vmatprep.subr.mxu0 0.0
    %394 = vmatpush2.msra.mxu0 0.0
    %395 = vmatprep.subr.mxu0 0.0
    %396 = vmatpush2.msra.mxu0 0.0
    %397 = vmatprep.subr.mxu0 0.0
    %398 = vmatpush2.msra.mxu0 0.0
    %399 = vmatprep.subr.mxu0 0.0
    %400 = vmatpush2.msra.mxu0 0.0
    %401 = vmatprep.subr.mxu0 0.0
    %402 = vmatpush2.msra.mxu0 0.0
    %403 = vmatprep.subr.mxu0 0.0
    %404 = vmatpush2.msra.mxu0 0.0
    %405 = vmatprep.subr.mxu0 0.0
    %406 = vmatpush2.msra.mxu0 0.0
    %407 = vmatprep.subr.mxu0 0.0
    %408 = vmatpush2.msra.mxu0 0.0
    %409 = vmatprep.subr.mxu0 0.0
    %410 = vmatpush2.msra.mxu0 0.0
    %411 = vmatprep.subr.mxu0 0.0
    %412 = vmatpush2.msra.mxu0 0.0
    %413 = vmatprep.subr.mxu0 0.0
    %414 = vmatpush2.msra.mxu0 0.0
    %415 = vmatprep.subr.mxu0 0.0
    %416 = vmatpush2.msra.mxu0 0.0
    %417 = vmatprep.subr.mxu0 0.0
    %418 = vmatpush2.msra.mxu0 0.0
    %419 = vmatprep.subr.mxu0 0.0
    %420 = vmatpush2.msra.mxu0 0.0
    %421 = vmatprep.mubr.f32.mxu0 0.0
    %422 = vmatmul.mubr.f32.gmra.mxu0 %v276
    %v423 = vpop.f32.mrf.mxu0
    %v424 = vadd.f32 0.0, %v423
    %v425 = vpop.f32.mrf.mxu0
    %v426 = vadd.f32 0.0, %v425
    %427 = vmatprep.mubr.f32.mxu0 0.0
    %428 = vmatmul.mubr.f32.gmra.mxu0 %v278
    %v429 = vpop.f32.mrf.mxu0
    %v430 = vadd.f32 0.0, %v429
    %v431 = vpop.f32.mrf.mxu0
    %v432 = vadd.f32 0.0, %v431
    %433 = vdwg.mxu0
    %v434 = vadd.f32 %v140, %v347
    %v435 = vadd.f32 %v142, %v349
    %v436 = vadd.f32 %v217, %v424
    %v437 = vadd.f32 %v219, %v426
    %v438 = vadd.f32 %v146, %v353
    %v439 = vadd.f32 %v148, %v355
    %v440 = vadd.f32 %v223, %v430
    %v441 = vadd.f32 %v225, %v432
    %v442 = vmul.f32 %v434, %v46
    %v443 = vmul.f32 %v438, %v47
    %446 = vrot.lane.b32.xlu0 %v48, 64
    %v447 = vpop.permute.xlu0 %446
    %448 = vrot.lane.b32.xlu0 %v49, 64
    %v449 = vpop.permute.xlu0 %448
    %v452 = vmul.f32 %v434, %v447
    %v453 = vmul.f32 %v438, %v449
    %456 = vrot.lane.b32.xlu0 %v452, 64
    %v457 = vpop.permute.xlu0 %456
    %458 = vrot.lane.b32.xlu0 %v453, 64
    %v459 = vpop.permute.xlu0 %458
    %v462 = vadd.f32 %v442, %v457
    %v463 = vadd.f32 %v443, %v459
    %v464 = vmul.f32 %v435, %v46
    %v465 = vmul.f32 %v439, %v47
    %v466 = vmul.f32 %v435, %v447
    %v467 = vmul.f32 %v439, %v449
    %470 = vrot.lane.b32.xlu0 %v466, 64
    %v471 = vpop.permute.xlu0 %470
    %472 = vrot.lane.b32.xlu0 %v467, 64
    %v473 = vpop.permute.xlu0 %472
    %v476 = vadd.f32 %v464, %v471
    %v477 = vadd.f32 %v465, %v473
    %v478 = vsub.f32 0.0, %v436
    %v479 = vsub.f32 0.0, %v440
    %v480 = vmul.f32 %v478, 1.442695
    %v481 = vpow.pop %v480
    %v482 = vmul.f32 %v479, 1.442695
    %v483 = vpow.pop %v482
    %v484 = vadd.f32 %v481, 1.0
    %v485 = vadd.f32 %v483, 1.0
    %v486 = vrcp.pop %v484
    %v487 = vmul.f32 1.0, %v486
    %v488 = vrcp.pop %v485
    %v489 = vmul.f32 1.0, %v488
    %v490 = vmul.f32 %v436, %v487
    %v491 = vmul.f32 %v440, %v489
    %494 = vrot.lane.b32.xlu0 %v437, 64
    %v495 = vpop.permute.xlu0 %494
    %496 = vrot.lane.b32.xlu0 %v441, 64
    %v497 = vpop.permute.xlu0 %496
    %v500 = vmul.f32 %v490, %v495
    %v501 = vmul.f32 %v491, %v497
    %v502 = vld [vmem:[%s9] sm:$0xff]
    %v503 = vld [vmem:[%s9 + $0x8] sm:$0xff]
    %v504 = vld [vmem:[%s9 + $0x10] sm:$0xff]
    %v505 = vld [vmem:[%s9 + $0x18] sm:$0xff]
    %v506 = vld [vmem:[%s9 + $0x20] sm:$0xff]
    %v507 = vld [vmem:[%s9 + $0x28] sm:$0xff]
    %v508 = vld [vmem:[%s9 + $0x30] sm:$0xff]
    %v509 = vld [vmem:[%s9 + $0x38] sm:$0xff]
    %v510 = vld [vmem:[%s10] sm:$0x3]
    %v511 = vld [vmem:[%s10 + $0x2] sm:$0x3]
    %v512 = vld [vmem:[%s10 + $0x4] sm:$0x3]
    %v513 = vld [vmem:[%s10 + $0x6] sm:$0x3]
    %v514 = vld [vmem:[%s11] sm:$0xff]
    %vm515 = vcmask 130048
    %v517 = vsel %vm515, %v462, 0
    %v520 = vsel %vm515, %v476, 0
    %522 = vmatprep.subr.mxu0 0.0
    %523 = vmatpush1.xpose.msra.mxu0 0.0
    %524 = vmatprep.subr.mxu0 0.0
    %525 = vmatpush1.xpose.msra.mxu0 0.0
    %526 = vmatprep.subr.mxu0 0.0
    %527 = vmatpush1.xpose.msra.mxu0 0.0
    %528 = vmatprep.subr.mxu0 0.0
    %529 = vmatpush1.xpose.msra.mxu0 0.0
    %530 = vmatprep.subr.mxu0 0.0
    %531 = vmatpush1.xpose.msra.mxu0 0.0
    %532 = vmatprep.subr.mxu0 0.0
    %533 = vmatpush1.xpose.msra.mxu0 0.0
    %534 = vmatprep.subr.mxu0 0.0
    %535 = vmatpush1.xpose.msra.mxu0 0.0
    %536 = vmatprep.subr.mxu0 0.0
    %537 = vmatpush1.xpose.msra.mxu0 0.0
    %538 = vmatprep.subr.mxu0 0.0
    %539 = vmatpush1.xpose.msra.mxu0 0.0
    %540 = vmatprep.subr.mxu0 0.0
    %541 = vmatpush1.xpose.msra.mxu0 0.0
    %542 = vmatprep.subr.mxu0 0.0
    %543 = vmatpush1.xpose.msra.mxu0 0.0
    %544 = vmatprep.subr.mxu0 0.0
    %545 = vmatpush1.xpose.msra.mxu0 0.0
    %546 = vmatprep.subr.mxu0 0.0
    %547 = vmatpush1.xpose.msra.mxu0 0.0
    %548 = vmatprep.subr.mxu0 0.0
    %549 = vmatpush1.xpose.msra.mxu0 0.0
    %550 = vmatprep.subr.mxu0 0.0
    %551 = vmatpush1.xpose.msra.mxu0 0.0
    %552 = vmatprep.subr.mxu0 0.0
    %553 = vmatpush1.xpose.msra.mxu0 %v520
    %554 = vmatprep.subr.mxu0 0.0
    %555 = vmatpush2.xpose.msra.mxu0 0.0
    %556 = vmatprep.subr.mxu0 0.0
    %557 = vmatpush2.xpose.msra.mxu0 0.0
    %558 = vmatprep.subr.mxu0 0.0
    %559 = vmatpush2.xpose.msra.mxu0 0.0
    %560 = vmatprep.subr.mxu0 0.0
    %561 = vmatpush2.xpose.msra.mxu0 0.0
    %562 = vmatprep.subr.mxu0 0.0
    %563 = vmatpush2.xpose.msra.mxu0 0.0
    %564 = vmatprep.subr.mxu0 0.0
    %565 = vmatpush2.xpose.msra.mxu0 0.0
    %566 = vmatprep.subr.mxu0 0.0
    %567 = vmatpush2.xpose.msra.mxu0 0.0
    %568 = vmatprep.subr.mxu0 0.0
    %569 = vmatpush2.xpose.msra.mxu0 0.0
    %570 = vmatprep.subr.mxu0 0.0
    %571 = vmatpush2.xpose.msra.mxu0 0.0
    %572 = vmatprep.subr.mxu0 0.0
    %573 = vmatpush2.xpose.msra.mxu0 0.0
    %574 = vmatprep.subr.mxu0 0.0
    %575 = vmatpush2.xpose.msra.mxu0 0.0
    %576 = vmatprep.subr.mxu0 0.0
    %577 = vmatpush2.xpose.msra.mxu0 0.0
    %578 = vmatprep.subr.mxu0 0.0
    %579 = vmatpush2.xpose.msra.mxu0 0.0
    %580 = vmatprep.subr.mxu0 0.0
    %581 = vmatpush2.xpose.msra.mxu0 0.0
    %582 = vmatprep.subr.mxu0 0.0
    %583 = vmatpush2.xpose.msra.mxu0 0.0
    %584 = vmatprep.subr.mxu0 0.0
    %585 = vmatpush2.xpose.msra.mxu0 0.0
    %586 = vmatprep.mubr.f32.mxu0 0.0
    %587 = vmatmul.mubr.f32.gmra.mxu0 %v517
    %v588 = vpop.f32.mrf.mxu0
    %v589 = vadd.f32 %v514, %v588
    %v590 = vpop.f32.mrf.mxu0
    %591 = vdwg.mxu0
    %592 = vmatprep.subr.mxu0 0.0
    %593 = vmatpush1.msra.mxu0 0.0
    %594 = vmatprep.subr.mxu0 0.0
    %595 = vmatpush1.msra.mxu0 0.0
    %596 = vmatprep.subr.mxu0 0.0
    %597 = vmatpush1.msra.mxu0 0.0
    %598 = vmatprep.subr.mxu0 0.0
    %599 = vmatpush1.msra.mxu0 0.0
    %600 = vmatprep.subr.mxu0 0.0
    %601 = vmatpush1.msra.mxu0 0.0
    %602 = vmatprep.subr.mxu0 0.0
    %603 = vmatpush1.msra.mxu0 0.0
    %604 = vmatprep.subr.mxu0 0.0
    %605 = vmatpush1.msra.mxu0 0.0
    %606 = vmatprep.subr.mxu0 0.0
    %607 = vmatpush1.msra.mxu0 0.0
    %608 = vmatprep.subr.mxu0 0.0
    %609 = vmatpush1.msra.mxu0 0.0
    %610 = vmatprep.subr.mxu0 0.0
    %611 = vmatpush1.msra.mxu0 0.0
    %612 = vmatprep.subr.mxu0 0.0
    %613 = vmatpush1.msra.mxu0 0.0
    %614 = vmatprep.subr.mxu0 0.0
    %615 = vmatpush1.msra.mxu0 0.0
    %616 = vmatprep.subr.mxu0 0.0
    %617 = vmatpush1.msra.mxu0 0.0
    %618 = vmatprep.subr.mxu0 0.0
    %619 = vmatpush1.msra.mxu0 0.0
    %620 = vmatprep.subr.mxu0 0.0
    %621 = vmatpush1.msra.mxu0 %v503
    %622 = vmatprep.subr.mxu0 0.0
    %623 = vmatpush1.msra.mxu0 %v502
    %624 = vmatprep.subr.mxu0 0.0
    %625 = vmatpush2.msra.mxu0 0.0
    %626 = vmatprep.subr.mxu0 0.0
    %627 = vmatpush2.msra.mxu0 0.0
    %628 = vmatprep.subr.mxu0 0.0
    %629 = vmatpush2.msra.mxu0 0.0
    %630 = vmatprep.subr.mxu0 0.0
    %631 = vmatpush2.msra.mxu0 0.0
    %632 = vmatprep.subr.mxu0 0.0
    %633 = vmatpush2.msra.mxu0 0.0
    %634 = vmatprep.subr.mxu0 0.0
    %635 = vmatpush2.msra.mxu0 0.0
    %636 = vmatprep.subr.mxu0 0.0
    %637 = vmatpush2.msra.mxu0 0.0
    %638 = vmatprep.subr.mxu0 0.0
    %639 = vmatpush2.msra.mxu0 0.0
    %640 = vmatprep.subr.mxu0 0.0
    %641 = vmatpush2.msra.mxu0 0.0
    %642 = vmatprep.subr.mxu0 0.0
    %643 = vmatpush2.msra.mxu0 0.0
    %644 = vmatprep.subr.mxu0 0.0
    %645 = vmatpush2.msra.mxu0 0.0
    %646 = vmatprep.subr.mxu0 0.0
    %647 = vmatpush2.msra.mxu0 0.0
    %648 = vmatprep.subr.mxu0 0.0
    %649 = vmatpush2.msra.mxu0 0.0
    %650 = vmatprep.subr.mxu0 0.0
    %651 = vmatpush2.msra.mxu0 0.0
    %652 = vmatprep.subr.mxu0 0.0
    %653 = vmatpush2.msra.mxu0 0.0
    %654 = vmatprep.subr.mxu0 0.0
    %655 = vmatpush2.msra.mxu0 0.0
    %656 = vmatprep.mubr.f32.mxu0 0.0
    %657 = vmatmul.mubr.f32.gmra.mxu0 %v517
    %v658 = vpop.f32.mrf.mxu0
    %v659 = vadd.f32 0.0, %v658
    %v660 = vpop.f32.mrf.mxu0
    %661 = vdwg.mxu0
    %v662 = vsel %vm275, %v589, -inf
    %663 = vmax.xlane.f32.xlu0 %v662
    %v664 = vpop.xlane.xlu0 %663
    %vm665 = vcmask 15360
    %v666 = vsel %vm665, %v659, -inf
    %667 = vmax.xlane.f32.xlu0 %v666
    %v668 = vpop.xlane.xlu0 %667
    %v669 = vmax.f32 %v664, %v668
    %v670 = vsub.f32 %v589, %v669
    %v671 = vmul.f32 %v670, 1.442695
    %v672 = vpow.pop %v671
    %v673 = vsub.f32 %v659, %v669
    %v674 = vmul.f32 %v673, 1.442695
    %v675 = vpow.pop %v674
    %v676 = vsel %vm275, %v672, 0.0
    %677 = vadd.xlane.f32.xlu0 %v676
    %v678 = vpop.xlane.xlu0 %677
    %v679 = vsel %vm665, %v675, 0.0
    %680 = vadd.xlane.f32.xlu0 %v679
    %v681 = vpop.xlane.xlu0 %680
    %v682 = vadd.f32 %v678, %v681
    %v683 = vrcp.pop %v682
    %v685 = vsel %vm665, %v675, 0
    %vm687 = vcmask 1041408
    %v689 = vsel %vm687, %v510, 0
    %691 = vmatprep.subr.mxu0 0.0
    %692 = vmatpush1.msra.mxu0 0.0
    %693 = vmatprep.subr.mxu0 0.0
    %694 = vmatpush1.msra.mxu0 0.0
    %695 = vmatprep.subr.mxu0 0.0
    %696 = vmatpush1.msra.mxu0 0.0
    %697 = vmatprep.subr.mxu0 0.0
    %698 = vmatpush1.msra.mxu0 0.0
    %699 = vmatprep.subr.mxu0 0.0
    %700 = vmatpush1.msra.mxu0 0.0
    %701 = vmatprep.subr.mxu0 0.0
    %702 = vmatpush1.msra.mxu0 0.0
    %703 = vmatprep.subr.mxu0 0.0
    %704 = vmatpush1.msra.mxu0 0.0
    %705 = vmatprep.subr.mxu0 0.0
    %706 = vmatpush1.msra.mxu0 0.0
    %707 = vmatprep.subr.mxu0 0.0
    %708 = vmatpush1.msra.mxu0 0.0
    %709 = vmatprep.subr.mxu0 0.0
    %710 = vmatpush1.msra.mxu0 0.0
    %711 = vmatprep.subr.mxu0 0.0
    %712 = vmatpush1.msra.mxu0 0.0
    %713 = vmatprep.subr.mxu0 0.0
    %714 = vmatpush1.msra.mxu0 0.0
    %715 = vmatprep.subr.mxu0 0.0
    %716 = vmatpush1.msra.mxu0 0.0
    %717 = vmatprep.subr.mxu0 0.0
    %718 = vmatpush1.msra.mxu0 0.0
    %719 = vmatprep.subr.mxu0 0.0
    %720 = vmatpush1.msra.mxu0 0.0
    %721 = vmatprep.subr.mxu0 0.0
    %722 = vmatpush1.msra.mxu0 %v689
    %723 = vmatprep.subr.mxu0 0.0
    %724 = vmatpush2.msra.mxu0 0.0
    %725 = vmatprep.subr.mxu0 0.0
    %726 = vmatpush2.msra.mxu0 0.0
    %727 = vmatprep.subr.mxu0 0.0
    %728 = vmatpush2.msra.mxu0 0.0
    %729 = vmatprep.subr.mxu0 0.0
    %730 = vmatpush2.msra.mxu0 0.0
    %731 = vmatprep.subr.mxu0 0.0
    %732 = vmatpush2.msra.mxu0 0.0
    %733 = vmatprep.subr.mxu0 0.0
    %734 = vmatpush2.msra.mxu0 0.0
    %735 = vmatprep.subr.mxu0 0.0
    %736 = vmatpush2.msra.mxu0 0.0
    %737 = vmatprep.subr.mxu0 0.0
    %738 = vmatpush2.msra.mxu0 0.0
    %739 = vmatprep.subr.mxu0 0.0
    %740 = vmatpush2.msra.mxu0 0.0
    %741 = vmatprep.subr.mxu0 0.0
    %742 = vmatpush2.msra.mxu0 0.0
    %743 = vmatprep.subr.mxu0 0.0
    %744 = vmatpush2.msra.mxu0 0.0
    %745 = vmatprep.subr.mxu0 0.0
    %746 = vmatpush2.msra.mxu0 0.0
    %747 = vmatprep.subr.mxu0 0.0
    %748 = vmatpush2.msra.mxu0 0.0
    %749 = vmatprep.subr.mxu0 0.0
    %750 = vmatpush2.msra.mxu0 0.0
    %751 = vmatprep.subr.mxu0 0.0
    %752 = vmatpush2.msra.mxu0 0.0
    %753 = vmatprep.subr.mxu0 0.0
    %754 = vmatpush2.msra.mxu0 0.0
    %755 = vmatprep.mubr.f32.mxu0 0.0
    %756 = vmatmul.mubr.f32.gmra.mxu0 %v685
    %v757 = vpop.f32.mrf.mxu0
    %v758 = vadd.f32 0.0, %v757
    %v759 = vpop.f32.mrf.mxu0
    %760 = vdwg.mxu0
    %v762 = vsel %vm275, %v672, 0
    %764 = vmatprep.subr.mxu0 0.0
    %765 = vmatpush1.msra.mxu0 0.0
    %766 = vmatprep.subr.mxu0 0.0
    %767 = vmatpush1.msra.mxu0 0.0
    %768 = vmatprep.subr.mxu0 0.0
    %769 = vmatpush1.msra.mxu0 0.0
    %770 = vmatprep.subr.mxu0 0.0
    %771 = vmatpush1.msra.mxu0 0.0
    %772 = vmatprep.subr.mxu0 0.0
    %773 = vmatpush1.msra.mxu0 0.0
    %774 = vmatprep.subr.mxu0 0.0
    %775 = vmatpush1.msra.mxu0 0.0
    %776 = vmatprep.subr.mxu0 0.0
    %777 = vmatpush1.msra.mxu0 0.0
    %778 = vmatprep.subr.mxu0 0.0
    %779 = vmatpush1.msra.mxu0 0.0
    %780 = vmatprep.subr.mxu0 0.0
    %781 = vmatpush1.msra.mxu0 0.0
    %782 = vmatprep.subr.mxu0 0.0
    %783 = vmatpush1.msra.mxu0 0.0
    %784 = vmatprep.subr.mxu0 0.0
    %785 = vmatpush1.msra.mxu0 0.0
    %786 = vmatprep.subr.mxu0 0.0
    %787 = vmatpush1.msra.mxu0 0.0
    %788 = vmatprep.subr.mxu0 0.0
    %789 = vmatpush1.msra.mxu0 0.0
    %790 = vmatprep.subr.mxu0 0.0
    %791 = vmatpush1.msra.mxu0 0.0
    %792 = vmatprep.subr.mxu0 0.0
    %793 = vmatpush1.msra.mxu0 0.0
    %794 = vmatprep.subr.mxu0 0.0
    %795 = vmatpush1.msra.mxu0 %v436
    %796 = vmatprep.subr.mxu0 0.0
    %797 = vmatpush2.msra.mxu0 0.0
    %798 = vmatprep.subr.mxu0 0.0
    %799 = vmatpush2.msra.mxu0 0.0
    %800 = vmatprep.subr.mxu0 0.0
    %801 = vmatpush2.msra.mxu0 0.0
    %802 = vmatprep.subr.mxu0 0.0
    %803 = vmatpush2.msra.mxu0 0.0
    %804 = vmatprep.subr.mxu0 0.0
    %805 = vmatpush2.msra.mxu0 0.0
    %806 = vmatprep.subr.mxu0 0.0
    %807 = vmatpush2.msra.mxu0 0.0
    %808 = vmatprep.subr.mxu0 0.0
    %809 = vmatpush2.msra.mxu0 0.0
    %810 = vmatprep.subr.mxu0 0.0
    %811 = vmatpush2.msra.mxu0 0.0
    %812 = vmatprep.subr.mxu0 0.0
    %813 = vmatpush2.msra.mxu0 0.0
    %814 = vmatprep.subr.mxu0 0.0
    %815 = vmatpush2.msra.mxu0 0.0
    %816 = vmatprep.subr.mxu0 0.0
    %817 = vmatpush2.msra.mxu0 0.0
    %818 = vmatprep.subr.mxu0 0.0
    %819 = vmatpush2.msra.mxu0 0.0
    %820 = vmatprep.subr.mxu0 0.0
    %821 = vmatpush2.msra.mxu0 0.0
    %822 = vmatprep.subr.mxu0 0.0
    %823 = vmatpush2.msra.mxu0 0.0
    %824 = vmatprep.subr.mxu0 0.0
    %825 = vmatpush2.msra.mxu0 0.0
    %826 = vmatprep.subr.mxu0 0.0
    %827 = vmatpush2.msra.mxu0 0.0
    %828 = vmatprep.mubr.f32.mxu0 0.0
    %829 = vmatmul.mubr.f32.gmra.mxu0 %v762
    %v830 = vpop.f32.mrf.mxu0
    %v831 = vadd.f32 %v758, %v830
    %v832 = vpop.f32.mrf.mxu0
    %833 = vdwg.mxu0
    %v834 = vmul.f32 %v831, %v683
    %835 = vrot.lane.b32.xlu0 %v462, 112
    %v836 = vpop.permute.xlu0 %835
    %837 = vrot.lane.b32.xlu0 %v476, 112
    %v838 = vpop.permute.xlu0 %837
    %v839 = vsel %vm515, %v836, 0
    %v841 = vsel %vm515, %v838, 0
    %843 = vmatprep.subr.mxu0 0.0
    %844 = vmatpush1.xpose.msra.mxu0 0.0
    %845 = vmatprep.subr.mxu0 0.0
    %846 = vmatpush1.xpose.msra.mxu0 0.0
    %847 = vmatprep.subr.mxu0 0.0
    %848 = vmatpush1.xpose.msra.mxu0 0.0
    %849 = vmatprep.subr.mxu0 0.0
    %850 = vmatpush1.xpose.msra.mxu0 0.0
    %851 = vmatprep.subr.mxu0 0.0
    %852 = vmatpush1.xpose.msra.mxu0 0.0
    %853 = vmatprep.subr.mxu0 0.0
    %854 = vmatpush1.xpose.msra.mxu0 0.0
    %855 = vmatprep.subr.mxu0 0.0
    %856 = vmatpush1.xpose.msra.mxu0 0.0
    %857 = vmatprep.subr.mxu0 0.0
    %858 = vmatpush1.xpose.msra.mxu0 0.0
    %859 = vmatprep.subr.mxu0 0.0
    %860 = vmatpush1.xpose.msra.mxu0 0.0
    %861 = vmatprep.subr.mxu0 0.0
    %862 = vmatpush1.xpose.msra.mxu0 0.0
    %863 = vmatprep.subr.mxu0 0.0
    %864 = vmatpush1.xpose.msra.mxu0 0.0
    %865 = vmatprep.subr.mxu0 0.0
    %866 = vmatpush1.xpose.msra.mxu0 0.0
    %867 = vmatprep.subr.mxu0 0.0
    %868 = vmatpush1.xpose.msra.mxu0 0.0
    %869 = vmatprep.subr.mxu0 0.0
    %870 = vmatpush1.xpose.msra.mxu0 0.0
    %871 = vmatprep.subr.mxu0 0.0
    %872 = vmatpush1.xpose.msra.mxu0 0.0
    %873 = vmatprep.subr.mxu0 0.0
    %874 = vmatpush1.xpose.msra.mxu0 %v841
    %875 = vmatprep.subr.mxu0 0.0
    %876 = vmatpush2.xpose.msra.mxu0 0.0
    %877 = vmatprep.subr.mxu0 0.0
    %878 = vmatpush2.xpose.msra.mxu0 0.0
    %879 = vmatprep.subr.mxu0 0.0
    %880 = vmatpush2.xpose.msra.mxu0 0.0
    %881 = vmatprep.subr.mxu0 0.0
    %882 = vmatpush2.xpose.msra.mxu0 0.0
    %883 = vmatprep.subr.mxu0 0.0
    %884 = vmatpush2.xpose.msra.mxu0 0.0
    %885 = vmatprep.subr.mxu0 0.0
    %886 = vmatpush2.xpose.msra.mxu0 0.0
    %887 = vmatprep.subr.mxu0 0.0
    %888 = vmatpush2.xpose.msra.mxu0 0.0
    %889 = vmatprep.subr.mxu0 0.0
    %890 = vmatpush2.xpose.msra.mxu0 0.0
    %891 = vmatprep.subr.mxu0 0.0
    %892 = vmatpush2.xpose.msra.mxu0 0.0
    %893 = vmatprep.subr.mxu0 0.0
    %894 = vmatpush2.xpose.msra.mxu0 0.0
    %895 = vmatprep.subr.mxu0 0.0
    %896 = vmatpush2.xpose.msra.mxu0 0.0
    %897 = vmatprep.subr.mxu0 0.0
    %898 = vmatpush2.xpose.msra.mxu0 0.0
    %899 = vmatprep.subr.mxu0 0.0
    %900 = vmatpush2.xpose.msra.mxu0 0.0
    %901 = vmatprep.subr.mxu0 0.0
    %902 = vmatpush2.xpose.msra.mxu0 0.0
    %903 = vmatprep.subr.mxu0 0.0
    %904 = vmatpush2.xpose.msra.mxu0 0.0
    %905 = vmatprep.subr.mxu0 0.0
    %906 = vmatpush2.xpose.msra.mxu0 0.0
    %907 = vmatprep.mubr.f32.mxu0 0.0
    %908 = vmatmul.mubr.f32.gmra.mxu0 %v839
    %v909 = vpop.f32.mrf.mxu0
    %v910 = vadd.f32 %v514, %v909
    %v911 = vpop.f32.mrf.mxu0
    %912 = vdwg.mxu0
    %913 = vmatprep.subr.mxu0 0.0
    %914 = vmatpush1.msra.mxu0 0.0
    %915 = vmatprep.subr.mxu0 0.0
    %916 = vmatpush1.msra.mxu0 0.0
    %917 = vmatprep.subr.mxu0 0.0
    %918 = vmatpush1.msra.mxu0 0.0
    %919 = vmatprep.subr.mxu0 0.0
    %920 = vmatpush1.msra.mxu0 0.0
    %921 = vmatprep.subr.mxu0 0.0
    %922 = vmatpush1.msra.mxu0 0.0
    %923 = vmatprep.subr.mxu0 0.0
    %924 = vmatpush1.msra.mxu0 0.0
    %925 = vmatprep.subr.mxu0 0.0
    %926 = vmatpush1.msra.mxu0 0.0
    %927 = vmatprep.subr.mxu0 0.0
    %928 = vmatpush1.msra.mxu0 0.0
    %929 = vmatprep.subr.mxu0 0.0
    %930 = vmatpush1.msra.mxu0 0.0
    %931 = vmatprep.subr.mxu0 0.0
    %932 = vmatpush1.msra.mxu0 0.0
    %933 = vmatprep.subr.mxu0 0.0
    %934 = vmatpush1.msra.mxu0 0.0
    %935 = vmatprep.subr.mxu0 0.0
    %936 = vmatpush1.msra.mxu0 0.0
    %937 = vmatprep.subr.mxu0 0.0
    %938 = vmatpush1.msra.mxu0 0.0
    %939 = vmatprep.subr.mxu0 0.0
    %940 = vmatpush1.msra.mxu0 0.0
    %941 = vmatprep.subr.mxu0 0.0
    %942 = vmatpush1.msra.mxu0 %v505
    %943 = vmatprep.subr.mxu0 0.0
    %944 = vmatpush1.msra.mxu0 %v504
    %945 = vmatprep.subr.mxu0 0.0
    %946 = vmatpush2.msra.mxu0 0.0
    %947 = vmatprep.subr.mxu0 0.0
    %948 = vmatpush2.msra.mxu0 0.0
    %949 = vmatprep.subr.mxu0 0.0
    %950 = vmatpush2.msra.mxu0 0.0
    %951 = vmatprep.subr.mxu0 0.0
    %952 = vmatpush2.msra.mxu0 0.0
    %953 = vmatprep.subr.mxu0 0.0
    %954 = vmatpush2.msra.mxu0 0.0
    %955 = vmatprep.subr.mxu0 0.0
    %956 = vmatpush2.msra.mxu0 0.0
    %957 = vmatprep.subr.mxu0 0.0
    %958 = vmatpush2.msra.mxu0 0.0
    %959 = vmatprep.subr.mxu0 0.0
    %960 = vmatpush2.msra.mxu0 0.0
    %961 = vmatprep.subr.mxu0 0.0
    %962 = vmatpush2.msra.mxu0 0.0
    %963 = vmatprep.subr.mxu0 0.0
    %964 = vmatpush2.msra.mxu0 0.0
    %965 = vmatprep.subr.mxu0 0.0
    %966 = vmatpush2.msra.mxu0 0.0
    %967 = vmatprep.subr.mxu0 0.0
    %968 = vmatpush2.msra.mxu0 0.0
    %969 = vmatprep.subr.mxu0 0.0
    %970 = vmatpush2.msra.mxu0 0.0
    %971 = vmatprep.subr.mxu0 0.0
    %972 = vmatpush2.msra.mxu0 0.0
    %973 = vmatprep.subr.mxu0 0.0
    %974 = vmatpush2.msra.mxu0 0.0
    %975 = vmatprep.subr.mxu0 0.0
    %976 = vmatpush2.msra.mxu0 0.0
    %977 = vmatprep.mubr.f32.mxu0 0.0
    %978 = vmatmul.mubr.f32.gmra.mxu0 %v839
    %v979 = vpop.f32.mrf.mxu0
    %v980 = vadd.f32 0.0, %v979
    %v981 = vpop.f32.mrf.mxu0
    %982 = vdwg.mxu0
    %v983 = vsel %vm275, %v910, -inf
    %984 = vmax.xlane.f32.xlu0 %v983
    %v985 = vpop.xlane.xlu0 %984
    %v986 = vsel %vm665, %v980, -inf
    %987 = vmax.xlane.f32.xlu0 %v986
    %v988 = vpop.xlane.xlu0 %987
    %v989 = vmax.f32 %v985, %v988
    %v990 = vsub.f32 %v910, %v989
    %v991 = vmul.f32 %v990, 1.442695
    %v992 = vpow.pop %v991
    %v993 = vsub.f32 %v980, %v989
    %v994 = vmul.f32 %v993, 1.442695
    %v995 = vpow.pop %v994
    %v996 = vsel %vm275, %v992, 0.0
    %997 = vadd.xlane.f32.xlu0 %v996
    %v998 = vpop.xlane.xlu0 %997
    %v999 = vsel %vm665, %v995, 0.0
    %1000 = vadd.xlane.f32.xlu0 %v999
    %v1001 = vpop.xlane.xlu0 %1000
    %v1002 = vadd.f32 %v998, %v1001
    %v1003 = vrcp.pop %v1002
    %v1005 = vsel %vm665, %v995, 0
    %v1008 = vsel %vm687, %v511, 0
    %1010 = vmatprep.subr.mxu0 0.0
    %1011 = vmatpush1.msra.mxu0 0.0
    %1012 = vmatprep.subr.mxu0 0.0
    %1013 = vmatpush1.msra.mxu0 0.0
    %1014 = vmatprep.subr.mxu0 0.0
    %1015 = vmatpush1.msra.mxu0 0.0
    %1016 = vmatprep.subr.mxu0 0.0
    %1017 = vmatpush1.msra.mxu0 0.0
    %1018 = vmatprep.subr.mxu0 0.0
    %1019 = vmatpush1.msra.mxu0 0.0
    %1020 = vmatprep.subr.mxu0 0.0
    %1021 = vmatpush1.msra.mxu0 0.0
    %1022 = vmatprep.subr.mxu0 0.0
    %1023 = vmatpush1.msra.mxu0 0.0
    %1024 = vmatprep.subr.mxu0 0.0
    %1025 = vmatpush1.msra.mxu0 0.0
    %1026 = vmatprep.subr.mxu0 0.0
    %1027 = vmatpush1.msra.mxu0 0.0
    %1028 = vmatprep.subr.mxu0 0.0
    %1029 = vmatpush1.msra.mxu0 0.0
    %1030 = vmatprep.subr.mxu0 0.0
    %1031 = vmatpush1.msra.mxu0 0.0
    %1032 = vmatprep.subr.mxu0 0.0
    %1033 = vmatpush1.msra.mxu0 0.0
    %1034 = vmatprep.subr.mxu0 0.0
    %1035 = vmatpush1.msra.mxu0 0.0
    %1036 = vmatprep.subr.mxu0 0.0
    %1037 = vmatpush1.msra.mxu0 0.0
    %1038 = vmatprep.subr.mxu0 0.0
    %1039 = vmatpush1.msra.mxu0 0.0
    %1040 = vmatprep.subr.mxu0 0.0
    %1041 = vmatpush1.msra.mxu0 %v1008
    %1042 = vmatprep.subr.mxu0 0.0
    %1043 = vmatpush2.msra.mxu0 0.0
    %1044 = vmatprep.subr.mxu0 0.0
    %1045 = vmatpush2.msra.mxu0 0.0
    %1046 = vmatprep.subr.mxu0 0.0
    %1047 = vmatpush2.msra.mxu0 0.0
    %1048 = vmatprep.subr.mxu0 0.0
    %1049 = vmatpush2.msra.mxu0 0.0
    %1050 = vmatprep.subr.mxu0 0.0
    %1051 = vmatpush2.msra.mxu0 0.0
    %1052 = vmatprep.subr.mxu0 0.0
    %1053 = vmatpush2.msra.mxu0 0.0
    %1054 = vmatprep.subr.mxu0 0.0
    %1055 = vmatpush2.msra.mxu0 0.0
    %1056 = vmatprep.subr.mxu0 0.0
    %1057 = vmatpush2.msra.mxu0 0.0
    %1058 = vmatprep.subr.mxu0 0.0
    %1059 = vmatpush2.msra.mxu0 0.0
    %1060 = vmatprep.subr.mxu0 0.0
    %1061 = vmatpush2.msra.mxu0 0.0
    %1062 = vmatprep.subr.mxu0 0.0
    %1063 = vmatpush2.msra.mxu0 0.0
    %1064 = vmatprep.subr.mxu0 0.0
    %1065 = vmatpush2.msra.mxu0 0.0
    %1066 = vmatprep.subr.mxu0 0.0
    %1067 = vmatpush2.msra.mxu0 0.0
    %1068 = vmatprep.subr.mxu0 0.0
    %1069 = vmatpush2.msra.mxu0 0.0
    %1070 = vmatprep.subr.mxu0 0.0
    %1071 = vmatpush2.msra.mxu0 0.0
    %1072 = vmatprep.subr.mxu0 0.0
    %1073 = vmatpush2.msra.mxu0 0.0
    %1074 = vmatprep.mubr.f32.mxu0 0.0
    %1075 = vmatmul.mubr.f32.gmra.mxu0 %v1005
    %v1076 = vpop.f32.mrf.mxu0
    %v1077 = vadd.f32 0.0, %v1076
    %v1078 = vpop.f32.mrf.mxu0
    %1079 = vdwg.mxu0
    %1081 = vrot.lane.b32.xlu0 %v436, 112
    %v1082 = vpop.permute.xlu0 %1081
    %v1085 = vsel %vm275, %v992, 0
    %1087 = vmatprep.subr.mxu0 0.0
    %1088 = vmatpush1.msra.mxu0 0.0
    %1089 = vmatprep.subr.mxu0 0.0
    %1090 = vmatpush1.msra.mxu0 0.0
    %1091 = vmatprep.subr.mxu0 0.0
    %1092 = vmatpush1.msra.mxu0 0.0
    %1093 = vmatprep.subr.mxu0 0.0
    %1094 = vmatpush1.msra.mxu0 0.0
    %1095 = vmatprep.subr.mxu0 0.0
    %1096 = vmatpush1.msra.mxu0 0.0
    %1097 = vmatprep.subr.mxu0 0.0
    %1098 = vmatpush1.msra.mxu0 0.0
    %1099 = vmatprep.subr.mxu0 0.0
    %1100 = vmatpush1.msra.mxu0 0.0
    %1101 = vmatprep.subr.mxu0 0.0
    %1102 = vmatpush1.msra.mxu0 0.0
    %1103 = vmatprep.subr.mxu0 0.0
    %1104 = vmatpush1.msra.mxu0 0.0
    %1105 = vmatprep.subr.mxu0 0.0
    %1106 = vmatpush1.msra.mxu0 0.0
    %1107 = vmatprep.subr.mxu0 0.0
    %1108 = vmatpush1.msra.mxu0 0.0
    %1109 = vmatprep.subr.mxu0 0.0
    %1110 = vmatpush1.msra.mxu0 0.0
    %1111 = vmatprep.subr.mxu0 0.0
    %1112 = vmatpush1.msra.mxu0 0.0
    %1113 = vmatprep.subr.mxu0 0.0
    %1114 = vmatpush1.msra.mxu0 0.0
    %1115 = vmatprep.subr.mxu0 0.0
    %1116 = vmatpush1.msra.mxu0 0.0
    %1117 = vmatprep.subr.mxu0 0.0
    %1118 = vmatpush1.msra.mxu0 %v1082
    %1119 = vmatprep.subr.mxu0 0.0
    %1120 = vmatpush2.msra.mxu0 0.0
    %1121 = vmatprep.subr.mxu0 0.0
    %1122 = vmatpush2.msra.mxu0 0.0
    %1123 = vmatprep.subr.mxu0 0.0
    %1124 = vmatpush2.msra.mxu0 0.0
    %1125 = vmatprep.subr.mxu0 0.0
    %1126 = vmatpush2.msra.mxu0 0.0
    %1127 = vmatprep.subr.mxu0 0.0
    %1128 = vmatpush2.msra.mxu0 0.0
    %1129 = vmatprep.subr.mxu0 0.0
    %1130 = vmatpush2.msra.mxu0 0.0
    %1131 = vmatprep.subr.mxu0 0.0
    %1132 = vmatpush2.msra.mxu0 0.0
    %1133 = vmatprep.subr.mxu0 0.0
    %1134 = vmatpush2.msra.mxu0 0.0
    %1135 = vmatprep.subr.mxu0 0.0
    %1136 = vmatpush2.msra.mxu0 0.0
    %1137 = vmatprep.subr.mxu0 0.0
    %1138 = vmatpush2.msra.mxu0 0.0
    %1139 = vmatprep.subr.mxu0 0.0
    %1140 = vmatpush2.msra.mxu0 0.0
    %1141 = vmatprep.subr.mxu0 0.0
    %1142 = vmatpush2.msra.mxu0 0.0
    %1143 = vmatprep.subr.mxu0 0.0
    %1144 = vmatpush2.msra.mxu0 0.0
    %1145 = vmatprep.subr.mxu0 0.0
    %1146 = vmatpush2.msra.mxu0 0.0
    %1147 = vmatprep.subr.mxu0 0.0
    %1148 = vmatpush2.msra.mxu0 0.0
    %1149 = vmatprep.subr.mxu0 0.0
    %1150 = vmatpush2.msra.mxu0 0.0
    %1151 = vmatprep.mubr.f32.mxu0 0.0
    %1152 = vmatmul.mubr.f32.gmra.mxu0 %v1085
    %v1153 = vpop.f32.mrf.mxu0
    %v1154 = vadd.f32 %v1077, %v1153
    %v1155 = vpop.f32.mrf.mxu0
    %1156 = vdwg.mxu0
    %v1157 = vmul.f32 %v1154, %v1003
    %1158 = vrot.lane.b32.xlu0 %v462, 96
    %v1159 = vpop.permute.xlu0 %1158
    %1160 = vrot.lane.b32.xlu0 %v476, 96
    %v1161 = vpop.permute.xlu0 %1160
    %v1162 = vsel %vm515, %v1159, 0
    %v1164 = vsel %vm515, %v1161, 0
    %1166 = vmatprep.subr.mxu0 0.0
    %1167 = vmatpush1.xpose.msra.mxu0 0.0
    %1168 = vmatprep.subr.mxu0 0.0
    %1169 = vmatpush1.xpose.msra.mxu0 0.0
    %1170 = vmatprep.subr.mxu0 0.0
    %1171 = vmatpush1.xpose.msra.mxu0 0.0
    %1172 = vmatprep.subr.mxu0 0.0
    %1173 = vmatpush1.xpose.msra.mxu0 0.0
    %1174 = vmatprep.subr.mxu0 0.0
    %1175 = vmatpush1.xpose.msra.mxu0 0.0
    %1176 = vmatprep.subr.mxu0 0.0
    %1177 = vmatpush1.xpose.msra.mxu0 0.0
    %1178 = vmatprep.subr.mxu0 0.0
    %1179 = vmatpush1.xpose.msra.mxu0 0.0
    %1180 = vmatprep.subr.mxu0 0.0
    %1181 = vmatpush1.xpose.msra.mxu0 0.0
    %1182 = vmatprep.subr.mxu0 0.0
    %1183 = vmatpush1.xpose.msra.mxu0 0.0
    %1184 = vmatprep.subr.mxu0 0.0
    %1185 = vmatpush1.xpose.msra.mxu0 0.0
    %1186 = vmatprep.subr.mxu0 0.0
    %1187 = vmatpush1.xpose.msra.mxu0 0.0
    %1188 = vmatprep.subr.mxu0 0.0
    %1189 = vmatpush1.xpose.msra.mxu0 0.0
    %1190 = vmatprep.subr.mxu0 0.0
    %1191 = vmatpush1.xpose.msra.mxu0 0.0
    %1192 = vmatprep.subr.mxu0 0.0
    %1193 = vmatpush1.xpose.msra.mxu0 0.0
    %1194 = vmatprep.subr.mxu0 0.0
    %1195 = vmatpush1.xpose.msra.mxu0 0.0
    %1196 = vmatprep.subr.mxu0 0.0
    %1197 = vmatpush1.xpose.msra.mxu0 %v1164
    %1198 = vmatprep.subr.mxu0 0.0
    %1199 = vmatpush2.xpose.msra.mxu0 0.0
    %1200 = vmatprep.subr.mxu0 0.0
    %1201 = vmatpush2.xpose.msra.mxu0 0.0
    %1202 = vmatprep.subr.mxu0 0.0
    %1203 = vmatpush2.xpose.msra.mxu0 0.0
    %1204 = vmatprep.subr.mxu0 0.0
    %1205 = vmatpush2.xpose.msra.mxu0 0.0
    %1206 = vmatprep.subr.mxu0 0.0
    %1207 = vmatpush2.xpose.msra.mxu0 0.0
    %1208 = vmatprep.subr.mxu0 0.0
    %1209 = vmatpush2.xpose.msra.mxu0 0.0
    %1210 = vmatprep.subr.mxu0 0.0
    %1211 = vmatpush2.xpose.msra.mxu0 0.0
    %1212 = vmatprep.subr.mxu0 0.0
    %1213 = vmatpush2.xpose.msra.mxu0 0.0
    %1214 = vmatprep.subr.mxu0 0.0
    %1215 = vmatpush2.xpose.msra.mxu0 0.0
    %1216 = vmatprep.subr.mxu0 0.0
    %1217 = vmatpush2.xpose.msra.mxu0 0.0
    %1218 = vmatprep.subr.mxu0 0.0
    %1219 = vmatpush2.xpose.msra.mxu0 0.0
    %1220 = vmatprep.subr.mxu0 0.0
    %1221 = vmatpush2.xpose.msra.mxu0 0.0
    %1222 = vmatprep.subr.mxu0 0.0
    %1223 = vmatpush2.xpose.msra.mxu0 0.0
    %1224 = vmatprep.subr.mxu0 0.0
    %1225 = vmatpush2.xpose.msra.mxu0 0.0
    %1226 = vmatprep.subr.mxu0 0.0
    %1227 = vmatpush2.xpose.msra.mxu0 0.0
    %1228 = vmatprep.subr.mxu0 0.0
    %1229 = vmatpush2.xpose.msra.mxu0 0.0
    %1230 = vmatprep.mubr.f32.mxu0 0.0
    %1231 = vmatmul.mubr.f32.gmra.mxu0 %v1162
    %v1232 = vpop.f32.mrf.mxu0
    %v1233 = vadd.f32 %v514, %v1232
    %v1234 = vpop.f32.mrf.mxu0
    %1235 = vdwg.mxu0
    %1236 = vmatprep.subr.mxu0 0.0
    %1237 = vmatpush1.msra.mxu0 0.0
    %1238 = vmatprep.subr.mxu0 0.0
    %1239 = vmatpush1.msra.mxu0 0.0
    %1240 = vmatprep.subr.mxu0 0.0
    %1241 = vmatpush1.msra.mxu0 0.0
    %1242 = vmatprep.subr.mxu0 0.0
    %1243 = vmatpush1.msra.mxu0 0.0
    %1244 = vmatprep.subr.mxu0 0.0
    %1245 = vmatpush1.msra.mxu0 0.0
    %1246 = vmatprep.subr.mxu0 0.0
    %1247 = vmatpush1.msra.mxu0 0.0
    %1248 = vmatprep.subr.mxu0 0.0
    %1249 = vmatpush1.msra.mxu0 0.0
    %1250 = vmatprep.subr.mxu0 0.0
    %1251 = vmatpush1.msra.mxu0 0.0
    %1252 = vmatprep.subr.mxu0 0.0
    %1253 = vmatpush1.msra.mxu0 0.0
    %1254 = vmatprep.subr.mxu0 0.0
    %1255 = vmatpush1.msra.mxu0 0.0
    %1256 = vmatprep.subr.mxu0 0.0
    %1257 = vmatpush1.msra.mxu0 0.0
    %1258 = vmatprep.subr.mxu0 0.0
    %1259 = vmatpush1.msra.mxu0 0.0
    %1260 = vmatprep.subr.mxu0 0.0
    %1261 = vmatpush1.msra.mxu0 0.0
    %1262 = vmatprep.subr.mxu0 0.0
    %1263 = vmatpush1.msra.mxu0 0.0
    %1264 = vmatprep.subr.mxu0 0.0
    %1265 = vmatpush1.msra.mxu0 %v507
    %1266 = vmatprep.subr.mxu0 0.0
    %1267 = vmatpush1.msra.mxu0 %v506
    %1268 = vmatprep.subr.mxu0 0.0
    %1269 = vmatpush2.msra.mxu0 0.0
    %1270 = vmatprep.subr.mxu0 0.0
    %1271 = vmatpush2.msra.mxu0 0.0
    %1272 = vmatprep.subr.mxu0 0.0
    %1273 = vmatpush2.msra.mxu0 0.0
    %1274 = vmatprep.subr.mxu0 0.0
    %1275 = vmatpush2.msra.mxu0 0.0
    %1276 = vmatprep.subr.mxu0 0.0
    %1277 = vmatpush2.msra.mxu0 0.0
    %1278 = vmatprep.subr.mxu0 0.0
    %1279 = vmatpush2.msra.mxu0 0.0
    %1280 = vmatprep.subr.mxu0 0.0
    %1281 = vmatpush2.msra.mxu0 0.0
    %1282 = vmatprep.subr.mxu0 0.0
    %1283 = vmatpush2.msra.mxu0 0.0
    %1284 = vmatprep.subr.mxu0 0.0
    %1285 = vmatpush2.msra.mxu0 0.0
    %1286 = vmatprep.subr.mxu0 0.0
    %1287 = vmatpush2.msra.mxu0 0.0
    %1288 = vmatprep.subr.mxu0 0.0
    %1289 = vmatpush2.msra.mxu0 0.0
    %1290 = vmatprep.subr.mxu0 0.0
    %1291 = vmatpush2.msra.mxu0 0.0
    %1292 = vmatprep.subr.mxu0 0.0
    %1293 = vmatpush2.msra.mxu0 0.0
    %1294 = vmatprep.subr.mxu0 0.0
    %1295 = vmatpush2.msra.mxu0 0.0
    %1296 = vmatprep.subr.mxu0 0.0
    %1297 = vmatpush2.msra.mxu0 0.0
    %1298 = vmatprep.subr.mxu0 0.0
    %1299 = vmatpush2.msra.mxu0 0.0
    %1300 = vmatprep.mubr.f32.mxu0 0.0
    %1301 = vmatmul.mubr.f32.gmra.mxu0 %v1162
    %v1302 = vpop.f32.mrf.mxu0
    %v1303 = vadd.f32 0.0, %v1302
    %v1304 = vpop.f32.mrf.mxu0
    %1305 = vdwg.mxu0
    %v1306 = vsel %vm275, %v1233, -inf
    %1307 = vmax.xlane.f32.xlu0 %v1306
    %v1308 = vpop.xlane.xlu0 %1307
    %v1309 = vsel %vm665, %v1303, -inf
    %1310 = vmax.xlane.f32.xlu0 %v1309
    %v1311 = vpop.xlane.xlu0 %1310
    %v1312 = vmax.f32 %v1308, %v1311
    %v1313 = vsub.f32 %v1233, %v1312
    %v1314 = vmul.f32 %v1313, 1.442695
    %v1315 = vpow.pop %v1314
    %v1316 = vsub.f32 %v1303, %v1312
    %v1317 = vmul.f32 %v1316, 1.442695
    %v1318 = vpow.pop %v1317
    %v1319 = vsel %vm275, %v1315, 0.0
    %1320 = vadd.xlane.f32.xlu0 %v1319
    %v1321 = vpop.xlane.xlu0 %1320
    %v1322 = vsel %vm665, %v1318, 0.0
    %1323 = vadd.xlane.f32.xlu0 %v1322
    %v1324 = vpop.xlane.xlu0 %1323
    %v1325 = vadd.f32 %v1321, %v1324
    %v1326 = vrcp.pop %v1325
    %v1328 = vsel %vm665, %v1318, 0
    %v1331 = vsel %vm687, %v512, 0
    %1333 = vmatprep.subr.mxu0 0.0
    %1334 = vmatpush1.msra.mxu0 0.0
    %1335 = vmatprep.subr.mxu0 0.0
    %1336 = vmatpush1.msra.mxu0 0.0
    %1337 = vmatprep.subr.mxu0 0.0
    %1338 = vmatpush1.msra.mxu0 0.0
    %1339 = vmatprep.subr.mxu0 0.0
    %1340 = vmatpush1.msra.mxu0 0.0
    %1341 = vmatprep.subr.mxu0 0.0
    %1342 = vmatpush1.msra.mxu0 0.0
    %1343 = vmatprep.subr.mxu0 0.0
    %1344 = vmatpush1.msra.mxu0 0.0
    %1345 = vmatprep.subr.mxu0 0.0
    %1346 = vmatpush1.msra.mxu0 0.0
    %1347 = vmatprep.subr.mxu0 0.0
    %1348 = vmatpush1.msra.mxu0 0.0
    %1349 = vmatprep.subr.mxu0 0.0
    %1350 = vmatpush1.msra.mxu0 0.0
    %1351 = vmatprep.subr.mxu0 0.0
    %1352 = vmatpush1.msra.mxu0 0.0
    %1353 = vmatprep.subr.mxu0 0.0
    %1354 = vmatpush1.msra.mxu0 0.0
    %1355 = vmatprep.subr.mxu0 0.0
    %1356 = vmatpush1.msra.mxu0 0.0
    %1357 = vmatprep.subr.mxu0 0.0
    %1358 = vmatpush1.msra.mxu0 0.0
    %1359 = vmatprep.subr.mxu0 0.0
    %1360 = vmatpush1.msra.mxu0 0.0
    %1361 = vmatprep.subr.mxu0 0.0
    %1362 = vmatpush1.msra.mxu0 0.0
    %1363 = vmatprep.subr.mxu0 0.0
    %1364 = vmatpush1.msra.mxu0 %v1331
    %1365 = vmatprep.subr.mxu0 0.0
    %1366 = vmatpush2.msra.mxu0 0.0
    %1367 = vmatprep.subr.mxu0 0.0
    %1368 = vmatpush2.msra.mxu0 0.0
    %1369 = vmatprep.subr.mxu0 0.0
    %1370 = vmatpush2.msra.mxu0 0.0
    %1371 = vmatprep.subr.mxu0 0.0
    %1372 = vmatpush2.msra.mxu0 0.0
    %1373 = vmatprep.subr.mxu0 0.0
    %1374 = vmatpush2.msra.mxu0 0.0
    %1375 = vmatprep.subr.mxu0 0.0
    %1376 = vmatpush2.msra.mxu0 0.0
    %1377 = vmatprep.subr.mxu0 0.0
    %1378 = vmatpush2.msra.mxu0 0.0
    %1379 = vmatprep.subr.mxu0 0.0
    %1380 = vmatpush2.msra.mxu0 0.0
    %1381 = vmatprep.subr.mxu0 0.0
    %1382 = vmatpush2.msra.mxu0 0.0
    %1383 = vmatprep.subr.mxu0 0.0
    %1384 = vmatpush2.msra.mxu0 0.0
    %1385 = vmatprep.subr.mxu0 0.0
    %1386 = vmatpush2.msra.mxu0 0.0
    %1387 = vmatprep.subr.mxu0 0.0
    %1388 = vmatpush2.msra.mxu0 0.0
    %1389 = vmatprep.subr.mxu0 0.0
    %1390 = vmatpush2.msra.mxu0 0.0
    %1391 = vmatprep.subr.mxu0 0.0
    %1392 = vmatpush2.msra.mxu0 0.0
    %1393 = vmatprep.subr.mxu0 0.0
    %1394 = vmatpush2.msra.mxu0 0.0
    %1395 = vmatprep.subr.mxu0 0.0
    %1396 = vmatpush2.msra.mxu0 0.0
    %1397 = vmatprep.mubr.f32.mxu0 0.0
    %1398 = vmatmul.mubr.f32.gmra.mxu0 %v1328
    %v1399 = vpop.f32.mrf.mxu0
    %v1400 = vadd.f32 0.0, %v1399
    %v1401 = vpop.f32.mrf.mxu0
    %1402 = vdwg.mxu0
    %1403 = vrot.lane.b32.xlu0 %v436, 96
    %v1404 = vpop.permute.xlu0 %1403
    %v1407 = vsel %vm275, %v1315, 0
    %1409 = vmatprep.subr.mxu0 0.0
    %1410 = vmatpush1.msra.mxu0 0.0
    %1411 = vmatprep.subr.mxu0 0.0
    %1412 = vmatpush1.msra.mxu0 0.0
    %1413 = vmatprep.subr.mxu0 0.0
    %1414 = vmatpush1.msra.mxu0 0.0
    %1415 = vmatprep.subr.mxu0 0.0
    %1416 = vmatpush1.msra.mxu0 0.0
    %1417 = vmatprep.subr.mxu0 0.0
    %1418 = vmatpush1.msra.mxu0 0.0
    %1419 = vmatprep.subr.mxu0 0.0
    %1420 = vmatpush1.msra.mxu0 0.0
    %1421 = vmatprep.subr.mxu0 0.0
    %1422 = vmatpush1.msra.mxu0 0.0
    %1423 = vmatprep.subr.mxu0 0.0
    %1424 = vmatpush1.msra.mxu0 0.0
    %1425 = vmatprep.subr.mxu0 0.0
    %1426 = vmatpush1.msra.mxu0 0.0
    %1427 = vmatprep.subr.mxu0 0.0
    %1428 = vmatpush1.msra.mxu0 0.0
    %1429 = vmatprep.subr.mxu0 0.0
    %1430 = vmatpush1.msra.mxu0 0.0
    %1431 = vmatprep.subr.mxu0 0.0
    %1432 = vmatpush1.msra.mxu0 0.0
    %1433 = vmatprep.subr.mxu0 0.0
    %1434 = vmatpush1.msra.mxu0 0.0
    %1435 = vmatprep.subr.mxu0 0.0
    %1436 = vmatpush1.msra.mxu0 0.0
    %1437 = vmatprep.subr.mxu0 0.0
    %1438 = vmatpush1.msra.mxu0 0.0
    %1439 = vmatprep.subr.mxu0 0.0
    %1440 = vmatpush1.msra.mxu0 %v1404
    %1441 = vmatprep.subr.mxu0 0.0
    %1442 = vmatpush2.msra.mxu0 0.0
    %1443 = vmatprep.subr.mxu0 0.0
    %1444 = vmatpush2.msra.mxu0 0.0
    %1445 = vmatprep.subr.mxu0 0.0
    %1446 = vmatpush2.msra.mxu0 0.0
    %1447 = vmatprep.subr.mxu0 0.0
    %1448 = vmatpush2.msra.mxu0 0.0
    %1449 = vmatprep.subr.mxu0 0.0
    %1450 = vmatpush2.msra.mxu0 0.0
    %1451 = vmatprep.subr.mxu0 0.0
    %1452 = vmatpush2.msra.mxu0 0.0
    %1453 = vmatprep.subr.mxu0 0.0
    %1454 = vmatpush2.msra.mxu0 0.0
    %1455 = vmatprep.subr.mxu0 0.0
    %1456 = vmatpush2.msra.mxu0 0.0
    %1457 = vmatprep.subr.mxu0 0.0
    %1458 = vmatpush2.msra.mxu0 0.0
    %1459 = vmatprep.subr.mxu0 0.0
    %1460 = vmatpush2.msra.mxu0 0.0
    %1461 = vmatprep.subr.mxu0 0.0
    %1462 = vmatpush2.msra.mxu0 0.0
    %1463 = vmatprep.subr.mxu0 0.0
    %1464 = vmatpush2.msra.mxu0 0.0
    %1465 = vmatprep.subr.mxu0 0.0
    %1466 = vmatpush2.msra.mxu0 0.0
    %1467 = vmatprep.subr.mxu0 0.0
    %1468 = vmatpush2.msra.mxu0 0.0
    %1469 = vmatprep.subr.mxu0 0.0
    %1470 = vmatpush2.msra.mxu0 0.0
    %1471 = vmatprep.subr.mxu0 0.0
    %1472 = vmatpush2.msra.mxu0 0.0
    %1473 = vmatprep.mubr.f32.mxu0 0.0
    %1474 = vmatmul.mubr.f32.gmra.mxu0 %v1407
    %v1475 = vpop.f32.mrf.mxu0
    %v1476 = vadd.f32 %v1400, %v1475
    %v1477 = vpop.f32.mrf.mxu0
    %1478 = vdwg.mxu0
    %v1479 = vmul.f32 %v1476, %v1326
    %1480 = vrot.lane.b32.xlu0 %v462, 80
    %v1481 = vpop.permute.xlu0 %1480
    %1482 = vrot.lane.b32.xlu0 %v476, 80
    %v1483 = vpop.permute.xlu0 %1482
    %v1484 = vsel %vm515, %v1481, 0
    %v1486 = vsel %vm515, %v1483, 0
    %1488 = vmatprep.subr.mxu0 0.0
    %1489 = vmatpush1.xpose.msra.mxu0 0.0
    %1490 = vmatprep.subr.mxu0 0.0
    %1491 = vmatpush1.xpose.msra.mxu0 0.0
    %1492 = vmatprep.subr.mxu0 0.0
    %1493 = vmatpush1.xpose.msra.mxu0 0.0
    %1494 = vmatprep.subr.mxu0 0.0
    %1495 = vmatpush1.xpose.msra.mxu0 0.0
    %1496 = vmatprep.subr.mxu0 0.0
    %1497 = vmatpush1.xpose.msra.mxu0 0.0
    %1498 = vmatprep.subr.mxu0 0.0
    %1499 = vmatpush1.xpose.msra.mxu0 0.0
    %1500 = vmatprep.subr.mxu0 0.0
    %1501 = vmatpush1.xpose.msra.mxu0 0.0
    %1502 = vmatprep.subr.mxu0 0.0
    %1503 = vmatpush1.xpose.msra.mxu0 0.0
    %1504 = vmatprep.subr.mxu0 0.0
    %1505 = vmatpush1.xpose.msra.mxu0 0.0
    %1506 = vmatprep.subr.mxu0 0.0
    %1507 = vmatpush1.xpose.msra.mxu0 0.0
    %1508 = vmatprep.subr.mxu0 0.0
    %1509 = vmatpush1.xpose.msra.mxu0 0.0
    %1510 = vmatprep.subr.mxu0 0.0
    %1511 = vmatpush1.xpose.msra.mxu0 0.0
    %1512 = vmatprep.subr.mxu0 0.0
    %1513 = vmatpush1.xpose.msra.mxu0 0.0
    %1514 = vmatprep.subr.mxu0 0.0
    %1515 = vmatpush1.xpose.msra.mxu0 0.0
    %1516 = vmatprep.subr.mxu0 0.0
    %1517 = vmatpush1.xpose.msra.mxu0 0.0
    %1518 = vmatprep.subr.mxu0 0.0
    %1519 = vmatpush1.xpose.msra.mxu0 %v1486
    %1520 = vmatprep.subr.mxu0 0.0
    %1521 = vmatpush2.xpose.msra.mxu0 0.0
    %1522 = vmatprep.subr.mxu0 0.0
    %1523 = vmatpush2.xpose.msra.mxu0 0.0
    %1524 = vmatprep.subr.mxu0 0.0
    %1525 = vmatpush2.xpose.msra.mxu0 0.0
    %1526 = vmatprep.subr.mxu0 0.0
    %1527 = vmatpush2.xpose.msra.mxu0 0.0
    %1528 = vmatprep.subr.mxu0 0.0
    %1529 = vmatpush2.xpose.msra.mxu0 0.0
    %1530 = vmatprep.subr.mxu0 0.0
    %1531 = vmatpush2.xpose.msra.mxu0 0.0
    %1532 = vmatprep.subr.mxu0 0.0
    %1533 = vmatpush2.xpose.msra.mxu0 0.0
    %1534 = vmatprep.subr.mxu0 0.0
    %1535 = vmatpush2.xpose.msra.mxu0 0.0
    %1536 = vmatprep.subr.mxu0 0.0
    %1537 = vmatpush2.xpose.msra.mxu0 0.0
    %1538 = vmatprep.subr.mxu0 0.0
    %1539 = vmatpush2.xpose.msra.mxu0 0.0
    %1540 = vmatprep.subr.mxu0 0.0
    %1541 = vmatpush2.xpose.msra.mxu0 0.0
    %1542 = vmatprep.subr.mxu0 0.0
    %1543 = vmatpush2.xpose.msra.mxu0 0.0
    %1544 = vmatprep.subr.mxu0 0.0
    %1545 = vmatpush2.xpose.msra.mxu0 0.0
    %1546 = vmatprep.subr.mxu0 0.0
    %1547 = vmatpush2.xpose.msra.mxu0 0.0
    %1548 = vmatprep.subr.mxu0 0.0
    %1549 = vmatpush2.xpose.msra.mxu0 0.0
    %1550 = vmatprep.subr.mxu0 0.0
    %1551 = vmatpush2.xpose.msra.mxu0 0.0
    %1552 = vmatprep.mubr.f32.mxu0 0.0
    %1553 = vmatmul.mubr.f32.gmra.mxu0 %v1484
    %v1554 = vpop.f32.mrf.mxu0
    %v1555 = vadd.f32 %v514, %v1554
    %v1556 = vpop.f32.mrf.mxu0
    %1557 = vdwg.mxu0
    %1558 = vmatprep.subr.mxu0 0.0
    %1559 = vmatpush1.msra.mxu0 0.0
    %1560 = vmatprep.subr.mxu0 0.0
    %1561 = vmatpush1.msra.mxu0 0.0
    %1562 = vmatprep.subr.mxu0 0.0
    %1563 = vmatpush1.msra.mxu0 0.0
    %1564 = vmatprep.subr.mxu0 0.0
    %1565 = vmatpush1.msra.mxu0 0.0
    %1566 = vmatprep.subr.mxu0 0.0
    %1567 = vmatpush1.msra.mxu0 0.0
    %1568 = vmatprep.subr.mxu0 0.0
    %1569 = vmatpush1.msra.mxu0 0.0
    %1570 = vmatprep.subr.mxu0 0.0
    %1571 = vmatpush1.msra.mxu0 0.0
    %1572 = vmatprep.subr.mxu0 0.0
    %1573 = vmatpush1.msra.mxu0 0.0
    %1574 = vmatprep.subr.mxu0 0.0
    %1575 = vmatpush1.msra.mxu0 0.0
    %1576 = vmatprep.subr.mxu0 0.0
    %1577 = vmatpush1.msra.mxu0 0.0
    %1578 = vmatprep.subr.mxu0 0.0
    %1579 = vmatpush1.msra.mxu0 0.0
    %1580 = vmatprep.subr.mxu0 0.0
    %1581 = vmatpush1.msra.mxu0 0.0
    %1582 = vmatprep.subr.mxu0 0.0
    %1583 = vmatpush1.msra.mxu0 0.0
    %1584 = vmatprep.subr.mxu0 0.0
    %1585 = vmatpush1.msra.mxu0 0.0
    %1586 = vmatprep.subr.mxu0 0.0
    %1587 = vmatpush1.msra.mxu0 %v509
    %1588 = vmatprep.subr.mxu0 0.0
    %1589 = vmatpush1.msra.mxu0 %v508
    %1590 = vmatprep.subr.mxu0 0.0
    %1591 = vmatpush2.msra.mxu0 0.0
    %1592 = vmatprep.subr.mxu0 0.0
    %1593 = vmatpush2.msra.mxu0 0.0
    %1594 = vmatprep.subr.mxu0 0.0
    %1595 = vmatpush2.msra.mxu0 0.0
    %1596 = vmatprep.subr.mxu0 0.0
    %1597 = vmatpush2.msra.mxu0 0.0
    %1598 = vmatprep.subr.mxu0 0.0
    %1599 = vmatpush2.msra.mxu0 0.0
    %1600 = vmatprep.subr.mxu0 0.0
    %1601 = vmatpush2.msra.mxu0 0.0
    %1602 = vmatprep.subr.mxu0 0.0
    %1603 = vmatpush2.msra.mxu0 0.0
    %1604 = vmatprep.subr.mxu0 0.0
    %1605 = vmatpush2.msra.mxu0 0.0
    %1606 = vmatprep.subr.mxu0 0.0
    %1607 = vmatpush2.msra.mxu0 0.0
    %1608 = vmatprep.subr.mxu0 0.0
    %1609 = vmatpush2.msra.mxu0 0.0
    %1610 = vmatprep.subr.mxu0 0.0
    %1611 = vmatpush2.msra.mxu0 0.0
    %1612 = vmatprep.subr.mxu0 0.0
    %1613 = vmatpush2.msra.mxu0 0.0
    %1614 = vmatprep.subr.mxu0 0.0
    %1615 = vmatpush2.msra.mxu0 0.0
    %1616 = vmatprep.subr.mxu0 0.0
    %1617 = vmatpush2.msra.mxu0 0.0
    %1618 = vmatprep.subr.mxu0 0.0
    %1619 = vmatpush2.msra.mxu0 0.0
    %1620 = vmatprep.subr.mxu0 0.0
    %1621 = vmatpush2.msra.mxu0 0.0
    %1622 = vmatprep.mubr.f32.mxu0 0.0
    %1623 = vmatmul.mubr.f32.gmra.mxu0 %v1484
    %v1624 = vpop.f32.mrf.mxu0
    %v1625 = vadd.f32 0.0, %v1624
    %v1626 = vpop.f32.mrf.mxu0
    %1627 = vdwg.mxu0
    %v1628 = vsel %vm275, %v1555, -inf
    %1629 = vmax.xlane.f32.xlu0 %v1628
    %v1630 = vpop.xlane.xlu0 %1629
    %v1631 = vsel %vm665, %v1625, -inf
    %1632 = vmax.xlane.f32.xlu0 %v1631
    %v1633 = vpop.xlane.xlu0 %1632
    %v1634 = vmax.f32 %v1630, %v1633
    %v1635 = vsub.f32 %v1555, %v1634
    %v1636 = vmul.f32 %v1635, 1.442695
    %v1637 = vpow.pop %v1636
    %v1638 = vsub.f32 %v1625, %v1634
    %v1639 = vmul.f32 %v1638, 1.442695
    %v1640 = vpow.pop %v1639
    %v1641 = vsel %vm275, %v1637, 0.0
    %1642 = vadd.xlane.f32.xlu0 %v1641
    %v1643 = vpop.xlane.xlu0 %1642
    %v1644 = vsel %vm665, %v1640, 0.0
    %1645 = vadd.xlane.f32.xlu0 %v1644
    %v1646 = vpop.xlane.xlu0 %1645
    %v1647 = vadd.f32 %v1643, %v1646
    %v1648 = vrcp.pop %v1647
    %v1650 = vsel %vm665, %v1640, 0
    %v1653 = vsel %vm687, %v513, 0
    %1655 = vmatprep.subr.mxu0 0.0
    %1656 = vmatpush1.msra.mxu0 0.0
    %1657 = vmatprep.subr.mxu0 0.0
    %1658 = vmatpush1.msra.mxu0 0.0
    %1659 = vmatprep.subr.mxu0 0.0
    %1660 = vmatpush1.msra.mxu0 0.0
    %1661 = vmatprep.subr.mxu0 0.0
    %1662 = vmatpush1.msra.mxu0 0.0
    %1663 = vmatprep.subr.mxu0 0.0
    %1664 = vmatpush1.msra.mxu0 0.0
    %1665 = vmatprep.subr.mxu0 0.0
    %1666 = vmatpush1.msra.mxu0 0.0
    %1667 = vmatprep.subr.mxu0 0.0
    %1668 = vmatpush1.msra.mxu0 0.0
    %1669 = vmatprep.subr.mxu0 0.0
    %1670 = vmatpush1.msra.mxu0 0.0
    %1671 = vmatprep.subr.mxu0 0.0
    %1672 = vmatpush1.msra.mxu0 0.0
    %1673 = vmatprep.subr.mxu0 0.0
    %1674 = vmatpush1.msra.mxu0 0.0
    %1675 = vmatprep.subr.mxu0 0.0
    %1676 = vmatpush1.msra.mxu0 0.0
    %1677 = vmatprep.subr.mxu0 0.0
    %1678 = vmatpush1.msra.mxu0 0.0
    %1679 = vmatprep.subr.mxu0 0.0
    %1680 = vmatpush1.msra.mxu0 0.0
    %1681 = vmatprep.subr.mxu0 0.0
    %1682 = vmatpush1.msra.mxu0 0.0
    %1683 = vmatprep.subr.mxu0 0.0
    %1684 = vmatpush1.msra.mxu0 0.0
    %1685 = vmatprep.subr.mxu0 0.0
    %1686 = vmatpush1.msra.mxu0 %v1653
    %1687 = vmatprep.subr.mxu0 0.0
    %1688 = vmatpush2.msra.mxu0 0.0
    %1689 = vmatprep.subr.mxu0 0.0
    %1690 = vmatpush2.msra.mxu0 0.0
    %1691 = vmatprep.subr.mxu0 0.0
    %1692 = vmatpush2.msra.mxu0 0.0
    %1693 = vmatprep.subr.mxu0 0.0
    %1694 = vmatpush2.msra.mxu0 0.0
    %1695 = vmatprep.subr.mxu0 0.0
    %1696 = vmatpush2.msra.mxu0 0.0
    %1697 = vmatprep.subr.mxu0 0.0
    %1698 = vmatpush2.msra.mxu0 0.0
    %1699 = vmatprep.subr.mxu0 0.0
    %1700 = vmatpush2.msra.mxu0 0.0
    %1701 = vmatprep.subr.mxu0 0.0
    %1702 = vmatpush2.msra.mxu0 0.0
    %1703 = vmatprep.subr.mxu0 0.0
    %1704 = vmatpush2.msra.mxu0 0.0
    %1705 = vmatprep.subr.mxu0 0.0
    %1706 = vmatpush2.msra.mxu0 0.0
    %1707 = vmatprep.subr.mxu0 0.0
    %1708 = vmatpush2.msra.mxu0 0.0
    %1709 = vmatprep.subr.mxu0 0.0
    %1710 = vmatpush2.msra.mxu0 0.0
    %1711 = vmatprep.subr.mxu0 0.0
    %1712 = vmatpush2.msra.mxu0 0.0
    %1713 = vmatprep.subr.mxu0 0.0
    %1714 = vmatpush2.msra.mxu0 0.0
    %1715 = vmatprep.subr.mxu0 0.0
    %1716 = vmatpush2.msra.mxu0 0.0
    %1717 = vmatprep.subr.mxu0 0.0
    %1718 = vmatpush2.msra.mxu0 0.0
    %1719 = vmatprep.mubr.f32.mxu0 0.0
    %1720 = vmatmul.mubr.f32.gmra.mxu0 %v1650
    %v1721 = vpop.f32.mrf.mxu0
    %v1722 = vadd.f32 0.0, %v1721
    %v1723 = vpop.f32.mrf.mxu0
    %1724 = vdwg.mxu0
    %1725 = vrot.lane.b32.xlu0 %v436, 80
    %v1726 = vpop.permute.xlu0 %1725
    %v1729 = vsel %vm275, %v1637, 0
    %1731 = vmatprep.subr.mxu0 0.0
    %1732 = vmatpush1.msra.mxu0 0.0
    %1733 = vmatprep.subr.mxu0 0.0
    %1734 = vmatpush1.msra.mxu0 0.0
    %1735 = vmatprep.subr.mxu0 0.0
    %1736 = vmatpush1.msra.mxu0 0.0
    %1737 = vmatprep.subr.mxu0 0.0
    %1738 = vmatpush1.msra.mxu0 0.0
    %1739 = vmatprep.subr.mxu0 0.0
    %1740 = vmatpush1.msra.mxu0 0.0
    %1741 = vmatprep.subr.mxu0 0.0
    %1742 = vmatpush1.msra.mxu0 0.0
    %1743 = vmatprep.subr.mxu0 0.0
    %1744 = vmatpush1.msra.mxu0 0.0
    %1745 = vmatprep.subr.mxu0 0.0
    %1746 = vmatpush1.msra.mxu0 0.0
    %1747 = vmatprep.subr.mxu0 0.0
    %1748 = vmatpush1.msra.mxu0 0.0
    %1749 = vmatprep.subr.mxu0 0.0
    %1750 = vmatpush1.msra.mxu0 0.0
    %1751 = vmatprep.subr.mxu0 0.0
    %1752 = vmatpush1.msra.mxu0 0.0
    %1753 = vmatprep.subr.mxu0 0.0
    %1754 = vmatpush1.msra.mxu0 0.0
    %1755 = vmatprep.subr.mxu0 0.0
    %1756 = vmatpush1.msra.mxu0 0.0
    %1757 = vmatprep.subr.mxu0 0.0
    %1758 = vmatpush1.msra.mxu0 0.0
    %1759 = vmatprep.subr.mxu0 0.0
    %1760 = vmatpush1.msra.mxu0 0.0
    %1761 = vmatprep.subr.mxu0 0.0
    %1762 = vmatpush1.msra.mxu0 %v1726
    %1763 = vmatprep.subr.mxu0 0.0
    %1764 = vmatpush2.msra.mxu0 0.0
    %1765 = vmatprep.subr.mxu0 0.0
    %1766 = vmatpush2.msra.mxu0 0.0
    %1767 = vmatprep.subr.mxu0 0.0
    %1768 = vmatpush2.msra.mxu0 0.0
    %1769 = vmatprep.subr.mxu0 0.0
    %1770 = vmatpush2.msra.mxu0 0.0
    %1771 = vmatprep.subr.mxu0 0.0
    %1772 = vmatpush2.msra.mxu0 0.0
    %1773 = vmatprep.subr.mxu0 0.0
    %1774 = vmatpush2.msra.mxu0 0.0
    %1775 = vmatprep.subr.mxu0 0.0
    %1776 = vmatpush2.msra.mxu0 0.0
    %1777 = vmatprep.subr.mxu0 0.0
    %1778 = vmatpush2.msra.mxu0 0.0
    %1779 = vmatprep.subr.mxu0 0.0
    %1780 = vmatpush2.msra.mxu0 0.0
    %1781 = vmatprep.subr.mxu0 0.0
    %1782 = vmatpush2.msra.mxu0 0.0
    %1783 = vmatprep.subr.mxu0 0.0
    %1784 = vmatpush2.msra.mxu0 0.0
    %1785 = vmatprep.subr.mxu0 0.0
    %1786 = vmatpush2.msra.mxu0 0.0
    %1787 = vmatprep.subr.mxu0 0.0
    %1788 = vmatpush2.msra.mxu0 0.0
    %1789 = vmatprep.subr.mxu0 0.0
    %1790 = vmatpush2.msra.mxu0 0.0
    %1791 = vmatprep.subr.mxu0 0.0
    %1792 = vmatpush2.msra.mxu0 0.0
    %1793 = vmatprep.subr.mxu0 0.0
    %1794 = vmatpush2.msra.mxu0 0.0
    %1795 = vmatprep.mubr.f32.mxu0 0.0
    %1796 = vmatmul.mubr.f32.gmra.mxu0 %v1729
    %v1797 = vpop.f32.mrf.mxu0
    %v1798 = vadd.f32 %v1722, %v1797
    %v1799 = vpop.f32.mrf.mxu0
    %1800 = vdwg.mxu0
    %v1801 = vmul.f32 %v1798, %v1648
    %1803 = vrot.lane.b32.xlu0 %v1157, 16
    %v1804 = vpop.permute.xlu0 %1803
    %1807 = vrot.lane.b32.xlu0 %v1479, 32
    %v1808 = vpop.permute.xlu0 %1807
    %1811 = vrot.lane.b32.xlu0 %v1801, 48
    %v1812 = vpop.permute.xlu0 %1811
    %v1814 = vsel %vm515, %v834, %v1804
    %v1815 = vsel %vm66, %v1814, %v1808
    %vm1816 = vcmask 392192
    %v1817 = vsel %vm1816, %v1815, %v1812
    %v1819 = vsel %vm515, %v463, 0
    %v1822 = vsel %vm515, %v477, 0
    %1824 = vmatprep.subr.mxu0 0.0
    %1825 = vmatpush1.xpose.msra.mxu0 0.0
    %1826 = vmatprep.subr.mxu0 0.0
    %1827 = vmatpush1.xpose.msra.mxu0 0.0
    %1828 = vmatprep.subr.mxu0 0.0
    %1829 = vmatpush1.xpose.msra.mxu0 0.0
    %1830 = vmatprep.subr.mxu0 0.0
    %1831 = vmatpush1.xpose.msra.mxu0 0.0
    %1832 = vmatprep.subr.mxu0 0.0
    %1833 = vmatpush1.xpose.msra.mxu0 0.0
    %1834 = vmatprep.subr.mxu0 0.0
    %1835 = vmatpush1.xpose.msra.mxu0 0.0
    %1836 = vmatprep.subr.mxu0 0.0
    %1837 = vmatpush1.xpose.msra.mxu0 0.0
    %1838 = vmatprep.subr.mxu0 0.0
    %1839 = vmatpush1.xpose.msra.mxu0 0.0
    %1840 = vmatprep.subr.mxu0 0.0
    %1841 = vmatpush1.xpose.msra.mxu0 0.0
    %1842 = vmatprep.subr.mxu0 0.0
    %1843 = vmatpush1.xpose.msra.mxu0 0.0
    %1844 = vmatprep.subr.mxu0 0.0
    %1845 = vmatpush1.xpose.msra.mxu0 0.0
    %1846 = vmatprep.subr.mxu0 0.0
    %1847 = vmatpush1.xpose.msra.mxu0 0.0
    %1848 = vmatprep.subr.mxu0 0.0
    %1849 = vmatpush1.xpose.msra.mxu0 0.0
    %1850 = vmatprep.subr.mxu0 0.0
    %1851 = vmatpush1.xpose.msra.mxu0 0.0
    %1852 = vmatprep.subr.mxu0 0.0
    %1853 = vmatpush1.xpose.msra.mxu0 0.0
    %1854 = vmatprep.subr.mxu0 0.0
    %1855 = vmatpush1.xpose.msra.mxu0 %v1822
    %1856 = vmatprep.subr.mxu0 0.0
    %1857 = vmatpush2.xpose.msra.mxu0 0.0
    %1858 = vmatprep.subr.mxu0 0.0
    %1859 = vmatpush2.xpose.msra.mxu0 0.0
    %1860 = vmatprep.subr.mxu0 0.0
    %1861 = vmatpush2.xpose.msra.mxu0 0.0
    %1862 = vmatprep.subr.mxu0 0.0
    %1863 = vmatpush2.xpose.msra.mxu0 0.0
    %1864 = vmatprep.subr.mxu0 0.0
    %1865 = vmatpush2.xpose.msra.mxu0 0.0
    %1866 = vmatprep.subr.mxu0 0.0
    %1867 = vmatpush2.xpose.msra.mxu0 0.0
    %1868 = vmatprep.subr.mxu0 0.0
    %1869 = vmatpush2.xpose.msra.mxu0 0.0
    %1870 = vmatprep.subr.mxu0 0.0
    %1871 = vmatpush2.xpose.msra.mxu0 0.0
    %1872 = vmatprep.subr.mxu0 0.0
    %1873 = vmatpush2.xpose.msra.mxu0 0.0
    %1874 = vmatprep.subr.mxu0 0.0
    %1875 = vmatpush2.xpose.msra.mxu0 0.0
    %1876 = vmatprep.subr.mxu0 0.0
    %1877 = vmatpush2.xpose.msra.mxu0 0.0
    %1878 = vmatprep.subr.mxu0 0.0
    %1879 = vmatpush2.xpose.msra.mxu0 0.0
    %1880 = vmatprep.subr.mxu0 0.0
    %1881 = vmatpush2.xpose.msra.mxu0 0.0
    %1882 = vmatprep.subr.mxu0 0.0
    %1883 = vmatpush2.xpose.msra.mxu0 0.0
    %1884 = vmatprep.subr.mxu0 0.0
    %1885 = vmatpush2.xpose.msra.mxu0 0.0
    %1886 = vmatprep.subr.mxu0 0.0
    %1887 = vmatpush2.xpose.msra.mxu0 0.0
    %1888 = vmatprep.mubr.f32.mxu0 0.0
    %1889 = vmatmul.mubr.f32.gmra.mxu0 %v1819
    %v1890 = vpop.f32.mrf.mxu0
    %v1891 = vadd.f32 %v514, %v1890
    %v1892 = vpop.f32.mrf.mxu0
    %1893 = vdwg.mxu0
    %1894 = vmatprep.subr.mxu0 0.0
    %1895 = vmatpush1.msra.mxu0 0.0
    %1896 = vmatprep.subr.mxu0 0.0
    %1897 = vmatpush1.msra.mxu0 0.0
    %1898 = vmatprep.subr.mxu0 0.0
    %1899 = vmatpush1.msra.mxu0 0.0
    %1900 = vmatprep.subr.mxu0 0.0
    %1901 = vmatpush1.msra.mxu0 0.0
    %1902 = vmatprep.subr.mxu0 0.0
    %1903 = vmatpush1.msra.mxu0 0.0
    %1904 = vmatprep.subr.mxu0 0.0
    %1905 = vmatpush1.msra.mxu0 0.0
    %1906 = vmatprep.subr.mxu0 0.0
    %1907 = vmatpush1.msra.mxu0 0.0
    %1908 = vmatprep.subr.mxu0 0.0
    %1909 = vmatpush1.msra.mxu0 0.0
    %1910 = vmatprep.subr.mxu0 0.0
    %1911 = vmatpush1.msra.mxu0 0.0
    %1912 = vmatprep.subr.mxu0 0.0
    %1913 = vmatpush1.msra.mxu0 0.0
    %1914 = vmatprep.subr.mxu0 0.0
    %1915 = vmatpush1.msra.mxu0 0.0
    %1916 = vmatprep.subr.mxu0 0.0
    %1917 = vmatpush1.msra.mxu0 0.0
    %1918 = vmatprep.subr.mxu0 0.0
    %1919 = vmatpush1.msra.mxu0 0.0
    %1920 = vmatprep.subr.mxu0 0.0
    %1921 = vmatpush1.msra.mxu0 0.0
    %1922 = vmatprep.subr.mxu0 0.0
    %1923 = vmatpush1.msra.mxu0 %v503
    %1924 = vmatprep.subr.mxu0 0.0
    %1925 = vmatpush1.msra.mxu0 %v502
    %1926 = vmatprep.subr.mxu0 0.0
    %1927 = vmatpush2.msra.mxu0 0.0
    %1928 = vmatprep.subr.mxu0 0.0
    %1929 = vmatpush2.msra.mxu0 0.0
    %1930 = vmatprep.subr.mxu0 0.0
    %1931 = vmatpush2.msra.mxu0 0.0
    %1932 = vmatprep.subr.mxu0 0.0
    %1933 = vmatpush2.msra.mxu0 0.0
    %1934 = vmatprep.subr.mxu0 0.0
    %1935 = vmatpush2.msra.mxu0 0.0
    %1936 = vmatprep.subr.mxu0 0.0
    %1937 = vmatpush2.msra.mxu0 0.0
    %1938 = vmatprep.subr.mxu0 0.0
    %1939 = vmatpush2.msra.mxu0 0.0
    %1940 = vmatprep.subr.mxu0 0.0
    %1941 = vmatpush2.msra.mxu0 0.0
    %1942 = vmatprep.subr.mxu0 0.0
    %1943 = vmatpush2.msra.mxu0 0.0
    %1944 = vmatprep.subr.mxu0 0.0
    %1945 = vmatpush2.msra.mxu0 0.0
    %1946 = vmatprep.subr.mxu0 0.0
    %1947 = vmatpush2.msra.mxu0 0.0
    %1948 = vmatprep.subr.mxu0 0.0
    %1949 = vmatpush2.msra.mxu0 0.0
    %1950 = vmatprep.subr.mxu0 0.0
    %1951 = vmatpush2.msra.mxu0 0.0
    %1952 = vmatprep.subr.mxu0 0.0
    %1953 = vmatpush2.msra.mxu0 0.0
    %1954 = vmatprep.subr.mxu0 0.0
    %1955 = vmatpush2.msra.mxu0 0.0
    %1956 = vmatprep.subr.mxu0 0.0
    %1957 = vmatpush2.msra.mxu0 0.0
    %1958 = vmatprep.mubr.f32.mxu0 0.0
    %1959 = vmatmul.mubr.f32.gmra.mxu0 %v1819
    %v1960 = vpop.f32.mrf.mxu0
    %v1961 = vadd.f32 0.0, %v1960
    %v1962 = vpop.f32.mrf.mxu0
    %1963 = vdwg.mxu0
    %v1964 = vsel %vm275, %v1891, -inf
    %1965 = vmax.xlane.f32.xlu0 %v1964
    %v1966 = vpop.xlane.xlu0 %1965
    %v1967 = vsel %vm665, %v1961, -inf
    %1968 = vmax.xlane.f32.xlu0 %v1967
    %v1969 = vpop.xlane.xlu0 %1968
    %v1970 = vmax.f32 %v1966, %v1969
    %v1971 = vsub.f32 %v1891, %v1970
    %v1972 = vmul.f32 %v1971, 1.442695
    %v1973 = vpow.pop %v1972
    %v1974 = vsub.f32 %v1961, %v1970
    %v1975 = vmul.f32 %v1974, 1.442695
    %v1976 = vpow.pop %v1975
    %v1977 = vsel %vm275, %v1973, 0.0
    %1978 = vadd.xlane.f32.xlu0 %v1977
    %v1979 = vpop.xlane.xlu0 %1978
    %v1980 = vsel %vm665, %v1976, 0.0
    %1981 = vadd.xlane.f32.xlu0 %v1980
    %v1982 = vpop.xlane.xlu0 %1981
    %v1983 = vadd.f32 %v1979, %v1982
    %v1984 = vrcp.pop %v1983
    %v1986 = vsel %vm665, %v1976, 0
    %1988 = vmatprep.subr.mxu0 0.0
    %1989 = vmatpush1.msra.mxu0 0.0
    %1990 = vmatprep.subr.mxu0 0.0
    %1991 = vmatpush1.msra.mxu0 0.0
    %1992 = vmatprep.subr.mxu0 0.0
    %1993 = vmatpush1.msra.mxu0 0.0
    %1994 = vmatprep.subr.mxu0 0.0
    %1995 = vmatpush1.msra.mxu0 0.0
    %1996 = vmatprep.subr.mxu0 0.0
    %1997 = vmatpush1.msra.mxu0 0.0
    %1998 = vmatprep.subr.mxu0 0.0
    %1999 = vmatpush1.msra.mxu0 0.0
    %2000 = vmatprep.subr.mxu0 0.0
    %2001 = vmatpush1.msra.mxu0 0.0
    %2002 = vmatprep.subr.mxu0 0.0
    %2003 = vmatpush1.msra.mxu0 0.0
    %2004 = vmatprep.subr.mxu0 0.0
    %2005 = vmatpush1.msra.mxu0 0.0
    %2006 = vmatprep.subr.mxu0 0.0
    %2007 = vmatpush1.msra.mxu0 0.0
    %2008 = vmatprep.subr.mxu0 0.0
    %2009 = vmatpush1.msra.mxu0 0.0
    %2010 = vmatprep.subr.mxu0 0.0
    %2011 = vmatpush1.msra.mxu0 0.0
    %2012 = vmatprep.subr.mxu0 0.0
    %2013 = vmatpush1.msra.mxu0 0.0
    %2014 = vmatprep.subr.mxu0 0.0
    %2015 = vmatpush1.msra.mxu0 0.0
    %2016 = vmatprep.subr.mxu0 0.0
    %2017 = vmatpush1.msra.mxu0 0.0
    %2018 = vmatprep.subr.mxu0 0.0
    %2019 = vmatpush1.msra.mxu0 %v689
    %2020 = vmatprep.subr.mxu0 0.0
    %2021 = vmatpush2.msra.mxu0 0.0
    %2022 = vmatprep.subr.mxu0 0.0
    %2023 = vmatpush2.msra.mxu0 0.0
    %2024 = vmatprep.subr.mxu0 0.0
    %2025 = vmatpush2.msra.mxu0 0.0
    %2026 = vmatprep.subr.mxu0 0.0
    %2027 = vmatpush2.msra.mxu0 0.0
    %2028 = vmatprep.subr.mxu0 0.0
    %2029 = vmatpush2.msra.mxu0 0.0
    %2030 = vmatprep.subr.mxu0 0.0
    %2031 = vmatpush2.msra.mxu0 0.0
    %2032 = vmatprep.subr.mxu0 0.0
    %2033 = vmatpush2.msra.mxu0 0.0
    %2034 = vmatprep.subr.mxu0 0.0
    %2035 = vmatpush2.msra.mxu0 0.0
    %2036 = vmatprep.subr.mxu0 0.0
    %2037 = vmatpush2.msra.mxu0 0.0
    %2038 = vmatprep.subr.mxu0 0.0
    %2039 = vmatpush2.msra.mxu0 0.0
    %2040 = vmatprep.subr.mxu0 0.0
    %2041 = vmatpush2.msra.mxu0 0.0
    %2042 = vmatprep.subr.mxu0 0.0
    %2043 = vmatpush2.msra.mxu0 0.0
    %2044 = vmatprep.subr.mxu0 0.0
    %2045 = vmatpush2.msra.mxu0 0.0
    %2046 = vmatprep.subr.mxu0 0.0
    %2047 = vmatpush2.msra.mxu0 0.0
    %2048 = vmatprep.subr.mxu0 0.0
    %2049 = vmatpush2.msra.mxu0 0.0
    %2050 = vmatprep.subr.mxu0 0.0
    %2051 = vmatpush2.msra.mxu0 0.0
    %2052 = vmatprep.mubr.f32.mxu0 0.0
    %2053 = vmatmul.mubr.f32.gmra.mxu0 %v1986
    %v2054 = vpop.f32.mrf.mxu0
    %v2055 = vadd.f32 0.0, %v2054
    %v2056 = vpop.f32.mrf.mxu0
    %2057 = vdwg.mxu0
    %v2059 = vsel %vm275, %v1973, 0
    %2061 = vmatprep.subr.mxu0 0.0
    %2062 = vmatpush1.msra.mxu0 0.0
    %2063 = vmatprep.subr.mxu0 0.0
    %2064 = vmatpush1.msra.mxu0 0.0
    %2065 = vmatprep.subr.mxu0 0.0
    %2066 = vmatpush1.msra.mxu0 0.0
    %2067 = vmatprep.subr.mxu0 0.0
    %2068 = vmatpush1.msra.mxu0 0.0
    %2069 = vmatprep.subr.mxu0 0.0
    %2070 = vmatpush1.msra.mxu0 0.0
    %2071 = vmatprep.subr.mxu0 0.0
    %2072 = vmatpush1.msra.mxu0 0.0
    %2073 = vmatprep.subr.mxu0 0.0
    %2074 = vmatpush1.msra.mxu0 0.0
    %2075 = vmatprep.subr.mxu0 0.0
    %2076 = vmatpush1.msra.mxu0 0.0
    %2077 = vmatprep.subr.mxu0 0.0
    %2078 = vmatpush1.msra.mxu0 0.0
    %2079 = vmatprep.subr.mxu0 0.0
    %2080 = vmatpush1.msra.mxu0 0.0
    %2081 = vmatprep.subr.mxu0 0.0
    %2082 = vmatpush1.msra.mxu0 0.0
    %2083 = vmatprep.subr.mxu0 0.0
    %2084 = vmatpush1.msra.mxu0 0.0
    %2085 = vmatprep.subr.mxu0 0.0
    %2086 = vmatpush1.msra.mxu0 0.0
    %2087 = vmatprep.subr.mxu0 0.0
    %2088 = vmatpush1.msra.mxu0 0.0
    %2089 = vmatprep.subr.mxu0 0.0
    %2090 = vmatpush1.msra.mxu0 0.0
    %2091 = vmatprep.subr.mxu0 0.0
    %2092 = vmatpush1.msra.mxu0 %v440
    %2093 = vmatprep.subr.mxu0 0.0
    %2094 = vmatpush2.msra.mxu0 0.0
    %2095 = vmatprep.subr.mxu0 0.0
    %2096 = vmatpush2.msra.mxu0 0.0
    %2097 = vmatprep.subr.mxu0 0.0
    %2098 = vmatpush2.msra.mxu0 0.0
    %2099 = vmatprep.subr.mxu0 0.0
    %2100 = vmatpush2.msra.mxu0 0.0
    %2101 = vmatprep.subr.mxu0 0.0
    %2102 = vmatpush2.msra.mxu0 0.0
    %2103 = vmatprep.subr.mxu0 0.0
    %2104 = vmatpush2.msra.mxu0 0.0
    %2105 = vmatprep.subr.mxu0 0.0
    %2106 = vmatpush2.msra.mxu0 0.0
    %2107 = vmatprep.subr.mxu0 0.0
    %2108 = vmatpush2.msra.mxu0 0.0
    %2109 = vmatprep.subr.mxu0 0.0
    %2110 = vmatpush2.msra.mxu0 0.0
    %2111 = vmatprep.subr.mxu0 0.0
    %2112 = vmatpush2.msra.mxu0 0.0
    %2113 = vmatprep.subr.mxu0 0.0
    %2114 = vmatpush2.msra.mxu0 0.0
    %2115 = vmatprep.subr.mxu0 0.0
    %2116 = vmatpush2.msra.mxu0 0.0
    %2117 = vmatprep.subr.mxu0 0.0
    %2118 = vmatpush2.msra.mxu0 0.0
    %2119 = vmatprep.subr.mxu0 0.0
    %2120 = vmatpush2.msra.mxu0 0.0
    %2121 = vmatprep.subr.mxu0 0.0
    %2122 = vmatpush2.msra.mxu0 0.0
    %2123 = vmatprep.subr.mxu0 0.0
    %2124 = vmatpush2.msra.mxu0 0.0
    %2125 = vmatprep.mubr.f32.mxu0 0.0
    %2126 = vmatmul.mubr.f32.gmra.mxu0 %v2059
    %v2127 = vpop.f32.mrf.mxu0
    %v2128 = vadd.f32 %v2055, %v2127
    %v2129 = vpop.f32.mrf.mxu0
    %2130 = vdwg.mxu0
    %v2131 = vmul.f32 %v2128, %v1984
    %2132 = vrot.lane.b32.xlu0 %v463, 112
    %v2133 = vpop.permute.xlu0 %2132
    %2134 = vrot.lane.b32.xlu0 %v477, 112
    %v2135 = vpop.permute.xlu0 %2134
    %v2136 = vsel %vm515, %v2133, 0
    %v2138 = vsel %vm515, %v2135, 0
    %2140 = vmatprep.subr.mxu0 0.0
    %2141 = vmatpush1.xpose.msra.mxu0 0.0
    %2142 = vmatprep.subr.mxu0 0.0
    %2143 = vmatpush1.xpose.msra.mxu0 0.0
    %2144 = vmatprep.subr.mxu0 0.0
    %2145 = vmatpush1.xpose.msra.mxu0 0.0
    %2146 = vmatprep.subr.mxu0 0.0
    %2147 = vmatpush1.xpose.msra.mxu0 0.0
    %2148 = vmatprep.subr.mxu0 0.0
    %2149 = vmatpush1.xpose.msra.mxu0 0.0
    %2150 = vmatprep.subr.mxu0 0.0
    %2151 = vmatpush1.xpose.msra.mxu0 0.0
    %2152 = vmatprep.subr.mxu0 0.0
    %2153 = vmatpush1.xpose.msra.mxu0 0.0
    %2154 = vmatprep.subr.mxu0 0.0
    %2155 = vmatpush1.xpose.msra.mxu0 0.0
    %2156 = vmatprep.subr.mxu0 0.0
    %2157 = vmatpush1.xpose.msra.mxu0 0.0
    %2158 = vmatprep.subr.mxu0 0.0
    %2159 = vmatpush1.xpose.msra.mxu0 0.0
    %2160 = vmatprep.subr.mxu0 0.0
    %2161 = vmatpush1.xpose.msra.mxu0 0.0
    %2162 = vmatprep.subr.mxu0 0.0
    %2163 = vmatpush1.xpose.msra.mxu0 0.0
    %2164 = vmatprep.subr.mxu0 0.0
    %2165 = vmatpush1.xpose.msra.mxu0 0.0
    %2166 = vmatprep.subr.mxu0 0.0
    %2167 = vmatpush1.xpose.msra.mxu0 0.0
    %2168 = vmatprep.subr.mxu0 0.0
    %2169 = vmatpush1.xpose.msra.mxu0 0.0
    %2170 = vmatprep.subr.mxu0 0.0
    %2171 = vmatpush1.xpose.msra.mxu0 %v2138
    %2172 = vmatprep.subr.mxu0 0.0
    %2173 = vmatpush2.xpose.msra.mxu0 0.0
    %2174 = vmatprep.subr.mxu0 0.0
    %2175 = vmatpush2.xpose.msra.mxu0 0.0
    %2176 = vmatprep.subr.mxu0 0.0
    %2177 = vmatpush2.xpose.msra.mxu0 0.0
    %2178 = vmatprep.subr.mxu0 0.0
    %2179 = vmatpush2.xpose.msra.mxu0 0.0
    %2180 = vmatprep.subr.mxu0 0.0
    %2181 = vmatpush2.xpose.msra.mxu0 0.0
    %2182 = vmatprep.subr.mxu0 0.0
    %2183 = vmatpush2.xpose.msra.mxu0 0.0
    %2184 = vmatprep.subr.mxu0 0.0
    %2185 = vmatpush2.xpose.msra.mxu0 0.0
    %2186 = vmatprep.subr.mxu0 0.0
    %2187 = vmatpush2.xpose.msra.mxu0 0.0
    %2188 = vmatprep.subr.mxu0 0.0
    %2189 = vmatpush2.xpose.msra.mxu0 0.0
    %2190 = vmatprep.subr.mxu0 0.0
    %2191 = vmatpush2.xpose.msra.mxu0 0.0
    %2192 = vmatprep.subr.mxu0 0.0
    %2193 = vmatpush2.xpose.msra.mxu0 0.0
    %2194 = vmatprep.subr.mxu0 0.0
    %2195 = vmatpush2.xpose.msra.mxu0 0.0
    %2196 = vmatprep.subr.mxu0 0.0
    %2197 = vmatpush2.xpose.msra.mxu0 0.0
    %2198 = vmatprep.subr.mxu0 0.0
    %2199 = vmatpush2.xpose.msra.mxu0 0.0
    %2200 = vmatprep.subr.mxu0 0.0
    %2201 = vmatpush2.xpose.msra.mxu0 0.0
    %2202 = vmatprep.subr.mxu0 0.0
    %2203 = vmatpush2.xpose.msra.mxu0 0.0
    %2204 = vmatprep.mubr.f32.mxu0 0.0
    %2205 = vmatmul.mubr.f32.gmra.mxu0 %v2136
    %v2206 = vpop.f32.mrf.mxu0
    %v2207 = vadd.f32 %v514, %v2206
    %v2208 = vpop.f32.mrf.mxu0
    %2209 = vdwg.mxu0
    %2210 = vmatprep.subr.mxu0 0.0
    %2211 = vmatpush1.msra.mxu0 0.0
    %2212 = vmatprep.subr.mxu0 0.0
    %2213 = vmatpush1.msra.mxu0 0.0
    %2214 = vmatprep.subr.mxu0 0.0
    %2215 = vmatpush1.msra.mxu0 0.0
    %2216 = vmatprep.subr.mxu0 0.0
    %2217 = vmatpush1.msra.mxu0 0.0
    %2218 = vmatprep.subr.mxu0 0.0
    %2219 = vmatpush1.msra.mxu0 0.0
    %2220 = vmatprep.subr.mxu0 0.0
    %2221 = vmatpush1.msra.mxu0 0.0
    %2222 = vmatprep.subr.mxu0 0.0
    %2223 = vmatpush1.msra.mxu0 0.0
    %2224 = vmatprep.subr.mxu0 0.0
    %2225 = vmatpush1.msra.mxu0 0.0
    %2226 = vmatprep.subr.mxu0 0.0
    %2227 = vmatpush1.msra.mxu0 0.0
    %2228 = vmatprep.subr.mxu0 0.0
    %2229 = vmatpush1.msra.mxu0 0.0
    %2230 = vmatprep.subr.mxu0 0.0
    %2231 = vmatpush1.msra.mxu0 0.0
    %2232 = vmatprep.subr.mxu0 0.0
    %2233 = vmatpush1.msra.mxu0 0.0
    %2234 = vmatprep.subr.mxu0 0.0
    %2235 = vmatpush1.msra.mxu0 0.0
    %2236 = vmatprep.subr.mxu0 0.0
    %2237 = vmatpush1.msra.mxu0 0.0
    %2238 = vmatprep.subr.mxu0 0.0
    %2239 = vmatpush1.msra.mxu0 %v505
    %2240 = vmatprep.subr.mxu0 0.0
    %2241 = vmatpush1.msra.mxu0 %v504
    %2242 = vmatprep.subr.mxu0 0.0
    %2243 = vmatpush2.msra.mxu0 0.0
    %2244 = vmatprep.subr.mxu0 0.0
    %2245 = vmatpush2.msra.mxu0 0.0
    %2246 = vmatprep.subr.mxu0 0.0
    %2247 = vmatpush2.msra.mxu0 0.0
    %2248 = vmatprep.subr.mxu0 0.0
    %2249 = vmatpush2.msra.mxu0 0.0
    %2250 = vmatprep.subr.mxu0 0.0
    %2251 = vmatpush2.msra.mxu0 0.0
    %2252 = vmatprep.subr.mxu0 0.0
    %2253 = vmatpush2.msra.mxu0 0.0
    %2254 = vmatprep.subr.mxu0 0.0
    %2255 = vmatpush2.msra.mxu0 0.0
    %2256 = vmatprep.subr.mxu0 0.0
    %2257 = vmatpush2.msra.mxu0 0.0
    %2258 = vmatprep.subr.mxu0 0.0
    %2259 = vmatpush2.msra.mxu0 0.0
    %2260 = vmatprep.subr.mxu0 0.0
    %2261 = vmatpush2.msra.mxu0 0.0
    %2262 = vmatprep.subr.mxu0 0.0
    %2263 = vmatpush2.msra.mxu0 0.0
    %2264 = vmatprep.subr.mxu0 0.0
    %2265 = vmatpush2.msra.mxu0 0.0
    %2266 = vmatprep.subr.mxu0 0.0
    %2267 = vmatpush2.msra.mxu0 0.0
    %2268 = vmatprep.subr.mxu0 0.0
    %2269 = vmatpush2.msra.mxu0 0.0
    %2270 = vmatprep.subr.mxu0 0.0
    %2271 = vmatpush2.msra.mxu0 0.0
    %2272 = vmatprep.subr.mxu0 0.0
    %2273 = vmatpush2.msra.mxu0 0.0
    %2274 = vmatprep.mubr.f32.mxu0 0.0
    %2275 = vmatmul.mubr.f32.gmra.mxu0 %v2136
    %v2276 = vpop.f32.mrf.mxu0
    %v2277 = vadd.f32 0.0, %v2276
    %v2278 = vpop.f32.mrf.mxu0
    %2279 = vdwg.mxu0
    %v2280 = vsel %vm275, %v2207, -inf
    %2281 = vmax.xlane.f32.xlu0 %v2280
    %v2282 = vpop.xlane.xlu0 %2281
    %v2283 = vsel %vm665, %v2277, -inf
    %2284 = vmax.xlane.f32.xlu0 %v2283
    %v2285 = vpop.xlane.xlu0 %2284
    %v2286 = vmax.f32 %v2282, %v2285
    %v2287 = vsub.f32 %v2207, %v2286
    %v2288 = vmul.f32 %v2287, 1.442695
    %v2289 = vpow.pop %v2288
    %v2290 = vsub.f32 %v2277, %v2286
    %v2291 = vmul.f32 %v2290, 1.442695
    %v2292 = vpow.pop %v2291
    %v2293 = vsel %vm275, %v2289, 0.0
    %2294 = vadd.xlane.f32.xlu0 %v2293
    %v2295 = vpop.xlane.xlu0 %2294
    %v2296 = vsel %vm665, %v2292, 0.0
    %2297 = vadd.xlane.f32.xlu0 %v2296
    %v2298 = vpop.xlane.xlu0 %2297
    %v2299 = vadd.f32 %v2295, %v2298
    %v2300 = vrcp.pop %v2299
    %v2302 = vsel %vm665, %v2292, 0
    %2304 = vmatprep.subr.mxu0 0.0
    %2305 = vmatpush1.msra.mxu0 0.0
    %2306 = vmatprep.subr.mxu0 0.0
    %2307 = vmatpush1.msra.mxu0 0.0
    %2308 = vmatprep.subr.mxu0 0.0
    %2309 = vmatpush1.msra.mxu0 0.0
    %2310 = vmatprep.subr.mxu0 0.0
    %2311 = vmatpush1.msra.mxu0 0.0
    %2312 = vmatprep.subr.mxu0 0.0
    %2313 = vmatpush1.msra.mxu0 0.0
    %2314 = vmatprep.subr.mxu0 0.0
    %2315 = vmatpush1.msra.mxu0 0.0
    %2316 = vmatprep.subr.mxu0 0.0
    %2317 = vmatpush1.msra.mxu0 0.0
    %2318 = vmatprep.subr.mxu0 0.0
    %2319 = vmatpush1.msra.mxu0 0.0
    %2320 = vmatprep.subr.mxu0 0.0
    %2321 = vmatpush1.msra.mxu0 0.0
    %2322 = vmatprep.subr.mxu0 0.0
    %2323 = vmatpush1.msra.mxu0 0.0
    %2324 = vmatprep.subr.mxu0 0.0
    %2325 = vmatpush1.msra.mxu0 0.0
    %2326 = vmatprep.subr.mxu0 0.0
    %2327 = vmatpush1.msra.mxu0 0.0
    %2328 = vmatprep.subr.mxu0 0.0
    %2329 = vmatpush1.msra.mxu0 0.0
    %2330 = vmatprep.subr.mxu0 0.0
    %2331 = vmatpush1.msra.mxu0 0.0
    %2332 = vmatprep.subr.mxu0 0.0
    %2333 = vmatpush1.msra.mxu0 0.0
    %2334 = vmatprep.subr.mxu0 0.0
    %2335 = vmatpush1.msra.mxu0 %v1008
    %2336 = vmatprep.subr.mxu0 0.0
    %2337 = vmatpush2.msra.mxu0 0.0
    %2338 = vmatprep.subr.mxu0 0.0
    %2339 = vmatpush2.msra.mxu0 0.0
    %2340 = vmatprep.subr.mxu0 0.0
    %2341 = vmatpush2.msra.mxu0 0.0
    %2342 = vmatprep.subr.mxu0 0.0
    %2343 = vmatpush2.msra.mxu0 0.0
    %2344 = vmatprep.subr.mxu0 0.0
    %2345 = vmatpush2.msra.mxu0 0.0
    %2346 = vmatprep.subr.mxu0 0.0
    %2347 = vmatpush2.msra.mxu0 0.0
    %2348 = vmatprep.subr.mxu0 0.0
    %2349 = vmatpush2.msra.mxu0 0.0
    %2350 = vmatprep.subr.mxu0 0.0
    %2351 = vmatpush2.msra.mxu0 0.0
    %2352 = vmatprep.subr.mxu0 0.0
    %2353 = vmatpush2.msra.mxu0 0.0
    %2354 = vmatprep.subr.mxu0 0.0
    %2355 = vmatpush2.msra.mxu0 0.0
    %2356 = vmatprep.subr.mxu0 0.0
    %2357 = vmatpush2.msra.mxu0 0.0
    %2358 = vmatprep.subr.mxu0 0.0
    %2359 = vmatpush2.msra.mxu0 0.0
    %2360 = vmatprep.subr.mxu0 0.0
    %2361 = vmatpush2.msra.mxu0 0.0
    %2362 = vmatprep.subr.mxu0 0.0
    %2363 = vmatpush2.msra.mxu0 0.0
    %2364 = vmatprep.subr.mxu0 0.0
    %2365 = vmatpush2.msra.mxu0 0.0
    %2366 = vmatprep.subr.mxu0 0.0
    %2367 = vmatpush2.msra.mxu0 0.0
    %2368 = vmatprep.mubr.f32.mxu0 0.0
    %2369 = vmatmul.mubr.f32.gmra.mxu0 %v2302
    %v2370 = vpop.f32.mrf.mxu0
    %v2371 = vadd.f32 0.0, %v2370
    %v2372 = vpop.f32.mrf.mxu0
    %2373 = vdwg.mxu0
    %2375 = vrot.lane.b32.xlu0 %v440, 112
    %v2376 = vpop.permute.xlu0 %2375
    %v2379 = vsel %vm275, %v2289, 0
    %2381 = vmatprep.subr.mxu0 0.0
    %2382 = vmatpush1.msra.mxu0 0.0
    %2383 = vmatprep.subr.mxu0 0.0
    %2384 = vmatpush1.msra.mxu0 0.0
    %2385 = vmatprep.subr.mxu0 0.0
    %2386 = vmatpush1.msra.mxu0 0.0
    %2387 = vmatprep.subr.mxu0 0.0
    %2388 = vmatpush1.msra.mxu0 0.0
    %2389 = vmatprep.subr.mxu0 0.0
    %2390 = vmatpush1.msra.mxu0 0.0
    %2391 = vmatprep.subr.mxu0 0.0
    %2392 = vmatpush1.msra.mxu0 0.0
    %2393 = vmatprep.subr.mxu0 0.0
    %2394 = vmatpush1.msra.mxu0 0.0
    %2395 = vmatprep.subr.mxu0 0.0
    %2396 = vmatpush1.msra.mxu0 0.0
    %2397 = vmatprep.subr.mxu0 0.0
    %2398 = vmatpush1.msra.mxu0 0.0
    %2399 = vmatprep.subr.mxu0 0.0
    %2400 = vmatpush1.msra.mxu0 0.0
    %2401 = vmatprep.subr.mxu0 0.0
    %2402 = vmatpush1.msra.mxu0 0.0
    %2403 = vmatprep.subr.mxu0 0.0
    %2404 = vmatpush1.msra.mxu0 0.0
    %2405 = vmatprep.subr.mxu0 0.0
    %2406 = vmatpush1.msra.mxu0 0.0
    %2407 = vmatprep.subr.mxu0 0.0
    %2408 = vmatpush1.msra.mxu0 0.0
    %2409 = vmatprep.subr.mxu0 0.0
    %2410 = vmatpush1.msra.mxu0 0.0
    %2411 = vmatprep.subr.mxu0 0.0
    %2412 = vmatpush1.msra.mxu0 %v2376
    %2413 = vmatprep.subr.mxu0 0.0
    %2414 = vmatpush2.msra.mxu0 0.0
    %2415 = vmatprep.subr.mxu0 0.0
    %2416 = vmatpush2.msra.mxu0 0.0
    %2417 = vmatprep.subr.mxu0 0.0
    %2418 = vmatpush2.msra.mxu0 0.0
    %2419 = vmatprep.subr.mxu0 0.0
    %2420 = vmatpush2.msra.mxu0 0.0
    %2421 = vmatprep.subr.mxu0 0.0
    %2422 = vmatpush2.msra.mxu0 0.0
    %2423 = vmatprep.subr.mxu0 0.0
    %2424 = vmatpush2.msra.mxu0 0.0
    %2425 = vmatprep.subr.mxu0 0.0
    %2426 = vmatpush2.msra.mxu0 0.0
    %2427 = vmatprep.subr.mxu0 0.0
    %2428 = vmatpush2.msra.mxu0 0.0
    %2429 = vmatprep.subr.mxu0 0.0
    %2430 = vmatpush2.msra.mxu0 0.0
    %2431 = vmatprep.subr.mxu0 0.0
    %2432 = vmatpush2.msra.mxu0 0.0
    %2433 = vmatprep.subr.mxu0 0.0
    %2434 = vmatpush2.msra.mxu0 0.0
    %2435 = vmatprep.subr.mxu0 0.0
    %2436 = vmatpush2.msra.mxu0 0.0
    %2437 = vmatprep.subr.mxu0 0.0
    %2438 = vmatpush2.msra.mxu0 0.0
    %2439 = vmatprep.subr.mxu0 0.0
    %2440 = vmatpush2.msra.mxu0 0.0
    %2441 = vmatprep.subr.mxu0 0.0
    %2442 = vmatpush2.msra.mxu0 0.0
    %2443 = vmatprep.subr.mxu0 0.0
    %2444 = vmatpush2.msra.mxu0 0.0
    %2445 = vmatprep.mubr.f32.mxu0 0.0
    %2446 = vmatmul.mubr.f32.gmra.mxu0 %v2379
    %v2447 = vpop.f32.mrf.mxu0
    %v2448 = vadd.f32 %v2371, %v2447
    %v2449 = vpop.f32.mrf.mxu0
    %2450 = vdwg.mxu0
    %v2451 = vmul.f32 %v2448, %v2300
    %2452 = vrot.lane.b32.xlu0 %v463, 96
    %v2453 = vpop.permute.xlu0 %2452
    %2454 = vrot.lane.b32.xlu0 %v477, 96
    %v2455 = vpop.permute.xlu0 %2454
    %v2456 = vsel %vm515, %v2453, 0
    %v2458 = vsel %vm515, %v2455, 0
    %2460 = vmatprep.subr.mxu0 0.0
    %2461 = vmatpush1.xpose.msra.mxu0 0.0
    %2462 = vmatprep.subr.mxu0 0.0
    %2463 = vmatpush1.xpose.msra.mxu0 0.0
    %2464 = vmatprep.subr.mxu0 0.0
    %2465 = vmatpush1.xpose.msra.mxu0 0.0
    %2466 = vmatprep.subr.mxu0 0.0
    %2467 = vmatpush1.xpose.msra.mxu0 0.0
    %2468 = vmatprep.subr.mxu0 0.0
    %2469 = vmatpush1.xpose.msra.mxu0 0.0
    %2470 = vmatprep.subr.mxu0 0.0
    %2471 = vmatpush1.xpose.msra.mxu0 0.0
    %2472 = vmatprep.subr.mxu0 0.0
    %2473 = vmatpush1.xpose.msra.mxu0 0.0
    %2474 = vmatprep.subr.mxu0 0.0
    %2475 = vmatpush1.xpose.msra.mxu0 0.0
    %2476 = vmatprep.subr.mxu0 0.0
    %2477 = vmatpush1.xpose.msra.mxu0 0.0
    %2478 = vmatprep.subr.mxu0 0.0
    %2479 = vmatpush1.xpose.msra.mxu0 0.0
    %2480 = vmatprep.subr.mxu0 0.0
    %2481 = vmatpush1.xpose.msra.mxu0 0.0
    %2482 = vmatprep.subr.mxu0 0.0
    %2483 = vmatpush1.xpose.msra.mxu0 0.0
    %2484 = vmatprep.subr.mxu0 0.0
    %2485 = vmatpush1.xpose.msra.mxu0 0.0
    %2486 = vmatprep.subr.mxu0 0.0
    %2487 = vmatpush1.xpose.msra.mxu0 0.0
    %2488 = vmatprep.subr.mxu0 0.0
    %2489 = vmatpush1.xpose.msra.mxu0 0.0
    %2490 = vmatprep.subr.mxu0 0.0
    %2491 = vmatpush1.xpose.msra.mxu0 %v2458
    %2492 = vmatprep.subr.mxu0 0.0
    %2493 = vmatpush2.xpose.msra.mxu0 0.0
    %2494 = vmatprep.subr.mxu0 0.0
    %2495 = vmatpush2.xpose.msra.mxu0 0.0
    %2496 = vmatprep.subr.mxu0 0.0
    %2497 = vmatpush2.xpose.msra.mxu0 0.0
    %2498 = vmatprep.subr.mxu0 0.0
    %2499 = vmatpush2.xpose.msra.mxu0 0.0
    %2500 = vmatprep.subr.mxu0 0.0
    %2501 = vmatpush2.xpose.msra.mxu0 0.0
    %2502 = vmatprep.subr.mxu0 0.0
    %2503 = vmatpush2.xpose.msra.mxu0 0.0
    %2504 = vmatprep.subr.mxu0 0.0
    %2505 = vmatpush2.xpose.msra.mxu0 0.0
    %2506 = vmatprep.subr.mxu0 0.0
    %2507 = vmatpush2.xpose.msra.mxu0 0.0
    %2508 = vmatprep.subr.mxu0 0.0
    %2509 = vmatpush2.xpose.msra.mxu0 0.0
    %2510 = vmatprep.subr.mxu0 0.0
    %2511 = vmatpush2.xpose.msra.mxu0 0.0
    %2512 = vmatprep.subr.mxu0 0.0
    %2513 = vmatpush2.xpose.msra.mxu0 0.0
    %2514 = vmatprep.subr.mxu0 0.0
    %2515 = vmatpush2.xpose.msra.mxu0 0.0
    %2516 = vmatprep.subr.mxu0 0.0
    %2517 = vmatpush2.xpose.msra.mxu0 0.0
    %2518 = vmatprep.subr.mxu0 0.0
    %2519 = vmatpush2.xpose.msra.mxu0 0.0
    %2520 = vmatprep.subr.mxu0 0.0
    %2521 = vmatpush2.xpose.msra.mxu0 0.0
    %2522 = vmatprep.subr.mxu0 0.0
    %2523 = vmatpush2.xpose.msra.mxu0 0.0
    %2524 = vmatprep.mubr.f32.mxu0 0.0
    %2525 = vmatmul.mubr.f32.gmra.mxu0 %v2456
    %v2526 = vpop.f32.mrf.mxu0
    %v2527 = vadd.f32 %v514, %v2526
    %v2528 = vpop.f32.mrf.mxu0
    %2529 = vdwg.mxu0
    %2530 = vmatprep.subr.mxu0 0.0
    %2531 = vmatpush1.msra.mxu0 0.0
    %2532 = vmatprep.subr.mxu0 0.0
    %2533 = vmatpush1.msra.mxu0 0.0
    %2534 = vmatprep.subr.mxu0 0.0
    %2535 = vmatpush1.msra.mxu0 0.0
    %2536 = vmatprep.subr.mxu0 0.0
    %2537 = vmatpush1.msra.mxu0 0.0
    %2538 = vmatprep.subr.mxu0 0.0
    %2539 = vmatpush1.msra.mxu0 0.0
    %2540 = vmatprep.subr.mxu0 0.0
    %2541 = vmatpush1.msra.mxu0 0.0
    %2542 = vmatprep.subr.mxu0 0.0
    %2543 = vmatpush1.msra.mxu0 0.0
    %2544 = vmatprep.subr.mxu0 0.0
    %2545 = vmatpush1.msra.mxu0 0.0
    %2546 = vmatprep.subr.mxu0 0.0
    %2547 = vmatpush1.msra.mxu0 0.0
    %2548 = vmatprep.subr.mxu0 0.0
    %2549 = vmatpush1.msra.mxu0 0.0
    %2550 = vmatprep.subr.mxu0 0.0
    %2551 = vmatpush1.msra.mxu0 0.0
    %2552 = vmatprep.subr.mxu0 0.0
    %2553 = vmatpush1.msra.mxu0 0.0
    %2554 = vmatprep.subr.mxu0 0.0
    %2555 = vmatpush1.msra.mxu0 0.0
    %2556 = vmatprep.subr.mxu0 0.0
    %2557 = vmatpush1.msra.mxu0 0.0
    %2558 = vmatprep.subr.mxu0 0.0
    %2559 = vmatpush1.msra.mxu0 %v507
    %2560 = vmatprep.subr.mxu0 0.0
    %2561 = vmatpush1.msra.mxu0 %v506
    %2562 = vmatprep.subr.mxu0 0.0
    %2563 = vmatpush2.msra.mxu0 0.0
    %2564 = vmatprep.subr.mxu0 0.0
    %2565 = vmatpush2.msra.mxu0 0.0
    %2566 = vmatprep.subr.mxu0 0.0
    %2567 = vmatpush2.msra.mxu0 0.0
    %2568 = vmatprep.subr.mxu0 0.0
    %2569 = vmatpush2.msra.mxu0 0.0
    %2570 = vmatprep.subr.mxu0 0.0
    %2571 = vmatpush2.msra.mxu0 0.0
    %2572 = vmatprep.subr.mxu0 0.0
    %2573 = vmatpush2.msra.mxu0 0.0
    %2574 = vmatprep.subr.mxu0 0.0
    %2575 = vmatpush2.msra.mxu0 0.0
    %2576 = vmatprep.subr.mxu0 0.0
    %2577 = vmatpush2.msra.mxu0 0.0
    %2578 = vmatprep.subr.mxu0 0.0
    %2579 = vmatpush2.msra.mxu0 0.0
    %2580 = vmatprep.subr.mxu0 0.0
    %2581 = vmatpush2.msra.mxu0 0.0
    %2582 = vmatprep.subr.mxu0 0.0
    %2583 = vmatpush2.msra.mxu0 0.0
    %2584 = vmatprep.subr.mxu0 0.0
    %2585 = vmatpush2.msra.mxu0 0.0
    %2586 = vmatprep.subr.mxu0 0.0
    %2587 = vmatpush2.msra.mxu0 0.0
    %2588 = vmatprep.subr.mxu0 0.0
    %2589 = vmatpush2.msra.mxu0 0.0
    %2590 = vmatprep.subr.mxu0 0.0
    %2591 = vmatpush2.msra.mxu0 0.0
    %2592 = vmatprep.subr.mxu0 0.0
    %2593 = vmatpush2.msra.mxu0 0.0
    %2594 = vmatprep.mubr.f32.mxu0 0.0
    %2595 = vmatmul.mubr.f32.gmra.mxu0 %v2456
    %v2596 = vpop.f32.mrf.mxu0
    %v2597 = vadd.f32 0.0, %v2596
    %v2598 = vpop.f32.mrf.mxu0
    %2599 = vdwg.mxu0
    %v2600 = vsel %vm275, %v2527, -inf
    %2601 = vmax.xlane.f32.xlu0 %v2600
    %v2602 = vpop.xlane.xlu0 %2601
    %v2603 = vsel %vm665, %v2597, -inf
    %2604 = vmax.xlane.f32.xlu0 %v2603
    %v2605 = vpop.xlane.xlu0 %2604
    %v2606 = vmax.f32 %v2602, %v2605
    %v2607 = vsub.f32 %v2527, %v2606
    %v2608 = vmul.f32 %v2607, 1.442695
    %v2609 = vpow.pop %v2608
    %v2610 = vsub.f32 %v2597, %v2606
    %v2611 = vmul.f32 %v2610, 1.442695
    %v2612 = vpow.pop %v2611
    %v2613 = vsel %vm275, %v2609, 0.0
    %2614 = vadd.xlane.f32.xlu0 %v2613
    %v2615 = vpop.xlane.xlu0 %2614
    %v2616 = vsel %vm665, %v2612, 0.0
    %2617 = vadd.xlane.f32.xlu0 %v2616
    %v2618 = vpop.xlane.xlu0 %2617
    %v2619 = vadd.f32 %v2615, %v2618
    %v2620 = vrcp.pop %v2619
    %v2622 = vsel %vm665, %v2612, 0
    %2624 = vmatprep.subr.mxu0 0.0
    %2625 = vmatpush1.msra.mxu0 0.0
    %2626 = vmatprep.subr.mxu0 0.0
    %2627 = vmatpush1.msra.mxu0 0.0
    %2628 = vmatprep.subr.mxu0 0.0
    %2629 = vmatpush1.msra.mxu0 0.0
    %2630 = vmatprep.subr.mxu0 0.0
    %2631 = vmatpush1.msra.mxu0 0.0
    %2632 = vmatprep.subr.mxu0 0.0
    %2633 = vmatpush1.msra.mxu0 0.0
    %2634 = vmatprep.subr.mxu0 0.0
    %2635 = vmatpush1.msra.mxu0 0.0
    %2636 = vmatprep.subr.mxu0 0.0
    %2637 = vmatpush1.msra.mxu0 0.0
    %2638 = vmatprep.subr.mxu0 0.0
    %2639 = vmatpush1.msra.mxu0 0.0
    %2640 = vmatprep.subr.mxu0 0.0
    %2641 = vmatpush1.msra.mxu0 0.0
    %2642 = vmatprep.subr.mxu0 0.0
    %2643 = vmatpush1.msra.mxu0 0.0
    %2644 = vmatprep.subr.mxu0 0.0
    %2645 = vmatpush1.msra.mxu0 0.0
    %2646 = vmatprep.subr.mxu0 0.0
    %2647 = vmatpush1.msra.mxu0 0.0
    %2648 = vmatprep.subr.mxu0 0.0
    %2649 = vmatpush1.msra.mxu0 0.0
    %2650 = vmatprep.subr.mxu0 0.0
    %2651 = vmatpush1.msra.mxu0 0.0
    %2652 = vmatprep.subr.mxu0 0.0
    %2653 = vmatpush1.msra.mxu0 0.0
    %2654 = vmatprep.subr.mxu0 0.0
    %2655 = vmatpush1.msra.mxu0 %v1331
    %2656 = vmatprep.subr.mxu0 0.0
    %2657 = vmatpush2.msra.mxu0 0.0
    %2658 = vmatprep.subr.mxu0 0.0
    %2659 = vmatpush2.msra.mxu0 0.0
    %2660 = vmatprep.subr.mxu0 0.0
    %2661 = vmatpush2.msra.mxu0 0.0
    %2662 = vmatprep.subr.mxu0 0.0
    %2663 = vmatpush2.msra.mxu0 0.0
    %2664 = vmatprep.subr.mxu0 0.0
    %2665 = vmatpush2.msra.mxu0 0.0
    %2666 = vmatprep.subr.mxu0 0.0
    %2667 = vmatpush2.msra.mxu0 0.0
    %2668 = vmatprep.subr.mxu0 0.0
    %2669 = vmatpush2.msra.mxu0 0.0
    %2670 = vmatprep.subr.mxu0 0.0
    %2671 = vmatpush2.msra.mxu0 0.0
    %2672 = vmatprep.subr.mxu0 0.0
    %2673 = vmatpush2.msra.mxu0 0.0
    %2674 = vmatprep.subr.mxu0 0.0
    %2675 = vmatpush2.msra.mxu0 0.0
    %2676 = vmatprep.subr.mxu0 0.0
    %2677 = vmatpush2.msra.mxu0 0.0
    %2678 = vmatprep.subr.mxu0 0.0
    %2679 = vmatpush2.msra.mxu0 0.0
    %2680 = vmatprep.subr.mxu0 0.0
    %2681 = vmatpush2.msra.mxu0 0.0
    %2682 = vmatprep.subr.mxu0 0.0
    %2683 = vmatpush2.msra.mxu0 0.0
    %2684 = vmatprep.subr.mxu0 0.0
    %2685 = vmatpush2.msra.mxu0 0.0
    %2686 = vmatprep.subr.mxu0 0.0
    %2687 = vmatpush2.msra.mxu0 0.0
    %2688 = vmatprep.mubr.f32.mxu0 0.0
    %2689 = vmatmul.mubr.f32.gmra.mxu0 %v2622
    %v2690 = vpop.f32.mrf.mxu0
    %v2691 = vadd.f32 0.0, %v2690
    %v2692 = vpop.f32.mrf.mxu0
    %2693 = vdwg.mxu0
    %2694 = vrot.lane.b32.xlu0 %v440, 96
    %v2695 = vpop.permute.xlu0 %2694
    %v2698 = vsel %vm275, %v2609, 0
    %2700 = vmatprep.subr.mxu0 0.0
    %2701 = vmatpush1.msra.mxu0 0.0
    %2702 = vmatprep.subr.mxu0 0.0
    %2703 = vmatpush1.msra.mxu0 0.0
    %2704 = vmatprep.subr.mxu0 0.0
    %2705 = vmatpush1.msra.mxu0 0.0
    %2706 = vmatprep.subr.mxu0 0.0
    %2707 = vmatpush1.msra.mxu0 0.0
    %2708 = vmatprep.subr.mxu0 0.0
    %2709 = vmatpush1.msra.mxu0 0.0
    %2710 = vmatprep.subr.mxu0 0.0
    %2711 = vmatpush1.msra.mxu0 0.0
    %2712 = vmatprep.subr.mxu0 0.0
    %2713 = vmatpush1.msra.mxu0 0.0
    %2714 = vmatprep.subr.mxu0 0.0
    %2715 = vmatpush1.msra.mxu0 0.0
    %2716 = vmatprep.subr.mxu0 0.0
    %2717 = vmatpush1.msra.mxu0 0.0
    %2718 = vmatprep.subr.mxu0 0.0
    %2719 = vmatpush1.msra.mxu0 0.0
    %2720 = vmatprep.subr.mxu0 0.0
    %2721 = vmatpush1.msra.mxu0 0.0
    %2722 = vmatprep.subr.mxu0 0.0
    %2723 = vmatpush1.msra.mxu0 0.0
    %2724 = vmatprep.subr.mxu0 0.0
    %2725 = vmatpush1.msra.mxu0 0.0
    %2726 = vmatprep.subr.mxu0 0.0
    %2727 = vmatpush1.msra.mxu0 0.0
    %2728 = vmatprep.subr.mxu0 0.0
    %2729 = vmatpush1.msra.mxu0 0.0
    %2730 = vmatprep.subr.mxu0 0.0
    %2731 = vmatpush1.msra.mxu0 %v2695
    %2732 = vmatprep.subr.mxu0 0.0
    %2733 = vmatpush2.msra.mxu0 0.0
    %2734 = vmatprep.subr.mxu0 0.0
    %2735 = vmatpush2.msra.mxu0 0.0
    %2736 = vmatprep.subr.mxu0 0.0
    %2737 = vmatpush2.msra.mxu0 0.0
    %2738 = vmatprep.subr.mxu0 0.0
    %2739 = vmatpush2.msra.mxu0 0.0
    %2740 = vmatprep.subr.mxu0 0.0
    %2741 = vmatpush2.msra.mxu0 0.0
    %2742 = vmatprep.subr.mxu0 0.0
    %2743 = vmatpush2.msra.mxu0 0.0
    %2744 = vmatprep.subr.mxu0 0.0
    %2745 = vmatpush2.msra.mxu0 0.0
    %2746 = vmatprep.subr.mxu0 0.0
    %2747 = vmatpush2.msra.mxu0 0.0
    %2748 = vmatprep.subr.mxu0 0.0
    %2749 = vmatpush2.msra.mxu0 0.0
    %2750 = vmatprep.subr.mxu0 0.0
    %2751 = vmatpush2.msra.mxu0 0.0
    %2752 = vmatprep.subr.mxu0 0.0
    %2753 = vmatpush2.msra.mxu0 0.0
    %2754 = vmatprep.subr.mxu0 0.0
    %2755 = vmatpush2.msra.mxu0 0.0
    %2756 = vmatprep.subr.mxu0 0.0
    %2757 = vmatpush2.msra.mxu0 0.0
    %2758 = vmatprep.subr.mxu0 0.0
    %2759 = vmatpush2.msra.mxu0 0.0
    %2760 = vmatprep.subr.mxu0 0.0
    %2761 = vmatpush2.msra.mxu0 0.0
    %2762 = vmatprep.subr.mxu0 0.0
    %2763 = vmatpush2.msra.mxu0 0.0
    %2764 = vmatprep.mubr.f32.mxu0 0.0
    %2765 = vmatmul.mubr.f32.gmra.mxu0 %v2698
    %v2766 = vpop.f32.mrf.mxu0
    %v2767 = vadd.f32 %v2691, %v2766
    %v2768 = vpop.f32.mrf.mxu0
    %2769 = vdwg.mxu0
    %v2770 = vmul.f32 %v2767, %v2620
    %2771 = vrot.lane.b32.xlu0 %v463, 80
    %v2772 = vpop.permute.xlu0 %2771
    %2773 = vrot.lane.b32.xlu0 %v477, 80
    %v2774 = vpop.permute.xlu0 %2773
    %v2775 = vsel %vm515, %v2772, 0
    %v2777 = vsel %vm515, %v2774, 0
    %2779 = vmatprep.subr.mxu0 0.0
    %2780 = vmatpush1.xpose.msra.mxu0 0.0
    %2781 = vmatprep.subr.mxu0 0.0
    %2782 = vmatpush1.xpose.msra.mxu0 0.0
    %2783 = vmatprep.subr.mxu0 0.0
    %2784 = vmatpush1.xpose.msra.mxu0 0.0
    %2785 = vmatprep.subr.mxu0 0.0
    %2786 = vmatpush1.xpose.msra.mxu0 0.0
    %2787 = vmatprep.subr.mxu0 0.0
    %2788 = vmatpush1.xpose.msra.mxu0 0.0
    %2789 = vmatprep.subr.mxu0 0.0
    %2790 = vmatpush1.xpose.msra.mxu0 0.0
    %2791 = vmatprep.subr.mxu0 0.0
    %2792 = vmatpush1.xpose.msra.mxu0 0.0
    %2793 = vmatprep.subr.mxu0 0.0
    %2794 = vmatpush1.xpose.msra.mxu0 0.0
    %2795 = vmatprep.subr.mxu0 0.0
    %2796 = vmatpush1.xpose.msra.mxu0 0.0
    %2797 = vmatprep.subr.mxu0 0.0
    %2798 = vmatpush1.xpose.msra.mxu0 0.0
    %2799 = vmatprep.subr.mxu0 0.0
    %2800 = vmatpush1.xpose.msra.mxu0 0.0
    %2801 = vmatprep.subr.mxu0 0.0
    %2802 = vmatpush1.xpose.msra.mxu0 0.0
    %2803 = vmatprep.subr.mxu0 0.0
    %2804 = vmatpush1.xpose.msra.mxu0 0.0
    %2805 = vmatprep.subr.mxu0 0.0
    %2806 = vmatpush1.xpose.msra.mxu0 0.0
    %2807 = vmatprep.subr.mxu0 0.0
    %2808 = vmatpush1.xpose.msra.mxu0 0.0
    %2809 = vmatprep.subr.mxu0 0.0
    %2810 = vmatpush1.xpose.msra.mxu0 %v2777
    %2811 = vmatprep.subr.mxu0 0.0
    %2812 = vmatpush2.xpose.msra.mxu0 0.0
    %2813 = vmatprep.subr.mxu0 0.0
    %2814 = vmatpush2.xpose.msra.mxu0 0.0
    %2815 = vmatprep.subr.mxu0 0.0
    %2816 = vmatpush2.xpose.msra.mxu0 0.0
    %2817 = vmatprep.subr.mxu0 0.0
    %2818 = vmatpush2.xpose.msra.mxu0 0.0
    %2819 = vmatprep.subr.mxu0 0.0
    %2820 = vmatpush2.xpose.msra.mxu0 0.0
    %2821 = vmatprep.subr.mxu0 0.0
    %2822 = vmatpush2.xpose.msra.mxu0 0.0
    %2823 = vmatprep.subr.mxu0 0.0
    %2824 = vmatpush2.xpose.msra.mxu0 0.0
    %2825 = vmatprep.subr.mxu0 0.0
    %2826 = vmatpush2.xpose.msra.mxu0 0.0
    %2827 = vmatprep.subr.mxu0 0.0
    %2828 = vmatpush2.xpose.msra.mxu0 0.0
    %2829 = vmatprep.subr.mxu0 0.0
    %2830 = vmatpush2.xpose.msra.mxu0 0.0
    %2831 = vmatprep.subr.mxu0 0.0
    %2832 = vmatpush2.xpose.msra.mxu0 0.0
    %2833 = vmatprep.subr.mxu0 0.0
    %2834 = vmatpush2.xpose.msra.mxu0 0.0
    %2835 = vmatprep.subr.mxu0 0.0
    %2836 = vmatpush2.xpose.msra.mxu0 0.0
    %2837 = vmatprep.subr.mxu0 0.0
    %2838 = vmatpush2.xpose.msra.mxu0 0.0
    %2839 = vmatprep.subr.mxu0 0.0
    %2840 = vmatpush2.xpose.msra.mxu0 0.0
    %2841 = vmatprep.subr.mxu0 0.0
    %2842 = vmatpush2.xpose.msra.mxu0 0.0
    %2843 = vmatprep.mubr.f32.mxu0 0.0
    %2844 = vmatmul.mubr.f32.gmra.mxu0 %v2775
    %v2845 = vpop.f32.mrf.mxu0
    %v2846 = vadd.f32 %v514, %v2845
    %v2847 = vpop.f32.mrf.mxu0
    %2848 = vdwg.mxu0
    %2849 = vmatprep.subr.mxu0 0.0
    %2850 = vmatpush1.msra.mxu0 0.0
    %2851 = vmatprep.subr.mxu0 0.0
    %2852 = vmatpush1.msra.mxu0 0.0
    %2853 = vmatprep.subr.mxu0 0.0
    %2854 = vmatpush1.msra.mxu0 0.0
    %2855 = vmatprep.subr.mxu0 0.0
    %2856 = vmatpush1.msra.mxu0 0.0
    %2857 = vmatprep.subr.mxu0 0.0
    %2858 = vmatpush1.msra.mxu0 0.0
    %2859 = vmatprep.subr.mxu0 0.0
    %2860 = vmatpush1.msra.mxu0 0.0
    %2861 = vmatprep.subr.mxu0 0.0
    %2862 = vmatpush1.msra.mxu0 0.0
    %2863 = vmatprep.subr.mxu0 0.0
    %2864 = vmatpush1.msra.mxu0 0.0
    %2865 = vmatprep.subr.mxu0 0.0
    %2866 = vmatpush1.msra.mxu0 0.0
    %2867 = vmatprep.subr.mxu0 0.0
    %2868 = vmatpush1.msra.mxu0 0.0
    %2869 = vmatprep.subr.mxu0 0.0
    %2870 = vmatpush1.msra.mxu0 0.0
    %2871 = vmatprep.subr.mxu0 0.0
    %2872 = vmatpush1.msra.mxu0 0.0
    %2873 = vmatprep.subr.mxu0 0.0
    %2874 = vmatpush1.msra.mxu0 0.0
    %2875 = vmatprep.subr.mxu0 0.0
    %2876 = vmatpush1.msra.mxu0 0.0
    %2877 = vmatprep.subr.mxu0 0.0
    %2878 = vmatpush1.msra.mxu0 %v509
    %2879 = vmatprep.subr.mxu0 0.0
    %2880 = vmatpush1.msra.mxu0 %v508
    %2881 = vmatprep.subr.mxu0 0.0
    %2882 = vmatpush2.msra.mxu0 0.0
    %2883 = vmatprep.subr.mxu0 0.0
    %2884 = vmatpush2.msra.mxu0 0.0
    %2885 = vmatprep.subr.mxu0 0.0
    %2886 = vmatpush2.msra.mxu0 0.0
    %2887 = vmatprep.subr.mxu0 0.0
    %2888 = vmatpush2.msra.mxu0 0.0
    %2889 = vmatprep.subr.mxu0 0.0
    %2890 = vmatpush2.msra.mxu0 0.0
    %2891 = vmatprep.subr.mxu0 0.0
    %2892 = vmatpush2.msra.mxu0 0.0
    %2893 = vmatprep.subr.mxu0 0.0
    %2894 = vmatpush2.msra.mxu0 0.0
    %2895 = vmatprep.subr.mxu0 0.0
    %2896 = vmatpush2.msra.mxu0 0.0
    %2897 = vmatprep.subr.mxu0 0.0
    %2898 = vmatpush2.msra.mxu0 0.0
    %2899 = vmatprep.subr.mxu0 0.0
    %2900 = vmatpush2.msra.mxu0 0.0
    %2901 = vmatprep.subr.mxu0 0.0
    %2902 = vmatpush2.msra.mxu0 0.0
    %2903 = vmatprep.subr.mxu0 0.0
    %2904 = vmatpush2.msra.mxu0 0.0
    %2905 = vmatprep.subr.mxu0 0.0
    %2906 = vmatpush2.msra.mxu0 0.0
    %2907 = vmatprep.subr.mxu0 0.0
    %2908 = vmatpush2.msra.mxu0 0.0
    %2909 = vmatprep.subr.mxu0 0.0
    %2910 = vmatpush2.msra.mxu0 0.0
    %2911 = vmatprep.subr.mxu0 0.0
    %2912 = vmatpush2.msra.mxu0 0.0
    %2913 = vmatprep.mubr.f32.mxu0 0.0
    %2914 = vmatmul.mubr.f32.gmra.mxu0 %v2775
    %v2915 = vpop.f32.mrf.mxu0
    %v2916 = vadd.f32 0.0, %v2915
    %v2917 = vpop.f32.mrf.mxu0
    %2918 = vdwg.mxu0
    %v2919 = vsel %vm275, %v2846, -inf
    %2920 = vmax.xlane.f32.xlu0 %v2919
    %v2921 = vpop.xlane.xlu0 %2920
    %v2922 = vsel %vm665, %v2916, -inf
    %2923 = vmax.xlane.f32.xlu0 %v2922
    %v2924 = vpop.xlane.xlu0 %2923
    %v2925 = vmax.f32 %v2921, %v2924
    %v2926 = vsub.f32 %v2846, %v2925
    %v2927 = vmul.f32 %v2926, 1.442695
    %v2928 = vpow.pop %v2927
    %v2929 = vsub.f32 %v2916, %v2925
    %v2930 = vmul.f32 %v2929, 1.442695
    %v2931 = vpow.pop %v2930
    %v2932 = vsel %vm275, %v2928, 0.0
    %2933 = vadd.xlane.f32.xlu0 %v2932
    %v2934 = vpop.xlane.xlu0 %2933
    %v2935 = vsel %vm665, %v2931, 0.0
    %2936 = vadd.xlane.f32.xlu0 %v2935
    %v2937 = vpop.xlane.xlu0 %2936
    %v2938 = vadd.f32 %v2934, %v2937
    %v2939 = vrcp.pop %v2938
    %v2941 = vsel %vm665, %v2931, 0
    %2943 = vmatprep.subr.mxu0 0.0
    %2944 = vmatpush1.msra.mxu0 0.0
    %2945 = vmatprep.subr.mxu0 0.0
    %2946 = vmatpush1.msra.mxu0 0.0
    %2947 = vmatprep.subr.mxu0 0.0
    %2948 = vmatpush1.msra.mxu0 0.0
    %2949 = vmatprep.subr.mxu0 0.0
    %2950 = vmatpush1.msra.mxu0 0.0
    %2951 = vmatprep.subr.mxu0 0.0
    %2952 = vmatpush1.msra.mxu0 0.0
    %2953 = vmatprep.subr.mxu0 0.0
    %2954 = vmatpush1.msra.mxu0 0.0
    %2955 = vmatprep.subr.mxu0 0.0
    %2956 = vmatpush1.msra.mxu0 0.0
    %2957 = vmatprep.subr.mxu0 0.0
    %2958 = vmatpush1.msra.mxu0 0.0
    %2959 = vmatprep.subr.mxu0 0.0
    %2960 = vmatpush1.msra.mxu0 0.0
    %2961 = vmatprep.subr.mxu0 0.0
    %2962 = vmatpush1.msra.mxu0 0.0
    %2963 = vmatprep.subr.mxu0 0.0
    %2964 = vmatpush1.msra.mxu0 0.0
    %2965 = vmatprep.subr.mxu0 0.0
    %2966 = vmatpush1.msra.mxu0 0.0
    %2967 = vmatprep.subr.mxu0 0.0
    %2968 = vmatpush1.msra.mxu0 0.0
    %2969 = vmatprep.subr.mxu0 0.0
    %2970 = vmatpush1.msra.mxu0 0.0
    %2971 = vmatprep.subr.mxu0 0.0
    %2972 = vmatpush1.msra.mxu0 0.0
    %2973 = vmatprep.subr.mxu0 0.0
    %2974 = vmatpush1.msra.mxu0 %v1653
    %2975 = vmatprep.subr.mxu0 0.0
    %2976 = vmatpush2.msra.mxu0 0.0
    %2977 = vmatprep.subr.mxu0 0.0
    %2978 = vmatpush2.msra.mxu0 0.0
    %2979 = vmatprep.subr.mxu0 0.0
    %2980 = vmatpush2.msra.mxu0 0.0
    %2981 = vmatprep.subr.mxu0 0.0
    %2982 = vmatpush2.msra.mxu0 0.0
    %2983 = vmatprep.subr.mxu0 0.0
    %2984 = vmatpush2.msra.mxu0 0.0
    %2985 = vmatprep.subr.mxu0 0.0
    %2986 = vmatpush2.msra.mxu0 0.0
    %2987 = vmatprep.subr.mxu0 0.0
    %2988 = vmatpush2.msra.mxu0 0.0
    %2989 = vmatprep.subr.mxu0 0.0
    %2990 = vmatpush2.msra.mxu0 0.0
    %2991 = vmatprep.subr.mxu0 0.0
    %2992 = vmatpush2.msra.mxu0 0.0
    %2993 = vmatprep.subr.mxu0 0.0
    %2994 = vmatpush2.msra.mxu0 0.0
    %2995 = vmatprep.subr.mxu0 0.0
    %2996 = vmatpush2.msra.mxu0 0.0
    %2997 = vmatprep.subr.mxu0 0.0
    %2998 = vmatpush2.msra.mxu0 0.0
    %2999 = vmatprep.subr.mxu0 0.0
    %3000 = vmatpush2.msra.mxu0 0.0
    %3001 = vmatprep.subr.mxu0 0.0
    %3002 = vmatpush2.msra.mxu0 0.0
    %3003 = vmatprep.subr.mxu0 0.0
    %3004 = vmatpush2.msra.mxu0 0.0
    %3005 = vmatprep.subr.mxu0 0.0
    %3006 = vmatpush2.msra.mxu0 0.0
    %3007 = vmatprep.mubr.f32.mxu0 0.0
    %3008 = vmatmul.mubr.f32.gmra.mxu0 %v2941
    %v3009 = vpop.f32.mrf.mxu0
    %v3010 = vadd.f32 0.0, %v3009
    %v3011 = vpop.f32.mrf.mxu0
    %3012 = vdwg.mxu0
    %3013 = vrot.lane.b32.xlu0 %v440, 80
    %v3014 = vpop.permute.xlu0 %3013
    %v3017 = vsel %vm275, %v2928, 0
    %3019 = vmatprep.subr.mxu0 0.0
    %3020 = vmatpush1.msra.mxu0 0.0
    %3021 = vmatprep.subr.mxu0 0.0
    %3022 = vmatpush1.msra.mxu0 0.0
    %3023 = vmatprep.subr.mxu0 0.0
    %3024 = vmatpush1.msra.mxu0 0.0
    %3025 = vmatprep.subr.mxu0 0.0
    %3026 = vmatpush1.msra.mxu0 0.0
    %3027 = vmatprep.subr.mxu0 0.0
    %3028 = vmatpush1.msra.mxu0 0.0
    %3029 = vmatprep.subr.mxu0 0.0
    %3030 = vmatpush1.msra.mxu0 0.0
    %3031 = vmatprep.subr.mxu0 0.0
    %3032 = vmatpush1.msra.mxu0 0.0
    %3033 = vmatprep.subr.mxu0 0.0
    %3034 = vmatpush1.msra.mxu0 0.0
    %3035 = vmatprep.subr.mxu0 0.0
    %3036 = vmatpush1.msra.mxu0 0.0
    %3037 = vmatprep.subr.mxu0 0.0
    %3038 = vmatpush1.msra.mxu0 0.0
    %3039 = vmatprep.subr.mxu0 0.0
    %3040 = vmatpush1.msra.mxu0 0.0
    %3041 = vmatprep.subr.mxu0 0.0
    %3042 = vmatpush1.msra.mxu0 0.0
    %3043 = vmatprep.subr.mxu0 0.0
    %3044 = vmatpush1.msra.mxu0 0.0
    %3045 = vmatprep.subr.mxu0 0.0
    %3046 = vmatpush1.msra.mxu0 0.0
    %3047 = vmatprep.subr.mxu0 0.0
    %3048 = vmatpush1.msra.mxu0 0.0
    %3049 = vmatprep.subr.mxu0 0.0
    %3050 = vmatpush1.msra.mxu0 %v3014
    %3051 = vmatprep.subr.mxu0 0.0
    %3052 = vmatpush2.msra.mxu0 0.0
    %3053 = vmatprep.subr.mxu0 0.0
    %3054 = vmatpush2.msra.mxu0 0.0
    %3055 = vmatprep.subr.mxu0 0.0
    %3056 = vmatpush2.msra.mxu0 0.0
    %3057 = vmatprep.subr.mxu0 0.0
    %3058 = vmatpush2.msra.mxu0 0.0
    %3059 = vmatprep.subr.mxu0 0.0
    %3060 = vmatpush2.msra.mxu0 0.0
    %3061 = vmatprep.subr.mxu0 0.0
    %3062 = vmatpush2.msra.mxu0 0.0
    %3063 = vmatprep.subr.mxu0 0.0
    %3064 = vmatpush2.msra.mxu0 0.0
    %3065 = vmatprep.subr.mxu0 0.0
    %3066 = vmatpush2.msra.mxu0 0.0
    %3067 = vmatprep.subr.mxu0 0.0
    %3068 = vmatpush2.msra.mxu0 0.0
    %3069 = vmatprep.subr.mxu0 0.0
    %3070 = vmatpush2.msra.mxu0 0.0
    %3071 = vmatprep.subr.mxu0 0.0
    %3072 = vmatpush2.msra.mxu0 0.0
    %3073 = vmatprep.subr.mxu0 0.0
    %3074 = vmatpush2.msra.mxu0 0.0
    %3075 = vmatprep.subr.mxu0 0.0
    %3076 = vmatpush2.msra.mxu0 0.0
    %3077 = vmatprep.subr.mxu0 0.0
    %3078 = vmatpush2.msra.mxu0 0.0
    %3079 = vmatprep.subr.mxu0 0.0
    %3080 = vmatpush2.msra.mxu0 0.0
    %3081 = vmatprep.subr.mxu0 0.0
    %3082 = vmatpush2.msra.mxu0 0.0
    %3083 = vmatprep.mubr.f32.mxu0 0.0
    %3084 = vmatmul.mubr.f32.gmra.mxu0 %v3017
    %v3085 = vpop.f32.mrf.mxu0
    %v3086 = vadd.f32 %v3010, %v3085
    %v3087 = vpop.f32.mrf.mxu0
    %3088 = vdwg.mxu0
    %v3089 = vmul.f32 %v3086, %v2939
    %3091 = vrot.lane.b32.xlu0 %v2451, 16
    %v3092 = vpop.permute.xlu0 %3091
    %3095 = vrot.lane.b32.xlu0 %v2770, 32
    %v3096 = vpop.permute.xlu0 %3095
    %3099 = vrot.lane.b32.xlu0 %v3089, 48
    %v3100 = vpop.permute.xlu0 %3099
    %v3102 = vsel %vm515, %v2131, %v3092
    %v3103 = vsel %vm66, %v3102, %v3096
    %v3104 = vsel %vm1816, %v3103, %v3100
    %v3105 = vld [vmem:[%s6] sm:$0xff]
    %v3106 = vld [vmem:[%s7] sm:$0xff]
    %v3107 = vld [vmem:[%s7 + $0x8] sm:$0xff]
    %v3108 = vld [vmem:[%s7 + $0x10] sm:$0xff]
    %v3109 = vld [vmem:[%s7 + $0x18] sm:$0xff]
    %v3110 = vld [vmem:[%s7 + $0x20] sm:$0xff]
    %v3111 = vld [vmem:[%s7 + $0x28] sm:$0xff]
    %v3112 = vld [vmem:[%s7 + $0x30] sm:$0xff]
    %v3113 = vld [vmem:[%s7 + $0x38] sm:$0xff]
    %vm3114 = vcmask 523264
    %v3116 = vsel %vm3114, %v1817, 0
    %v3119 = vsel %vm3114, %v3104, 0
    %3121 = vmatprep.subr.mxu0 0.0
    %3122 = vmatpush1.msra.mxu0 0.0
    %3123 = vmatprep.subr.mxu0 0.0
    %3124 = vmatpush1.msra.mxu0 0.0
    %3125 = vmatprep.subr.mxu0 0.0
    %3126 = vmatpush1.msra.mxu0 0.0
    %3127 = vmatprep.subr.mxu0 0.0
    %3128 = vmatpush1.msra.mxu0 0.0
    %3129 = vmatprep.subr.mxu0 0.0
    %3130 = vmatpush1.msra.mxu0 0.0
    %3131 = vmatprep.subr.mxu0 0.0
    %3132 = vmatpush1.msra.mxu0 0.0
    %3133 = vmatprep.subr.mxu0 0.0
    %3134 = vmatpush1.msra.mxu0 0.0
    %3135 = vmatprep.subr.mxu0 0.0
    %3136 = vmatpush1.msra.mxu0 0.0
    %3137 = vmatprep.subr.mxu0 0.0
    %3138 = vmatpush1.msra.mxu0 %v3113
    %3139 = vmatprep.subr.mxu0 0.0
    %3140 = vmatpush1.msra.mxu0 %v3112
    %3141 = vmatprep.subr.mxu0 0.0
    %3142 = vmatpush1.msra.mxu0 %v3111
    %3143 = vmatprep.subr.mxu0 0.0
    %3144 = vmatpush1.msra.mxu0 %v3110
    %3145 = vmatprep.subr.mxu0 0.0
    %3146 = vmatpush1.msra.mxu0 %v3109
    %3147 = vmatprep.subr.mxu0 0.0
    %3148 = vmatpush1.msra.mxu0 %v3108
    %3149 = vmatprep.subr.mxu0 0.0
    %3150 = vmatpush1.msra.mxu0 %v3107
    %3151 = vmatprep.subr.mxu0 0.0
    %3152 = vmatpush1.msra.mxu0 %v3106
    %3153 = vmatprep.subr.mxu0 0.0
    %3154 = vmatpush2.msra.mxu0 0.0
    %3155 = vmatprep.subr.mxu0 0.0
    %3156 = vmatpush2.msra.mxu0 0.0
    %3157 = vmatprep.subr.mxu0 0.0
    %3158 = vmatpush2.msra.mxu0 0.0
    %3159 = vmatprep.subr.mxu0 0.0
    %3160 = vmatpush2.msra.mxu0 0.0
    %3161 = vmatprep.subr.mxu0 0.0
    %3162 = vmatpush2.msra.mxu0 0.0
    %3163 = vmatprep.subr.mxu0 0.0
    %3164 = vmatpush2.msra.mxu0 0.0
    %3165 = vmatprep.subr.mxu0 0.0
    %3166 = vmatpush2.msra.mxu0 0.0
    %3167 = vmatprep.subr.mxu0 0.0
    %3168 = vmatpush2.msra.mxu0 0.0
    %3169 = vmatprep.subr.mxu0 0.0
    %3170 = vmatpush2.msra.mxu0 0.0
    %3171 = vmatprep.subr.mxu0 0.0
    %3172 = vmatpush2.msra.mxu0 0.0
    %3173 = vmatprep.subr.mxu0 0.0
    %3174 = vmatpush2.msra.mxu0 0.0
    %3175 = vmatprep.subr.mxu0 0.0
    %3176 = vmatpush2.msra.mxu0 0.0
    %3177 = vmatprep.subr.mxu0 0.0
    %3178 = vmatpush2.msra.mxu0 0.0
    %3179 = vmatprep.subr.mxu0 0.0
    %3180 = vmatpush2.msra.mxu0 0.0
    %3181 = vmatprep.subr.mxu0 0.0
    %3182 = vmatpush2.msra.mxu0 0.0
    %3183 = vmatprep.subr.mxu0 0.0
    %3184 = vmatpush2.msra.mxu0 0.0
    %3185 = vmatprep.mubr.f32.mxu0 0.0
    %3186 = vmatmul.mubr.f32.gmra.mxu0 %v3116
    %v3187 = vpop.f32.mrf.mxu0
    %v3188 = vadd.f32 0.0, %v3187
    %v3189 = vpop.f32.mrf.mxu0
    %3190 = vmatprep.mubr.f32.mxu0 0.0
    %3191 = vmatmul.mubr.f32.gmra.mxu0 %v3119
    %v3192 = vpop.f32.mrf.mxu0
    %v3193 = vadd.f32 0.0, %v3192
    %v3194 = vpop.f32.mrf.mxu0
    %3195 = vdwg.mxu0
    %3196 = vmatprep.subr.mxu0 0.0
    %3197 = vmatpush1.msra.mxu0 0.0
    %3198 = vmatprep.subr.mxu0 0.0
    %3199 = vmatpush1.msra.mxu0 0.0
    %3200 = vmatprep.subr.mxu0 0.0
    %3201 = vmatpush1.msra.mxu0 0.0
    %3202 = vmatprep.subr.mxu0 0.0
    %3203 = vmatpush1.msra.mxu0 0.0
    %3204 = vmatprep.subr.mxu0 0.0
    %3205 = vmatpush1.msra.mxu0 0.0
    %3206 = vmatprep.subr.mxu0 0.0
    %3207 = vmatpush1.msra.mxu0 0.0
    %3208 = vmatprep.subr.mxu0 0.0
    %3209 = vmatpush1.msra.mxu0 0.0
    %3210 = vmatprep.subr.mxu0 0.0
    %3211 = vmatpush1.msra.mxu0 0.0
    %3212 = vmatprep.subr.mxu0 0.0
    %3213 = vmatpush1.msra.mxu0 0.0
    %3214 = vmatprep.subr.mxu0 0.0
    %3215 = vmatpush1.msra.mxu0 0.0
    %3216 = vmatprep.subr.mxu0 0.0
    %3217 = vmatpush1.msra.mxu0 0.0
    %3218 = vmatprep.subr.mxu0 0.0
    %3219 = vmatpush1.msra.mxu0 0.0
    %3220 = vmatprep.subr.mxu0 0.0
    %3221 = vmatpush1.msra.mxu0 0.0
    %3222 = vmatprep.subr.mxu0 0.0
    %3223 = vmatpush1.msra.mxu0 0.0
    %3224 = vmatprep.subr.mxu0 0.0
    %3225 = vmatpush1.msra.mxu0 0.0
    %3226 = vmatprep.subr.mxu0 0.0
    %3227 = vmatpush1.msra.mxu0 %v3105
    %3228 = vmatprep.subr.mxu0 0.0
    %3229 = vmatpush2.msra.mxu0 0.0
    %3230 = vmatprep.subr.mxu0 0.0
    %3231 = vmatpush2.msra.mxu0 0.0
    %3232 = vmatprep.subr.mxu0 0.0
    %3233 = vmatpush2.msra.mxu0 0.0
    %3234 = vmatprep.subr.mxu0 0.0
    %3235 = vmatpush2.msra.mxu0 0.0
    %3236 = vmatprep.subr.mxu0 0.0
    %3237 = vmatpush2.msra.mxu0 0.0
    %3238 = vmatprep.subr.mxu0 0.0
    %3239 = vmatpush2.msra.mxu0 0.0
    %3240 = vmatprep.subr.mxu0 0.0
    %3241 = vmatpush2.msra.mxu0 0.0
    %3242 = vmatprep.subr.mxu0 0.0
    %3243 = vmatpush2.msra.mxu0 0.0
    %3244 = vmatprep.subr.mxu0 0.0
    %3245 = vmatpush2.msra.mxu0 0.0
    %3246 = vmatprep.subr.mxu0 0.0
    %3247 = vmatpush2.msra.mxu0 0.0
    %3248 = vmatprep.subr.mxu0 0.0
    %3249 = vmatpush2.msra.mxu0 0.0
    %3250 = vmatprep.subr.mxu0 0.0
    %3251 = vmatpush2.msra.mxu0 0.0
    %3252 = vmatprep.subr.mxu0 0.0
    %3253 = vmatpush2.msra.mxu0 0.0
    %3254 = vmatprep.subr.mxu0 0.0
    %3255 = vmatpush2.msra.mxu0 0.0
    %3256 = vmatprep.subr.mxu0 0.0
    %3257 = vmatpush2.msra.mxu0 0.0
    %3258 = vmatprep.subr.mxu0 0.0
    %3259 = vmatpush2.msra.mxu0 0.0
    %3260 = vmatprep.mubr.f32.mxu0 0.0
    %3261 = vmatmul.mubr.f32.gmra.mxu0 %v276
    %v3262 = vpop.f32.mrf.mxu0
    %v3263 = vadd.f32 %v3188, %v3262
    %v3264 = vpop.f32.mrf.mxu0
    %3265 = vmatprep.mubr.f32.mxu0 0.0
    %3266 = vmatmul.mubr.f32.gmra.mxu0 %v278
    %v3267 = vpop.f32.mrf.mxu0
    %v3268 = vadd.f32 %v3193, %v3267
    %v3269 = vpop.f32.mrf.mxu0
    %3270 = vdwg.mxu0
    %v3271 = vld [vmem:[%s8] sm:$0xff]
    %v3272 = vld [vmem:[%s8 + $0x8] sm:$0xff]
    %v3273 = vld [vmem:[%s8 + $0x10] sm:$0xff]
    %v3274 = vld [vmem:[%s8 + $0x18] sm:$0xff]
    %v3275 = vld [vmem:[%s8 + $0x20] sm:$0xff]
    %v3276 = vld [vmem:[%s8 + $0x28] sm:$0xff]
    %v3277 = vld [vmem:[%s8 + $0x30] sm:$0xff]
    %v3278 = vld [vmem:[%s8 + $0x38] sm:$0xff]
    %3281 = vrot.lane.b32.xlu0 %v500, 64
    %v3282 = vpop.permute.xlu0 %3281
    %3283 = vrot.lane.b32.xlu0 %v501, 64
    %v3284 = vpop.permute.xlu0 %3283
    %v3285 = vsel %vm3114, %v3282, 0
    %v3287 = vsel %vm3114, %v3284, 0
    %3289 = vmatprep.subr.mxu0 0.0
    %3290 = vmatpush1.msra.mxu0 0.0
    %3291 = vmatprep.subr.mxu0 0.0
    %3292 = vmatpush1.msra.mxu0 0.0
    %3293 = vmatprep.subr.mxu0 0.0
    %3294 = vmatpush1.msra.mxu0 0.0
    %3295 = vmatprep.subr.mxu0 0.0
    %3296 = vmatpush1.msra.mxu0 0.0
    %3297 = vmatprep.subr.mxu0 0.0
    %3298 = vmatpush1.msra.mxu0 0.0
    %3299 = vmatprep.subr.mxu0 0.0
    %3300 = vmatpush1.msra.mxu0 0.0
    %3301 = vmatprep.subr.mxu0 0.0
    %3302 = vmatpush1.msra.mxu0 0.0
    %3303 = vmatprep.subr.mxu0 0.0
    %3304 = vmatpush1.msra.mxu0 0.0
    %3305 = vmatprep.subr.mxu0 0.0
    %3306 = vmatpush1.msra.mxu0 %v3278
    %3307 = vmatprep.subr.mxu0 0.0
    %3308 = vmatpush1.msra.mxu0 %v3277
    %3309 = vmatprep.subr.mxu0 0.0
    %3310 = vmatpush1.msra.mxu0 %v3276
    %3311 = vmatprep.subr.mxu0 0.0
    %3312 = vmatpush1.msra.mxu0 %v3275
    %3313 = vmatprep.subr.mxu0 0.0
    %3314 = vmatpush1.msra.mxu0 %v3274
    %3315 = vmatprep.subr.mxu0 0.0
    %3316 = vmatpush1.msra.mxu0 %v3273
    %3317 = vmatprep.subr.mxu0 0.0
    %3318 = vmatpush1.msra.mxu0 %v3272
    %3319 = vmatprep.subr.mxu0 0.0
    %3320 = vmatpush1.msra.mxu0 %v3271
    %3321 = vmatprep.subr.mxu0 0.0
    %3322 = vmatpush2.msra.mxu0 0.0
    %3323 = vmatprep.subr.mxu0 0.0
    %3324 = vmatpush2.msra.mxu0 0.0
    %3325 = vmatprep.subr.mxu0 0.0
    %3326 = vmatpush2.msra.mxu0 0.0
    %3327 = vmatprep.subr.mxu0 0.0
    %3328 = vmatpush2.msra.mxu0 0.0
    %3329 = vmatprep.subr.mxu0 0.0
    %3330 = vmatpush2.msra.mxu0 0.0
    %3331 = vmatprep.subr.mxu0 0.0
    %3332 = vmatpush2.msra.mxu0 0.0
    %3333 = vmatprep.subr.mxu0 0.0
    %3334 = vmatpush2.msra.mxu0 0.0
    %3335 = vmatprep.subr.mxu0 0.0
    %3336 = vmatpush2.msra.mxu0 0.0
    %3337 = vmatprep.subr.mxu0 0.0
    %3338 = vmatpush2.msra.mxu0 0.0
    %3339 = vmatprep.subr.mxu0 0.0
    %3340 = vmatpush2.msra.mxu0 0.0
    %3341 = vmatprep.subr.mxu0 0.0
    %3342 = vmatpush2.msra.mxu0 0.0
    %3343 = vmatprep.subr.mxu0 0.0
    %3344 = vmatpush2.msra.mxu0 0.0
    %3345 = vmatprep.subr.mxu0 0.0
    %3346 = vmatpush2.msra.mxu0 0.0
    %3347 = vmatprep.subr.mxu0 0.0
    %3348 = vmatpush2.msra.mxu0 0.0
    %3349 = vmatprep.subr.mxu0 0.0
    %3350 = vmatpush2.msra.mxu0 0.0
    %3351 = vmatprep.subr.mxu0 0.0
    %3352 = vmatpush2.msra.mxu0 0.0
    %3353 = vmatprep.mubr.f32.mxu0 0.0
    %3354 = vmatmul.mubr.f32.gmra.mxu0 %v3285
    %v3355 = vpop.f32.mrf.mxu0
    %v3356 = vadd.f32 0.0, %v3355
    %v3357 = vpop.f32.mrf.mxu0
    %3358 = vmatprep.mubr.f32.mxu0 0.0
    %3359 = vmatmul.mubr.f32.gmra.mxu0 %v3287
    %v3360 = vpop.f32.mrf.mxu0
    %v3361 = vadd.f32 0.0, %v3360
    %v3362 = vpop.f32.mrf.mxu0
    %3363 = vdwg.mxu0
    %v3364 = vadd.f32 %v3263, %v3356
    %v3365 = vadd.f32 %v3268, %v3361
    %3366 = vrot.lane.b32.xlu0 %v263, 96
    %v3367 = vpop.permute.xlu0 %3366
    %3368 = vrot.lane.b32.xlu0 %v264, 96
    %v3369 = vpop.permute.xlu0 %3368
    %3374 = vrot.lane.b32.xlu0 %v219, 104
    %v3375 = vpop.permute.xlu0 %3374
    %3376 = vrot.lane.b32.xlu0 %v225, 104
    %v3377 = vpop.permute.xlu0 %3376
    %3382 = vrot.lane.b32.xlu0 %v243, 104
    %v3383 = vpop.permute.xlu0 %3382
    %3384 = vrot.lane.b32.xlu0 %v244, 104
    %v3385 = vpop.permute.xlu0 %3384
    %v3388 = vsel %vm66, %v3364, %v3367
    %v3389 = vsel %vm66, %v3365, %v3369
    %vm3390 = vcmask 326656
    %v3391 = vsel %vm3390, %v3388, %v3375
    %v3392 = vsel %vm3390, %v3389, %v3377
    %v3393 = vsel %vm1816, %v3391, %v3383
    %v3394 = vsel %vm1816, %v3392, %v3385
    %vm3395 = vcmask 457728
    %3396 = vst.msk [vmem:[#allocation2] sm:$0xff] %vm3395, %v3393
    %3397 = vst.msk [vmem:[#allocation2 + $0x8] sm:$0xff] %vm3395, %v3394
    // Predicated region
    $region50: #{tpu_custom_call.1} parent=1 // pred_check
      _
    $region51: #{tpu_custom_call.1} parent=1 // pred_check_branch
      %3399 = sbr.rel (0) target = $region53
    $region52: #{tpu_custom_call.1} parent=1 // pred_region
      %s3401 = ssub.s32 256, 256
      %3402 = vsyncadd [#allocation3], %s3401
      %s3403 = sshll.u32 [#allocation2], 4
      %s3404 = int_to_ptr.vmem [resolvable:$true] %s3403
      %3409 = dma.vmem_to_hbm [thread:$0]  %s3404, 256, %s12, [#allocation3], 128, 128, 8
    $region53: #{tpu_custom_call.1} parent=1 // pred_fallthru
      _
    // Predicated region
    $region54: #{tpu_custom_call.1} parent=1 // pred_check
      _
    $region55: #{tpu_custom_call.1} parent=1 // pred_check_branch
      %3411 = sbr.rel (0) target = $region57
    $region56: #{tpu_custom_call.1} parent=1 // pred_region
      %3412 = dma.done [#allocation3], 256
    $region57: #{tpu_custom_call.1} parent=1 // pred_fallthru
      _
    %3413 = vsyncpa [#allocation3], 1

</llo_original>
